<compile_context>
chip_gen: v5e
topology: v5e:2x2
jax: 0.10.0
libtpu: 0.0.40
codegen_flags: <defaults>
</compile_context>

<pallas_src>
import functools

import jax
import jax.numpy as jnp
import numpy as np
from jax.experimental import pallas as pl
from jax.experimental.pallas import tpu as pltpu

EPS = 1e-5
_PADW = 8                       # sublane-aligned zero-halo width on the W axis
DEFAULT_MXU_DTYPE = jnp.bfloat16


# ---------------------------------------------------------------------------
# VMEM budget (generation-aware) & compiler params
# ---------------------------------------------------------------------------
@functools.lru_cache(maxsize=None)
def _vmem_budget():
    cap = 64 * 1024 * 1024  # conservative fallback (v7x-sized)
    try:
        cap = int(getattr(pltpu.get_tpu_info(), "vmem_capacity_bytes", cap))
    except Exception:
        pass
    return int(min(max((cap * 3) // 4, 32 * 1024 * 1024), 96 * 1024 * 1024))


def _cparams(dim_sem=None):
    return pltpu.CompilerParams(dimension_semantics=dim_sem,
                                vmem_limit_bytes=_vmem_budget())


# ---------------------------------------------------------------------------
# Shared in-kernel helpers (traced; operate on values / refs)
# ---------------------------------------------------------------------------
def _store_padded(pad_ref, e, H, W, Chid):
    """Write the expanded activation into the interior of the persistent padded
    scratch and zero the halo strips that the 3x3 depthwise conv reads.
    Perimeter is zeroed every step -> safe under megacore grid splitting."""
    Wp = W + 2 * _PADW
    zrow = jnp.zeros((1, Wp, Chid), jnp.float32)
    pad_ref[0:1, :, :] = zrow                                   # top halo row
    pad_ref[H + 1:H + 2, :, :] = zrow                           # bottom halo row
    zcol = jnp.zeros((H, 1, Chid), jnp.float32)
    pad_ref[1:H + 1, _PADW - 1:_PADW, :] = zcol                 # left halo col
    pad_ref[1:H + 1, W + _PADW:W + _PADW + 1, :] = zcol         # right halo col
    pad_ref[1:H + 1, _PADW:_PADW + W, :] = e                    # interior


def _dw3x3(pad_ref, w_dw_ref, b2_ref, *, stride, Ho, Wo, Chid):
    """3x3 depthwise conv (9 unrolled taps, VPU) from the padded scratch,
    BN scale pre-folded into w_dw, + bias + ReLU6.  f32 throughout."""
    if stride == 1:
        def tap(ki, kj):
            j0 = kj + _PADW - 1
            return pad_ref[ki:ki + Ho, j0:j0 + Wo, :]
    else:
        ep = pad_ref[...]

        def tap(ki, kj):
            j0 = kj + _PADW - 1
            return jax.lax.slice(
                ep, (ki, j0, 0),
                (ki + (Ho - 1) * stride + 1, j0 + (Wo - 1) * stride + 1, Chid),
                (stride, stride, 1))

    acc = jnp.zeros((Ho, Wo, Chid), jnp.float32)
    for ki in range(3):
        for kj in range(3):
            acc = acc + tap(ki, kj) * w_dw_ref[ki * 3 + kj, :]
    return jnp.clip(acc + b2_ref[...], 0.0, 6.0)


def _gate_mlp(ph, pw, w1, bc1, w2, bc2, w3, bc3):
    """CoordAtt gate MLP (f32, tiny).  conv1 weight is shared between the H and
    W pooled paths (BN1 scale pre-folded into w1, bias = folded BN1 + conv bias)."""
    def stem(p):
        t = jnp.dot(p, w1, preferred_element_type=jnp.float32) + bc1
        return t * (jnp.clip(t + 3.0, 0.0, 6.0) * (1.0 / 6.0))   # h_swish

    a_h = jax.nn.sigmoid(jnp.dot(stem(ph), w2, preferred_element_type=jnp.float32) + bc2)
    a_w = jax.nn.sigmoid(jnp.dot(stem(pw), w3, preferred_element_type=jnp.float32) + bc3)
    return a_h, a_w


# ---------------------------------------------------------------------------
# Fully fused kernel: one grid step per batch element, hidden tensor stays in VMEM
# ---------------------------------------------------------------------------
def _fused_kernel(x_ref, w_exp_ref, b1_ref, w_dw_ref, b2_ref,
                  w1_ref, bc1_ref, w2_ref, bc2_ref, w3_ref, bc3_ref,
                  w_proj_ref, b3_ref, o_ref, pad_ref,
                  *, stride, mxu_dtype, identity):
    H, W, Cin = x_ref.shape
    Ho, Wo, Cout = o_ref.shape
    Chid = w_exp_ref.shape[1]

    x = x_ref[...]

    # 1x1 expand conv (MXU, BN scale folded into weight) + bias + ReLU6
    e = jnp.dot(x.reshape(H * W, Cin).astype(mxu_dtype), w_exp_ref[...],
                preferred_element_type=jnp.float32)
    e = jnp.clip(e + b1_ref[...], 0.0, 6.0).reshape(H, W, Chid)

    # zero-halo scratch + 3x3 depthwise + bias + ReLU6 (f32)
    _store_padded(pad_ref, e, H, W, Chid)
    hdw = _dw3x3(pad_ref, w_dw_ref, b2_ref, stride=stride, Ho=Ho, Wo=Wo, Chid=Chid)

    # CoordAtt pools + gate MLP (tiny)
    ph = jnp.mean(hdw, axis=1)                                   # (Ho, Chid) avg over W
    pw = jnp.mean(hdw, axis=0)                                   # (Wo, Chid) avg over H
    a_h, a_w = _gate_mlp(ph, pw, w1_ref[...], bc1_ref[...], w2_ref[...],
                         bc2_ref[...], w3_ref[...], bc3_ref[...])

    # gating + 1x1 projection (MXU, BN scale folded into weight) + bias (+ residual)
    g = hdw * a_w[None, :, :] * a_h[:, None, :]
    y = jnp.dot(g.reshape(Ho * Wo, Chid).astype(mxu_dtype), w_proj_ref[...],
                preferred_element_type=jnp.float32)
    y = (y + b3_ref[...]).reshape(Ho, Wo, Cout)
    if identity:
        y = y + x.astype(jnp.float32)
    o_ref[...] = y.astype(o_ref.dtype)


def _fused_forward(x, pp, *, stride, identity, mxu_dtype, out_dtype):
    N, H, W, Cin = x.shape
    Chid = pp["w_expand"].shape[1]
    Cout = pp["w_proj"].shape[1]
    mip = pp["ca_w1"].shape[1]
    Ho = (H - 1) // stride + 1
    Wo = (W - 1) // stride + 1

    def rep(shape):
        return pl.BlockSpec(shape, lambda n, _l=len(shape): (0,) * _l)

    cost = pl.CostEstimate(
        flops=int(2 * N * H * W * Cin * Chid + 2 * 9 * N * Ho * Wo * Chid
                  + 2 * N * Ho * Wo * Chid * Cout),
        transcendentals=int(4 * N * (Ho + Wo) * Chid),
        bytes_accessed=int(x.size * x.dtype.itemsize
                           + N * Ho * Wo * Cout * np.dtype(out_dtype).itemsize
                           + sum(int(np.prod(v.shape)) * v.dtype.itemsize
                                 for v in pp.values())),
    )
    return pl.pallas_call(
        functools.partial(_fused_kernel, stride=stride, mxu_dtype=mxu_dtype,
                          identity=identity),
        grid=(N,),
        in_specs=[
            pl.BlockSpec((None, H, W, Cin), lambda n: (n, 0, 0, 0)),
            rep((Cin, Chid)), rep((1, Chid)),
            rep((9, Chid)), rep((1, Chid)),
            rep((Chid, mip)), rep((1, mip)),
            rep((mip, Chid)), rep((1, Chid)),
            rep((mip, Chid)), rep((1, Chid)),
            rep((Chid, Cout)), rep((1, Cout)),
        ],
        out_specs=pl.BlockSpec((None, Ho, Wo, Cout), lambda n: (n, 0, 0, 0)),
        out_shape=jax.ShapeDtypeStruct((N, Ho, Wo, Cout), out_dtype),
        scratch_shapes=[pltpu.VMEM((H + 2, W + 2 * _PADW, Chid), jnp.float32)],
        compiler_params=_cparams(("parallel",)),
        cost_estimate=cost,
    )(x, pp["w_expand"], pp["b1"], pp["w_dw"], pp["b2"],
      pp["ca_w1"], pp["ca_b1"], pp["ca_w2"], pp["ca_b2"],
      pp["ca_w3"], pp["ca_b3"], pp["w_proj"], pp["b3"])


# ---------------------------------------------------------------------------
# Fallback split path (K1: expand+dw+pools, K2: gate MLP, K3: gate+project(+res))
# ---------------------------------------------------------------------------
def _expand_dw_kernel(x_ref, w_exp_ref, b1_ref, w_dw_ref, b2_ref,
                      h_ref, ph_ref, pw_ref, pad_ref, *, stride, mxu_dtype):
    H, W, Cin = x_ref.shape
    Ho, Wo, Chid = h_ref.shape
    e = jnp.dot(x_ref[...].reshape(H * W, Cin).astype(mxu_dtype), w_exp_ref[...],
                preferred_element_type=jnp.float32)
    e = jnp.clip(e + b1_ref[...], 0.0, 6.0).reshape(H, W, Chid)
    _store_padded(pad_ref, e, H, W, Chid)
    hdw = _dw3x3(pad_ref, w_dw_ref, b2_ref, stride=stride, Ho=Ho, Wo=Wo, Chid=Chid)
    h_ref[...] = hdw.astype(h_ref.dtype)
    ph_ref[...] = jnp.mean(hdw, axis=1).astype(ph_ref.dtype)
    pw_ref[...] = jnp.mean(hdw, axis=0).astype(pw_ref.dtype)


def _expand_dw(x, pp, *, stride, act_dtype, mxu_dtype):
    N, H, W, Cin = x.shape
    Chid = pp["w_expand"].shape[1]
    Ho = (H - 1) // stride + 1
    Wo = (W - 1) // stride + 1
    cost = pl.CostEstimate(
        flops=int(2 * N * H * W * Cin * Chid + 2 * 9 * N * Ho * Wo * Chid),
        transcendentals=0,
        bytes_accessed=int(x.size * x.dtype.itemsize
                           + N * Ho * Wo * Chid * np.dtype(act_dtype).itemsize
                           + 4 * N * (Ho + Wo) * Chid),
    )
    return pl.pallas_call(
        functools.partial(_expand_dw_kernel, stride=stride, mxu_dtype=mxu_dtype),
        grid=(N,),
        in_specs=[
            pl.BlockSpec((None, H, W, Cin), lambda n: (n, 0, 0, 0)),
            pl.BlockSpec((Cin, Chid), lambda n: (0, 0)),
            pl.BlockSpec((1, Chid), lambda n: (0, 0)),
            pl.BlockSpec((9, Chid), lambda n: (0, 0)),
            pl.BlockSpec((1, Chid), lambda n: (0, 0)),
        ],
        out_specs=(
            pl.BlockSpec((None, Ho, Wo, Chid), lambda n: (n, 0, 0, 0)),
            pl.BlockSpec((None, Ho, Chid), lambda n: (n, 0, 0)),
            pl.BlockSpec((None, Wo, Chid), lambda n: (n, 0, 0)),
        ),
        out_shape=(
            jax.ShapeDtypeStruct((N, Ho, Wo, Chid), act_dtype),
            jax.ShapeDtypeStruct((N, Ho, Chid), jnp.float32),
            jax.ShapeDtypeStruct((N, Wo, Chid), jnp.float32),
        ),
        scratch_shapes=[pltpu.VMEM((H + 2, W + 2 * _PADW, Chid), jnp.float32)],
        compiler_params=_cparams(("parallel",)),
        cost_estimate=cost,
    )(x, pp["w_expand"], pp["b1"], pp["w_dw"], pp["b2"])


def _coord_gate_kernel(ph_ref, pw_ref, w1_ref, bc1_ref, w2_ref, bc2_ref,
                       w3_ref, bc3_ref, ah_ref, aw_ref):
    N, Ho, C = ph_ref.shape
    Wo = pw_ref.shape[1]
    a_h, a_w = _gate_mlp(ph_ref[...].reshape(N * Ho, C),
                         pw_ref[...].reshape(N * Wo, C),
                         w1_ref[...], bc1_ref[...], w2_ref[...], bc2_ref[...],
                         w3_ref[...], bc3_ref[...])
    ah_ref[...] = a_h.reshape(N, Ho, C).astype(ah_ref.dtype)
    aw_ref[...] = a_w.reshape(N, Wo, C).astype(aw_ref.dtype)


def _coord_gates_call(pool_h, pool_w, pp):
    N, Ho, C = pool_h.shape
    Wo = pool_w.shape[1]
    v = pl.BlockSpec(memory_space=pltpu.MemorySpace.VMEM)
    return pl.pallas_call(
        _coord_gate_kernel,
        out_shape=(jax.ShapeDtypeStruct((N, Ho, C), jnp.float32),
                   jax.ShapeDtypeStruct((N, Wo, C), jnp.float32)),
        in_specs=[v] * 8,
        out_specs=(v, v),
        compiler_params=_cparams(),
    )(pool_h, pool_w, pp["ca_w1"], pp["ca_b1"], pp["ca_w2"], pp["ca_b2"],
      pp["ca_w3"], pp["ca_b3"])


def _gate_proj_kernel(h_ref, ah_ref, aw_ref, w_ref, b_ref, o_ref, *, mxu_dtype):
    TH, Wo, Chid = h_ref.shape
    Cout = o_ref.shape[2]
    hv = h_ref[...]
    g = (hv * aw_ref[...][None, :, :].astype(hv.dtype)
            * ah_ref[...][:, None, :].astype(hv.dtype))
    y = jnp.dot(g.reshape(TH * Wo, Chid).astype(mxu_dtype), w_ref[...],
                preferred_element_type=jnp.float32)
    o_ref[...] = (y + b_ref[...]).reshape(TH, Wo, Cout).astype(o_ref.dtype)


def _gate_proj_res_kernel(h_ref, ah_ref, aw_ref, w_ref, b_ref, res_ref, o_ref,
                          *, mxu_dtype):
    TH, Wo, Chid = h_ref.shape
    Cout = o_ref.shape[2]
    hv = h_ref[...]
    g = (hv * aw_ref[...][None, :, :].astype(hv.dtype)
            * ah_ref[...][:, None, :].astype(hv.dtype))
    y = jnp.dot(g.reshape(TH * Wo, Chid).astype(mxu_dtype), w_ref[...],
                preferred_element_type=jnp.float32)
    y = (y + b_ref[...]).reshape(TH, Wo, Cout) + res_ref[...].astype(jnp.float32)
    o_ref[...] = y.astype(o_ref.dtype)


def _pick_row_tile(Ho, Wo, Chid, Cout, h_item, out_item, budget, target_rows=2048):
    """Largest divisor of Ho that is a multiple of 8 (sublane) or Ho itself, with
    TH*Wo <= target matmul rows and the per-step blocks within the VMEM budget."""
    cands = sorted({d for d in range(8, Ho + 1, 8) if Ho % d == 0} | {Ho})

    def block_bytes(th):
        rows = th * Wo
        per_step = (rows * Chid * (h_item + 4)              # h tile + f32 gating temp
                    + 2 * rows * Cout * max(out_item, 4)     # out (+res) tiles
                    + th * Chid * 4 + Wo * Chid * 4)         # gates
        return 2 * per_step + Chid * Cout * max(h_item, 2)

    limit = int(budget * 0.7)
    best = None
    for th in cands:
        if th * Wo <= target_rows and block_bytes(th) <= limit:
            best = th
    if best is None:
        fitting = [th for th in cands if block_bytes(th) <= limit]
        best = max(fitting) if fitting else min(cands)
    return best


def _gate_proj(h, a_h, a_w, w_proj, b3, *, residual, out_dtype, mxu_dtype, budget):
    N, Ho, Wo, Chid = h.shape
    Cout = w_proj.shape[1]
    TH = _pick_row_tile(Ho, Wo, Chid, Cout, h.dtype.itemsize,
                        np.dtype(out_dtype).itemsize, budget)
    grid = (N, Ho // TH)

    h_spec = pl.BlockSpec((None, TH, Wo, Chid), lambda n, i: (n, i, 0, 0))
    ah_spec = pl.BlockSpec((None, TH, Chid), lambda n, i: (n, i, 0))
    aw_spec = pl.BlockSpec((None, Wo, Chid), lambda n, i: (n, 0, 0))
    w_spec = pl.BlockSpec((Chid, Cout), lambda n, i: (0, 0))
    b_spec = pl.BlockSpec((1, Cout), lambda n, i: (0, 0))
    o_spec = pl.BlockSpec((None, TH, Wo, Cout), lambda n, i: (n, i, 0, 0))
    out_shape = jax.ShapeDtypeStruct((N, Ho, Wo, Cout), out_dtype)
    cost = pl.CostEstimate(
        flops=int(2 * N * Ho * Wo * Chid * Cout + 3 * N * Ho * Wo * Chid),
        transcendentals=0,
        bytes_accessed=int(h.size * h.dtype.itemsize
                           + 4 * (a_h.size + a_w.size)
                           + w_proj.size * w_proj.dtype.itemsize
                           + np.dtype(out_dtype).itemsize * N * Ho * Wo * Cout
                           * (2 if residual is not None else 1)),
    )
    cparams = _cparams(("parallel", "parallel"))
    args = (h, a_h, a_w, w_proj, b3)

    if residual is None:
        return pl.pallas_call(
            functools.partial(_gate_proj_kernel, mxu_dtype=mxu_dtype),
            grid=grid,
            in_specs=[h_spec, ah_spec, aw_spec, w_spec, b_spec],
            out_specs=o_spec, out_shape=out_shape,
            compiler_params=cparams, cost_estimate=cost,
        )(*args)
    # NOTE: the alias is only a true in-place update if the caller donates x at the
    # jit boundary; otherwise XLA inserts a defensive copy (functionally safe).
    return pl.pallas_call(
        functools.partial(_gate_proj_res_kernel, mxu_dtype=mxu_dtype),
        grid=grid,
        in_specs=[h_spec, ah_spec, aw_spec, w_spec, b_spec, o_spec],
        out_specs=o_spec, out_shape=out_shape,
        input_output_aliases={5: 0},
        compiler_params=cparams, cost_estimate=cost,
    )(*args, residual)


# ---------------------------------------------------------------------------
# Parameter handling (BN folding + weight pre-cast) and entry points
# ---------------------------------------------------------------------------
def fold_bn(gamma, beta, mean, var, conv_bias=None):
    scale = gamma / jnp.sqrt(var + EPS)
    bias = beta - mean * scale
    if conv_bias is not None:
        bias = bias + conv_bias * scale
    return scale, bias


def prepare_params(p, mxu_dtype=DEFAULT_MXU_DTYPE):
    """Fold BN scales into the conv weights, keep biases separate, and pre-cast the
    MXU weights to mxu_dtype so no per-grid-step cast happens inside the kernels."""
    s1, b1 = fold_bn(*p["bn1"])
    s2, b2 = fold_bn(*p["bn2"])
    s3, b3 = fold_bn(*p["bn3"])
    sc, bc = fold_bn(*p["ca_bn1"], conv_bias=p["ca_b1"])
    return dict(
        w_expand=(p["w_expand"] * s1[None, :]).astype(mxu_dtype),
        b1=b1.reshape(1, -1),
        w_dw=(p["w_dw"] * s2[None, :]),                  # VPU taps stay f32
        b2=b2.reshape(1, -1),
        ca_w1=(p["ca_w1"] * sc[None, :]),                # tiny gate MLP stays f32
        ca_b1=bc.reshape(1, -1),
        ca_w2=p["ca_w2"], ca_b2=p["ca_b2"].reshape(1, -1),
        ca_w3=p["ca_w3"], ca_b3=p["ca_b3"].reshape(1, -1),
        w_proj=(p["w_proj"] * s3[None, :]).astype(mxu_dtype),
        b3=b3.reshape(1, -1),
    )


def _fused_fits(H, W, Cin, Chid, Ho, Wo, Cout, x_item, out_item, budget):
    pad = (H + 2) * (W + 2 * _PADW) * Chid * 4
    work = (2 * H * W * Cin * x_item
            + H * W * Chid * 4
            + 3 * Ho * Wo * Chid * 4
            + 2 * Ho * Wo * Cout * max(out_item, 4)
            + Chid * (Cin + Cout + 9) * 4)
    return (pad + work) <= int(budget * 0.7)


def inverted_residual_forward_nhwc(x_nhwc, p, *, stride, identity,
                                   mxu_dtype=DEFAULT_MXU_DTYPE, use_fused=None):
    """InvertedResidual (expand_ratio != 1 branch), NHWC in / NHWC out."""
    assert stride in (1, 2)
    N, H, W, Cin = x_nhwc.shape
    pp = prepare_params(p, mxu_dtype=mxu_dtype)
    Chid = pp["w_expand"].shape[1]
    Cout = pp["w_proj"].shape[1]
    Ho = (H - 1) // stride + 1
    Wo = (W - 1) // stride + 1
    out_dtype = x_nhwc.dtype
    budget = _vmem_budget()

    if use_fused is None:
        use_fused = _fused_fits(H, W, Cin, Chid, Ho, Wo, Cout,
                                np.dtype(x_nhwc.dtype).itemsize,
                                np.dtype(out_dtype).itemsize, budget)

    if use_fused:
        return _fused_forward(x_nhwc, pp, stride=stride, identity=identity,
                              mxu_dtype=mxu_dtype, out_dtype=out_dtype)

    # Fallback split path (hidden tensor round-trips HBM once).
    act_dtype = jnp.bfloat16 if mxu_dtype == jnp.bfloat16 else jnp.float32
    h, pool_h, pool_w = _expand_dw(x_nhwc, pp, stride=stride,
                                   act_dtype=act_dtype, mxu_dtype=mxu_dtype)
    a_h, a_w = _coord_gates_call(pool_h, pool_w, pp)
    res = x_nhwc if identity else None
    return _gate_proj(h, a_h, a_w, pp["w_proj"], pp["b3"], residual=res,
                      out_dtype=out_dtype, mxu_dtype=mxu_dtype, budget=budget)


def inverted_residual_forward(x_nchw, p, *, stride, identity,
                              mxu_dtype=DEFAULT_MXU_DTYPE, use_fused=None):
    """NCHW boundary (PyTorch convention).  In an NHWC pipeline call the *_nhwc
    entry point directly to drop the boundary transposes."""
    x = jnp.transpose(x_nchw, (0, 2, 3, 1))
    out = inverted_residual_forward_nhwc(x, p, stride=stride, identity=identity,
                                         mxu_dtype=mxu_dtype, use_fused=use_fused)
    return jnp.transpose(out, (0, 3, 1, 2))


# ---------------------------------------------------------------------------
# Random parameters + pure-JAX reference (NHWC) for correctness
# ---------------------------------------------------------------------------
def make_params(key, inp, oup, expand_ratio):
    hidden = round(inp * expand_ratio)
    mip = max(8, hidden // 32)
    ks = jax.random.split(key, 24)

    def w(k, shape, s=0.1):
        return jax.random.normal(k, shape, jnp.float32) * s

    def bn(k, c):
        k1, k2, k3, k4 = jax.random.split(k, 4)
        gamma = jax.random.uniform(k1, (c,), jnp.float32, 0.5, 1.5)
        beta = w(k2, (c,))
        mean = w(k3, (c,))
        var = jax.random.uniform(k4, (c,), jnp.float32, 0.5, 1.5)
        return gamma, beta, mean, var

    return dict(
        w_expand=w(ks[0], (inp, hidden)),          # torch (hidden, inp, 1, 1) transposed
        bn1=bn(ks[1], hidden),
        w_dw=w(ks[2], (9, hidden)),                # torch (hidden, 1, 3, 3) -> (9, hidden)
        bn2=bn(ks[3], hidden),
        ca_w1=w(ks[4], (hidden, mip)),
        ca_b1=w(ks[5], (mip,)),
        ca_bn1=bn(ks[6], mip),
        ca_w2=w(ks[7], (mip, hidden)),
        ca_b2=w(ks[8], (hidden,)),
        ca_w3=w(ks[9], (mip, hidden)),
        ca_b3=w(ks[10], (hidden,)),
        w_proj=w(ks[11], (hidden, oup)),
        bn3=bn(ks[12], oup),
    )


def ref_forward_nhwc(x, p, *, stride, identity):
    def bn(t, g, b, m, v):
        return (t - m) * (g / jnp.sqrt(v + EPS)) + b

    h = jnp.clip(bn(jnp.einsum("nhwc,cd->nhwd", x, p["w_expand"]), *p["bn1"]), 0.0, 6.0)

    N, H, W, C = h.shape
    Ho = (H + 2 - 3) // stride + 1
    Wo = (W + 2 - 3) // stride + 1
    xp = jnp.pad(h, ((0, 0), (1, 1), (1, 1), (0, 0)))
    w_dw = p["w_dw"].reshape(3, 3, C)
    acc = jnp.zeros((N, Ho, Wo, C), jnp.float32)
    for ki in range(3):
        for kj in range(3):
            acc = acc + xp[:, ki:ki + (Ho - 1) * stride + 1:stride,
                           kj:kj + (Wo - 1) * stride + 1:stride, :] * w_dw[ki, kj]
    h = jnp.clip(bn(acc, *p["bn2"]), 0.0, 6.0)

    # CoordAtt
    x_h = h.mean(axis=2)
    x_w = h.mean(axis=1)
    y = jnp.concatenate([x_h, x_w], axis=1)
    t = jnp.einsum("nsc,cm->nsm", y, p["ca_w1"]) + p["ca_b1"]
    t = bn(t, *p["ca_bn1"])
    t = t * (jnp.clip(t + 3.0, 0.0, 6.0) / 6.0)
    t_h, t_w = t[:, :Ho, :], t[:, Ho:, :]
    a_h = jax.nn.sigmoid(jnp.einsum("nsm,mc->nsc", t_h, p["ca_w2"]) + p["ca_b2"])
    a_w = jax.nn.sigmoid(jnp.einsum("nsm,mc->nsc", t_w, p["ca_w3"]) + p["ca_b3"])
    h = h * a_w[:, None, :, :] * a_h[:, :, None, :]

    out = bn(jnp.einsum("nhwc,cd->nhwd", h, p["w_proj"]), *p["bn3"])
    if identity:
        out = out + x
    return out


# ---------------------------------------------------------------------------
# Self test
# ---------------------------------------------------------------------------
if __name__ == "__main__":
    # InvertedResidual(inp=8, oup=8, stride=1, expand_ratio=2):
    #   identity residual, hidden_dim=16, CoordAtt mip = max(8, 16//32) = 8.
    N, inp, oup, Hs, Ws = 2, 8, 8, 16, 16
    stride, expand_ratio = 1, 2
    identity = (stride == 1 and inp == oup)

    key = jax.random.PRNGKey(0)
    kx, kp = jax.random.split(key)
    x = jax.random.normal(kx, (N, inp, Hs, Ws), jnp.float32)   # NCHW (PyTorch layout)
    params = make_params(kp, inp, oup, expand_ratio)

    ref = ref_forward_nhwc(jnp.transpose(x, (0, 2, 3, 1)), params,
                           stride=stride, identity=identity)
    ref = np.asarray(jnp.transpose(ref, (0, 3, 1, 2)))

    # 1) f32 path, fused single-kernel (auto-selected).
    out_f32 = jax.block_until_ready(jax.jit(functools.partial(
        inverted_residual_forward, stride=stride, identity=identity,
        mxu_dtype=jnp.float32))(x, params))
    np.testing.assert_allclose(np.asarray(out_f32), ref, rtol=2e-2, atol=2e-3)
    assert out_f32.shape == (N, oup, Hs, Ws)

    # 2) f32 path, forced 3-kernel split fallback.
    out_split = jax.block_until_ready(jax.jit(functools.partial(
        inverted_residual_forward, stride=stride, identity=identity,
        mxu_dtype=jnp.float32, use_fused=False))(x, params))
    np.testing.assert_allclose(np.asarray(out_split), ref, rtol=2e-2, atol=2e-3)

    # 3) default bf16-MXU path, fused (loose sanity check vs f32 reference).
    out_bf16 = jax.block_until_ready(jax.jit(functools.partial(
        inverted_residual_forward, stride=stride, identity=identity))(x, params))
    np.testing.assert_allclose(np.asarray(out_bf16), ref, rtol=1.5e-1, atol=2e-1)

    # 4) default bf16-MXU path, forced split fallback (bf16 hidden storage + bf16 gating).
    out_bf16_split = jax.block_until_ready(jax.jit(functools.partial(
        inverted_residual_forward, stride=stride, identity=identity,
        use_fused=False))(x, params))
    np.testing.assert_allclose(np.asarray(out_bf16_split), ref, rtol=1.5e-1, atol=2e-1)

    print("KERNEL_OK")
</pallas_src>

<mosaic_0001>
module attributes {stable_mosaic.version = 11 : i64} {
  func.func @_fused_kernel(%arg0: i32, %arg1: memref<1x16x16x8xf32, #tpu.memory_space<vmem>>, %arg2: memref<8x16xf32, #tpu.memory_space<vmem>>, %arg3: memref<1x16xf32, #tpu.memory_space<vmem>>, %arg4: memref<9x16xf32, #tpu.memory_space<vmem>>, %arg5: memref<1x16xf32, #tpu.memory_space<vmem>>, %arg6: memref<16x8xf32, #tpu.memory_space<vmem>>, %arg7: memref<1x8xf32, #tpu.memory_space<vmem>>, %arg8: memref<8x16xf32, #tpu.memory_space<vmem>>, %arg9: memref<1x16xf32, #tpu.memory_space<vmem>>, %arg10: memref<8x16xf32, #tpu.memory_space<vmem>>, %arg11: memref<1x16xf32, #tpu.memory_space<vmem>>, %arg12: memref<16x8xf32, #tpu.memory_space<vmem>>, %arg13: memref<1x8xf32, #tpu.memory_space<vmem>>, %arg14: memref<1x16x16x8xf32, #tpu.memory_space<vmem>>, %arg15: memref<18x32x16xf32, #tpu.memory_space<vmem>>) attributes {dimension_semantics = [#tpu.dimension_semantics<parallel>], iteration_bounds = array<i64: 2>, scalar_prefetch = 0 : i64, scratch_operands = 1 : i64, tpu.core_type = #tpu.core_type<tc>, window_params = [{transform_indices = @transform_0, window_bounds = array<i64: 1, 16, 16, 8>}, {pipeline_mode = #tpu.pipeline_mode<synchronous>, transform_indices = @transform_1, window_bounds = array<i64: 8, 16>}, {pipeline_mode = #tpu.pipeline_mode<synchronous>, transform_indices = @transform_2, window_bounds = array<i64: 1, 16>}, {pipeline_mode = #tpu.pipeline_mode<synchronous>, transform_indices = @transform_3, window_bounds = array<i64: 9, 16>}, {pipeline_mode = #tpu.pipeline_mode<synchronous>, transform_indices = @transform_4, window_bounds = array<i64: 1, 16>}, {pipeline_mode = #tpu.pipeline_mode<synchronous>, transform_indices = @transform_5, window_bounds = array<i64: 16, 8>}, {pipeline_mode = #tpu.pipeline_mode<synchronous>, transform_indices = @transform_6, window_bounds = array<i64: 1, 8>}, {pipeline_mode = #tpu.pipeline_mode<synchronous>, transform_indices = @transform_7, window_bounds = array<i64: 8, 16>}, {pipeline_mode = #tpu.pipeline_mode<synchronous>, transform_indices = @transform_8, window_bounds = array<i64: 1, 16>}, {pipeline_mode = #tpu.pipeline_mode<synchronous>, transform_indices = @transform_9, window_bounds = array<i64: 8, 16>}, {pipeline_mode = #tpu.pipeline_mode<synchronous>, transform_indices = @transform_10, window_bounds = array<i64: 1, 16>}, {pipeline_mode = #tpu.pipeline_mode<synchronous>, transform_indices = @transform_11, window_bounds = array<i64: 16, 8>}, {pipeline_mode = #tpu.pipeline_mode<synchronous>, transform_indices = @transform_12, window_bounds = array<i64: 1, 8>}, {transform_indices = @transform_13, window_bounds = array<i64: 1, 16, 16, 8>}]} {
    %c0 = arith.constant 0 : index
    %c0_0 = arith.constant 0 : index
    %c0_1 = arith.constant 0 : index
    %c0_2 = arith.constant 0 : index
    %0 = vector.load %arg1[%c0, %c0_0, %c0_1, %c0_2] : memref<1x16x16x8xf32, #tpu.memory_space<vmem>>, vector<1x16x16x8xf32>
    %1 = vector.shape_cast %0 : vector<1x16x16x8xf32> to vector<16x16x8xf32>
    %2 = vector.shape_cast %1 : vector<16x16x8xf32> to vector<256x8xf32>
    %c0_3 = arith.constant 0 : index
    %c0_4 = arith.constant 0 : index
    %3 = vector.load %arg2[%c0_3, %c0_4] : memref<8x16xf32, #tpu.memory_space<vmem>>, vector<8x16xf32>
    %cst = arith.constant dense<0.000000e+00> : vector<256x16xf32>
    %4 = tpu.matmul %2, %3, %cst {dimension_numbers = #tpu.dot_dimension_numbers<[1], [0], [0], [1], [0, 0, 1, 1], [], []>} : vector<256x8xf32>, vector<8x16xf32>, vector<256x16xf32> -> vector<256x16xf32>
    %c0_5 = arith.constant 0 : index
    %c0_6 = arith.constant 0 : index
    %5 = vector.load %arg3[%c0_5, %c0_6] : memref<1x16xf32, #tpu.memory_space<vmem>>, vector<1x16xf32>
    %6 = vector.broadcast %5 : vector<1x16xf32> to vector<256x16xf32>
    %7 = arith.addf %4, %6 : vector<256x16xf32>
    %cst_7 = arith.constant 0.000000e+00 : f32
    %cst_8 = arith.constant 6.000000e+00 : f32
    %8 = vector.broadcast %cst_7 : f32 to vector<256x16xf32>
    %9 = arith.maximumf %8, %7 : vector<256x16xf32>
    %10 = vector.broadcast %cst_8 : f32 to vector<256x16xf32>
    %11 = arith.minimumf %10, %9 : vector<256x16xf32>
    %12 = vector.shape_cast %11 : vector<256x16xf32> to vector<16x16x16xf32>
    %cst_9 = arith.constant 0.000000e+00 : f32
    %13 = vector.broadcast %cst_9 : f32 to vector<1x32x16xf32>
    %c0_10 = arith.constant 0 : index
    %c0_11 = arith.constant 0 : index
    %c0_12 = arith.constant 0 : index
    %14 = vector.load %arg15[%c0_10, %c0_11, %c0_12] : memref<18x32x16xf32, #tpu.memory_space<vmem>>, vector<1x32x16xf32>
    tpu.vector_store %arg15[%c0_10, %c0_11, %c0_12], %13 {strides = array<i32>} : memref<18x32x16xf32, #tpu.memory_space<vmem>>, vector<1x32x16xf32>,
    %c17 = arith.constant 17 : index
    %c0_13 = arith.constant 0 : index
    %c0_14 = arith.constant 0 : index
    %15 = vector.load %arg15[%c17, %c0_13, %c0_14] : memref<18x32x16xf32, #tpu.memory_space<vmem>>, vector<1x32x16xf32>
    tpu.vector_store %arg15[%c17, %c0_13, %c0_14], %13 {strides = array<i32>} : memref<18x32x16xf32, #tpu.memory_space<vmem>>, vector<1x32x16xf32>,
    %cst_15 = arith.constant 0.000000e+00 : f32
    %16 = vector.broadcast %cst_15 : f32 to vector<16x1x16xf32>
    %c1 = arith.constant 1 : index
    %c7 = arith.constant 7 : index
    %c0_16 = arith.constant 0 : index
    %17 = vector.load %arg15[%c1, %c7, %c0_16] : memref<18x32x16xf32, #tpu.memory_space<vmem>>, vector<16x1x16xf32>
    tpu.vector_store %arg15[%c1, %c7, %c0_16], %16 {strides = array<i32>} : memref<18x32x16xf32, #tpu.memory_space<vmem>>, vector<16x1x16xf32>,
    %c1_17 = arith.constant 1 : index
    %c24 = arith.constant 24 : index
    %c0_18 = arith.constant 0 : index
    %18 = vector.load %arg15[%c1_17, %c24, %c0_18] : memref<18x32x16xf32, #tpu.memory_space<vmem>>, vector<16x1x16xf32>
    tpu.vector_store %arg15[%c1_17, %c24, %c0_18], %16 {strides = array<i32>} : memref<18x32x16xf32, #tpu.memory_space<vmem>>, vector<16x1x16xf32>,
    %c1_19 = arith.constant 1 : index
    %c8 = arith.constant 8 : index
    %c0_20 = arith.constant 0 : index
    %19 = vector.load %arg15[%c1_19, %c8, %c0_20] : memref<18x32x16xf32, #tpu.memory_space<vmem>>, vector<16x16x16xf32>
    tpu.vector_store %arg15[%c1_19, %c8, %c0_20], %12 {strides = array<i32>} : memref<18x32x16xf32, #tpu.memory_space<vmem>>, vector<16x16x16xf32>,
    %cst_21 = arith.constant 0.000000e+00 : f32
    %20 = vector.broadcast %cst_21 : f32 to vector<16x16x16xf32>
    %c0_22 = arith.constant 0 : index
    %c7_23 = arith.constant 7 : index
    %c0_24 = arith.constant 0 : index
    %21 = vector.load %arg15[%c0_22, %c7_23, %c0_24] : memref<18x32x16xf32, #tpu.memory_space<vmem>>, vector<16x16x16xf32>
    %c0_25 = arith.constant 0 : index
    %c0_26 = arith.constant 0 : index
    %22 = vector.load %arg4[%c0_25, %c0_26] : memref<9x16xf32, #tpu.memory_space<vmem>>, vector<1x16xf32>
    %23 = vector.shape_cast %22 : vector<1x16xf32> to vector<16xf32>
    %24 = vector.shape_cast %23 : vector<16xf32> to vector<1x1x16xf32>
    %25 = vector.broadcast %24 : vector<1x1x16xf32> to vector<16x16x16xf32>
    %26 = arith.mulf %21, %25 : vector<16x16x16xf32>
    %27 = arith.addf %20, %26 : vector<16x16x16xf32>
    %c0_27 = arith.constant 0 : index
    %c8_28 = arith.constant 8 : index
    %c0_29 = arith.constant 0 : index
    %28 = vector.load %arg15[%c0_27, %c8_28, %c0_29] : memref<18x32x16xf32, #tpu.memory_space<vmem>>, vector<16x16x16xf32>
    %c1_30 = arith.constant 1 : index
    %c0_31 = arith.constant 0 : index
    %29 = vector.load %arg4[%c1_30, %c0_31] : memref<9x16xf32, #tpu.memory_space<vmem>>, vector<1x16xf32>
    %30 = vector.shape_cast %29 : vector<1x16xf32> to vector<16xf32>
    %31 = vector.shape_cast %30 : vector<16xf32> to vector<1x1x16xf32>
    %32 = vector.broadcast %31 : vector<1x1x16xf32> to vector<16x16x16xf32>
    %33 = arith.mulf %28, %32 : vector<16x16x16xf32>
    %34 = arith.addf %27, %33 : vector<16x16x16xf32>
    %c0_32 = arith.constant 0 : index
    %c9 = arith.constant 9 : index
    %c0_33 = arith.constant 0 : index
    %35 = vector.load %arg15[%c0_32, %c9, %c0_33] : memref<18x32x16xf32, #tpu.memory_space<vmem>>, vector<16x16x16xf32>
    %c2 = arith.constant 2 : index
    %c0_34 = arith.constant 0 : index
    %36 = vector.load %arg4[%c2, %c0_34] : memref<9x16xf32, #tpu.memory_space<vmem>>, vector<1x16xf32>
    %37 = vector.shape_cast %36 : vector<1x16xf32> to vector<16xf32>
    %38 = vector.shape_cast %37 : vector<16xf32> to vector<1x1x16xf32>
    %39 = vector.broadcast %38 : vector<1x1x16xf32> to vector<16x16x16xf32>
    %40 = arith.mulf %35, %39 : vector<16x16x16xf32>
    %41 = arith.addf %34, %40 : vector<16x16x16xf32>
    %c1_35 = arith.constant 1 : index
    %c7_36 = arith.constant 7 : index
    %c0_37 = arith.constant 0 : index
    %42 = vector.load %arg15[%c1_35, %c7_36, %c0_37] : memref<18x32x16xf32, #tpu.memory_space<vmem>>, vector<16x16x16xf32>
    %c3 = arith.constant 3 : index
    %c0_38 = arith.constant 0 : index
    %43 = vector.load %arg4[%c3, %c0_38] : memref<9x16xf32, #tpu.memory_space<vmem>>, vector<1x16xf32>
    %44 = vector.shape_cast %43 : vector<1x16xf32> to vector<16xf32>
    %45 = vector.shape_cast %44 : vector<16xf32> to vector<1x1x16xf32>
    %46 = vector.broadcast %45 : vector<1x1x16xf32> to vector<16x16x16xf32>
    %47 = arith.mulf %42, %46 : vector<16x16x16xf32>
    %48 = arith.addf %41, %47 : vector<16x16x16xf32>
    %c1_39 = arith.constant 1 : index
    %c8_40 = arith.constant 8 : index
    %c0_41 = arith.constant 0 : index
    %49 = vector.load %arg15[%c1_39, %c8_40, %c0_41] : memref<18x32x16xf32, #tpu.memory_space<vmem>>, vector<16x16x16xf32>
    %c4 = arith.constant 4 : index
    %c0_42 = arith.constant 0 : index
    %50 = vector.load %arg4[%c4, %c0_42] : memref<9x16xf32, #tpu.memory_space<vmem>>, vector<1x16xf32>
    %51 = vector.shape_cast %50 : vector<1x16xf32> to vector<16xf32>
    %52 = vector.shape_cast %51 : vector<16xf32> to vector<1x1x16xf32>
    %53 = vector.broadcast %52 : vector<1x1x16xf32> to vector<16x16x16xf32>
    %54 = arith.mulf %49, %53 : vector<16x16x16xf32>
    %55 = arith.addf %48, %54 : vector<16x16x16xf32>
    %c1_43 = arith.constant 1 : index
    %c9_44 = arith.constant 9 : index
    %c0_45 = arith.constant 0 : index
    %56 = vector.load %arg15[%c1_43, %c9_44, %c0_45] : memref<18x32x16xf32, #tpu.memory_space<vmem>>, vector<16x16x16xf32>
    %c5 = arith.constant 5 : index
    %c0_46 = arith.constant 0 : index
    %57 = vector.load %arg4[%c5, %c0_46] : memref<9x16xf32, #tpu.memory_space<vmem>>, vector<1x16xf32>
    %58 = vector.shape_cast %57 : vector<1x16xf32> to vector<16xf32>
    %59 = vector.shape_cast %58 : vector<16xf32> to vector<1x1x16xf32>
    %60 = vector.broadcast %59 : vector<1x1x16xf32> to vector<16x16x16xf32>
    %61 = arith.mulf %56, %60 : vector<16x16x16xf32>
    %62 = arith.addf %55, %61 : vector<16x16x16xf32>
    %c2_47 = arith.constant 2 : index
    %c7_48 = arith.constant 7 : index
    %c0_49 = arith.constant 0 : index
    %63 = vector.load %arg15[%c2_47, %c7_48, %c0_49] : memref<18x32x16xf32, #tpu.memory_space<vmem>>, vector<16x16x16xf32>
    %c6 = arith.constant 6 : index
    %c0_50 = arith.constant 0 : index
    %64 = vector.load %arg4[%c6, %c0_50] : memref<9x16xf32, #tpu.memory_space<vmem>>, vector<1x16xf32>
    %65 = vector.shape_cast %64 : vector<1x16xf32> to vector<16xf32>
    %66 = vector.shape_cast %65 : vector<16xf32> to vector<1x1x16xf32>
    %67 = vector.broadcast %66 : vector<1x1x16xf32> to vector<16x16x16xf32>
    %68 = arith.mulf %63, %67 : vector<16x16x16xf32>
    %69 = arith.addf %62, %68 : vector<16x16x16xf32>
    %c2_51 = arith.constant 2 : index
    %c8_52 = arith.constant 8 : index
    %c0_53 = arith.constant 0 : index
    %70 = vector.load %arg15[%c2_51, %c8_52, %c0_53] : memref<18x32x16xf32, #tpu.memory_space<vmem>>, vector<16x16x16xf32>
    %c7_54 = arith.constant 7 : index
    %c0_55 = arith.constant 0 : index
    %71 = vector.load %arg4[%c7_54, %c0_55] : memref<9x16xf32, #tpu.memory_space<vmem>>, vector<1x16xf32>
    %72 = vector.shape_cast %71 : vector<1x16xf32> to vector<16xf32>
    %73 = vector.shape_cast %72 : vector<16xf32> to vector<1x1x16xf32>
    %74 = vector.broadcast %73 : vector<1x1x16xf32> to vector<16x16x16xf32>
    %75 = arith.mulf %70, %74 : vector<16x16x16xf32>
    %76 = arith.addf %69, %75 : vector<16x16x16xf32>
    %c2_56 = arith.constant 2 : index
    %c9_57 = arith.constant 9 : index
    %c0_58 = arith.constant 0 : index
    %77 = vector.load %arg15[%c2_56, %c9_57, %c0_58] : memref<18x32x16xf32, #tpu.memory_space<vmem>>, vector<16x16x16xf32>
    %c8_59 = arith.constant 8 : index
    %c0_60 = arith.constant 0 : index
    %78 = vector.load %arg4[%c8_59, %c0_60] : memref<9x16xf32, #tpu.memory_space<vmem>>, vector<1x16xf32>
    %79 = vector.shape_cast %78 : vector<1x16xf32> to vector<16xf32>
    %80 = vector.shape_cast %79 : vector<16xf32> to vector<1x1x16xf32>
    %81 = vector.broadcast %80 : vector<1x1x16xf32> to vector<16x16x16xf32>
    %82 = arith.mulf %77, %81 : vector<16x16x16xf32>
    %83 = arith.addf %76, %82 : vector<16x16x16xf32>
    %c0_61 = arith.constant 0 : index
    %c0_62 = arith.constant 0 : index
    %84 = vector.load %arg5[%c0_61, %c0_62] : memref<1x16xf32, #tpu.memory_space<vmem>>, vector<1x16xf32>
    %85 = vector.shape_cast %84 : vector<1x16xf32> to vector<1x1x16xf32>
    %86 = vector.broadcast %85 : vector<1x1x16xf32> to vector<16x16x16xf32>
    %87 = arith.addf %83, %86 : vector<16x16x16xf32>
    %cst_63 = arith.constant 0.000000e+00 : f32
    %cst_64 = arith.constant 6.000000e+00 : f32
    %88 = vector.broadcast %cst_63 : f32 to vector<16x16x16xf32>
    %89 = arith.maximumf %88, %87 : vector<16x16x16xf32>
    %90 = vector.broadcast %cst_64 : f32 to vector<16x16x16xf32>
    %91 = arith.minimumf %90, %89 : vector<16x16x16xf32>
    %cst_65 = arith.constant dense<0.000000e+00> : vector<16x16xf32>
    %92 = vector.multi_reduction <add>, %91, %cst_65 [1] : vector<16x16x16xf32> to vector<16x16xf32>
    %cst_66 = arith.constant 1.600000e+01 : f32
    %93 = vector.broadcast %cst_66 : f32 to vector<16x16xf32>
    %94 = arith.divf %92, %93 : vector<16x16xf32>
    %cst_67 = arith.constant dense<0.000000e+00> : vector<16x16xf32>
    %95 = vector.multi_reduction <add>, %91, %cst_67 [0] : vector<16x16x16xf32> to vector<16x16xf32>
    %cst_68 = arith.constant 1.600000e+01 : f32
    %96 = vector.broadcast %cst_68 : f32 to vector<16x16xf32>
    %97 = arith.divf %95, %96 : vector<16x16xf32>
    %c0_69 = arith.constant 0 : index
    %c0_70 = arith.constant 0 : index
    %98 = vector.load %arg6[%c0_69, %c0_70] : memref<16x8xf32, #tpu.memory_space<vmem>>, vector<16x8xf32>
    %c0_71 = arith.constant 0 : index
    %c0_72 = arith.constant 0 : index
    %99 = vector.load %arg7[%c0_71, %c0_72] : memref<1x8xf32, #tpu.memory_space<vmem>>, vector<1x8xf32>
    %c0_73 = arith.constant 0 : index
    %c0_74 = arith.constant 0 : index
    %100 = vector.load %arg8[%c0_73, %c0_74] : memref<8x16xf32, #tpu.memory_space<vmem>>, vector<8x16xf32>
    %c0_75 = arith.constant 0 : index
    %c0_76 = arith.constant 0 : index
    %101 = vector.load %arg9[%c0_75, %c0_76] : memref<1x16xf32, #tpu.memory_space<vmem>>, vector<1x16xf32>
    %c0_77 = arith.constant 0 : index
    %c0_78 = arith.constant 0 : index
    %102 = vector.load %arg10[%c0_77, %c0_78] : memref<8x16xf32, #tpu.memory_space<vmem>>, vector<8x16xf32>
    %c0_79 = arith.constant 0 : index
    %c0_80 = arith.constant 0 : index
    %103 = vector.load %arg11[%c0_79, %c0_80] : memref<1x16xf32, #tpu.memory_space<vmem>>, vector<1x16xf32>
    %cst_81 = arith.constant dense<0.000000e+00> : vector<16x8xf32>
    %104 = tpu.matmul %94, %98, %cst_81 {dimension_numbers = #tpu.dot_dimension_numbers<[1], [0], [0], [1], [0, 0, 1, 1], [], []>} : vector<16x16xf32>, vector<16x8xf32>, vector<16x8xf32> -> vector<16x8xf32>
    %105 = vector.broadcast %99 : vector<1x8xf32> to vector<16x8xf32>
    %106 = arith.addf %104, %105 : vector<16x8xf32>
    %cst_82 = arith.constant 3.000000e+00 : f32
    %107 = vector.broadcast %cst_82 : f32 to vector<16x8xf32>
    %108 = arith.addf %106, %107 : vector<16x8xf32>
    %cst_83 = arith.constant 0.000000e+00 : f32
    %cst_84 = arith.constant 6.000000e+00 : f32
    %109 = vector.broadcast %cst_83 : f32 to vector<16x8xf32>
    %110 = arith.maximumf %109, %108 : vector<16x8xf32>
    %111 = vector.broadcast %cst_84 : f32 to vector<16x8xf32>
    %112 = arith.minimumf %111, %110 : vector<16x8xf32>
    %cst_85 = arith.constant 0.166666672 : f32
    %113 = vector.broadcast %cst_85 : f32 to vector<16x8xf32>
    %114 = arith.mulf %112, %113 : vector<16x8xf32>
    %115 = arith.mulf %106, %114 : vector<16x8xf32>
    %cst_86 = arith.constant dense<0.000000e+00> : vector<16x16xf32>
    %116 = tpu.matmul %115, %100, %cst_86 {dimension_numbers = #tpu.dot_dimension_numbers<[1], [0], [0], [1], [0, 0, 1, 1], [], []>} : vector<16x8xf32>, vector<8x16xf32>, vector<16x16xf32> -> vector<16x16xf32>
    %117 = vector.broadcast %101 : vector<1x16xf32> to vector<16x16xf32>
    %118 = arith.addf %116, %117 : vector<16x16xf32>
    %119 = arith.negf %118 : vector<16x16xf32>
    %120 = math.exp %119 : vector<16x16xf32>
    %cst_87 = arith.constant 1.000000e+00 : f32
    %121 = vector.broadcast %cst_87 : f32 to vector<16x16xf32>
    %122 = arith.addf %121, %120 : vector<16x16xf32>
    %123 = arith.divf %121, %122 : vector<16x16xf32>
    %cst_88 = arith.constant dense<0.000000e+00> : vector<16x8xf32>
    %124 = tpu.matmul %97, %98, %cst_88 {dimension_numbers = #tpu.dot_dimension_numbers<[1], [0], [0], [1], [0, 0, 1, 1], [], []>} : vector<16x16xf32>, vector<16x8xf32>, vector<16x8xf32> -> vector<16x8xf32>
    %125 = vector.broadcast %99 : vector<1x8xf32> to vector<16x8xf32>
    %126 = arith.addf %124, %125 : vector<16x8xf32>
    %cst_89 = arith.constant 3.000000e+00 : f32
    %127 = vector.broadcast %cst_89 : f32 to vector<16x8xf32>
    %128 = arith.addf %126, %127 : vector<16x8xf32>
    %cst_90 = arith.constant 0.000000e+00 : f32
    %cst_91 = arith.constant 6.000000e+00 : f32
    %129 = vector.broadcast %cst_90 : f32 to vector<16x8xf32>
    %130 = arith.maximumf %129, %128 : vector<16x8xf32>
    %131 = vector.broadcast %cst_91 : f32 to vector<16x8xf32>
    %132 = arith.minimumf %131, %130 : vector<16x8xf32>
    %cst_92 = arith.constant 0.166666672 : f32
    %133 = vector.broadcast %cst_92 : f32 to vector<16x8xf32>
    %134 = arith.mulf %132, %133 : vector<16x8xf32>
    %135 = arith.mulf %126, %134 : vector<16x8xf32>
    %cst_93 = arith.constant dense<0.000000e+00> : vector<16x16xf32>
    %136 = tpu.matmul %135, %102, %cst_93 {dimension_numbers = #tpu.dot_dimension_numbers<[1], [0], [0], [1], [0, 0, 1, 1], [], []>} : vector<16x8xf32>, vector<8x16xf32>, vector<16x16xf32> -> vector<16x16xf32>
    %137 = vector.broadcast %103 : vector<1x16xf32> to vector<16x16xf32>
    %138 = arith.addf %136, %137 : vector<16x16xf32>
    %139 = arith.negf %138 : vector<16x16xf32>
    %140 = math.exp %139 : vector<16x16xf32>
    %cst_94 = arith.constant 1.000000e+00 : f32
    %141 = vector.broadcast %cst_94 : f32 to vector<16x16xf32>
    %142 = arith.addf %141, %140 : vector<16x16xf32>
    %143 = arith.divf %141, %142 : vector<16x16xf32>
    %144 = vector.shape_cast %143 : vector<16x16xf32> to vector<1x16x16xf32>
    %145 = vector.broadcast %144 : vector<1x16x16xf32> to vector<16x16x16xf32>
    %146 = arith.mulf %91, %145 : vector<16x16x16xf32>
    %147 = vector.shape_cast %123 : vector<16x16xf32> to vector<16x1x16xf32>
    %148 = vector.broadcast %147 : vector<16x1x16xf32> to vector<16x16x16xf32>
    %149 = arith.mulf %146, %148 : vector<16x16x16xf32>
    %150 = vector.shape_cast %149 : vector<16x16x16xf32> to vector<256x16xf32>
    %c0_95 = arith.constant 0 : index
    %c0_96 = arith.constant 0 : index
    %151 = vector.load %arg12[%c0_95, %c0_96] : memref<16x8xf32, #tpu.memory_space<vmem>>, vector<16x8xf32>
    %cst_97 = arith.constant dense<0.000000e+00> : vector<256x8xf32>
    %152 = tpu.matmul %150, %151, %cst_97 {dimension_numbers = #tpu.dot_dimension_numbers<[1], [0], [0], [1], [0, 0, 1, 1], [], []>} : vector<256x16xf32>, vector<16x8xf32>, vector<256x8xf32> -> vector<256x8xf32>
    %c0_98 = arith.constant 0 : index
    %c0_99 = arith.constant 0 : index
    %153 = vector.load %arg13[%c0_98, %c0_99] : memref<1x8xf32, #tpu.memory_space<vmem>>, vector<1x8xf32>
    %154 = vector.broadcast %153 : vector<1x8xf32> to vector<256x8xf32>
    %155 = arith.addf %152, %154 : vector<256x8xf32>
    %156 = vector.shape_cast %155 : vector<256x8xf32> to vector<16x16x8xf32>
    %157 = arith.addf %156, %1 : vector<16x16x8xf32>
    %c0_100 = arith.constant 0 : index
    %c0_101 = arith.constant 0 : index
    %c0_102 = arith.constant 0 : index
    %c0_103 = arith.constant 0 : index
    %158 = vector.load %arg14[%c0_100, %c0_101, %c0_102, %c0_103] : memref<1x16x16x8xf32, #tpu.memory_space<vmem>>, vector<1x16x16x8xf32>
    %159 = vector.shape_cast %158 : vector<1x16x16x8xf32> to vector<16x16x8xf32>
    %160 = vector.shape_cast %157 : vector<16x16x8xf32> to vector<1x16x16x8xf32>
    tpu.vector_store %arg14[%c0_100, %c0_101, %c0_102, %c0_103], %160 {strides = array<i32>} : memref<1x16x16x8xf32, #tpu.memory_space<vmem>>, vector<1x16x16x8xf32>,
    return
  }
  func.func @transform_0(%arg0: i32) -> (i32, i32, i32, i32) {
    %c0_i32 = arith.constant 0 : i32
    %c0_i32_0 = arith.constant 0 : i32
    %c0_i32_1 = arith.constant 0 : i32
    %c0_i32_2 = arith.constant 0 : i32
    return %arg0, %c0_i32, %c0_i32_0, %c0_i32_1 : i32, i32, i32, i32
  }
  func.func @transform_1(%arg0: i32) -> (i32, i32) {
    %c0_i32 = arith.constant 0 : i32
    %c0_i32_0 = arith.constant 0 : i32
    %c0_i32_1 = arith.constant 0 : i32
    return %c0_i32, %c0_i32_0 : i32, i32
  }
  func.func @transform_2(%arg0: i32) -> (i32, i32) {
    %c0_i32 = arith.constant 0 : i32
    %c0_i32_0 = arith.constant 0 : i32
    %c0_i32_1 = arith.constant 0 : i32
    return %c0_i32, %c0_i32_0 : i32, i32
  }
  func.func @transform_3(%arg0: i32) -> (i32, i32) {
    %c0_i32 = arith.constant 0 : i32
    %c0_i32_0 = arith.constant 0 : i32
    %c0_i32_1 = arith.constant 0 : i32
    return %c0_i32, %c0_i32_0 : i32, i32
  }
  func.func @transform_4(%arg0: i32) -> (i32, i32) {
    %c0_i32 = arith.constant 0 : i32
    %c0_i32_0 = arith.constant 0 : i32
    %c0_i32_1 = arith.constant 0 : i32
    return %c0_i32, %c0_i32_0 : i32, i32
  }
  func.func @transform_5(%arg0: i32) -> (i32, i32) {
    %c0_i32 = arith.constant 0 : i32
    %c0_i32_0 = arith.constant 0 : i32
    %c0_i32_1 = arith.constant 0 : i32
    return %c0_i32, %c0_i32_0 : i32, i32
  }
  func.func @transform_6(%arg0: i32) -> (i32, i32) {
    %c0_i32 = arith.constant 0 : i32
    %c0_i32_0 = arith.constant 0 : i32
    %c0_i32_1 = arith.constant 0 : i32
    return %c0_i32, %c0_i32_0 : i32, i32
  }
  func.func @transform_7(%arg0: i32) -> (i32, i32) {
    %c0_i32 = arith.constant 0 : i32
    %c0_i32_0 = arith.constant 0 : i32
    %c0_i32_1 = arith.constant 0 : i32
    return %c0_i32, %c0_i32_0 : i32, i32
  }
  func.func @transform_8(%arg0: i32) -> (i32, i32) {
    %c0_i32 = arith.constant 0 : i32
    %c0_i32_0 = arith.constant 0 : i32
    %c0_i32_1 = arith.constant 0 : i32
    return %c0_i32, %c0_i32_0 : i32, i32
  }
  func.func @transform_9(%arg0: i32) -> (i32, i32) {
    %c0_i32 = arith.constant 0 : i32
    %c0_i32_0 = arith.constant 0 : i32
    %c0_i32_1 = arith.constant 0 : i32
    return %c0_i32, %c0_i32_0 : i32, i32
  }
  func.func @transform_10(%arg0: i32) -> (i32, i32) {
    %c0_i32 = arith.constant 0 : i32
    %c0_i32_0 = arith.constant 0 : i32
    %c0_i32_1 = arith.constant 0 : i32
    return %c0_i32, %c0_i32_0 : i32, i32
  }
  func.func @transform_11(%arg0: i32) -> (i32, i32) {
    %c0_i32 = arith.constant 0 : i32
    %c0_i32_0 = arith.constant 0 : i32
    %c0_i32_1 = arith.constant 0 : i32
    return %c0_i32, %c0_i32_0 : i32, i32
  }
  func.func @transform_12(%arg0: i32) -> (i32, i32) {
    %c0_i32 = arith.constant 0 : i32
    %c0_i32_0 = arith.constant 0 : i32
    %c0_i32_1 = arith.constant 0 : i32
    return %c0_i32, %c0_i32_0 : i32, i32
  }
  func.func @transform_13(%arg0: i32) -> (i32, i32, i32, i32) {
    %c0_i32 = arith.constant 0 : i32
    %c0_i32_0 = arith.constant 0 : i32
    %c0_i32_1 = arith.constant 0 : i32
    %c0_i32_2 = arith.constant 0 : i32
    return %arg0, %c0_i32, %c0_i32_0, %c0_i32_1 : i32, i32, i32, i32
  }
}

</mosaic_0001>

<llo_original>
// kernel: inverted_residual_forward.1
$region0: #{inverted_residual_forward.1}
  #allocation0 [shape = 'u32[]', space=smem, size = 0x4, offset = 0x4, fixed_abs, tag = 'smem constant byte address 0x4 - core index']
  #allocation1 [shape = 'u32[72,128]{1,0:T(1,128)}', space=vmem, size = 0x9000, scoped, tag = 'internal scratch']
  #allocation2 [shape = 'f32[18,32,16]{2,1,0:T(8,128)}', space=vmem, size = 0x48000, scoped, tag = 'scratch operand']
  %s0 = inlined_call_operand.vmem [shape: f32[2,16,16,8], index: 0, kind: input, shape index: {}]
  %s1 = inlined_call_operand.vmem [shape: f32[8,16], index: 1, kind: input, shape index: {}]
  %s2 = inlined_call_operand.vmem [shape: f32[1,16], index: 2, kind: input, shape index: {}]
  %s3 = inlined_call_operand.vmem [shape: f32[9,16], index: 3, kind: input, shape index: {}]
  %s4 = inlined_call_operand.vmem [shape: f32[1,16], index: 4, kind: input, shape index: {}]
  %s5 = inlined_call_operand.vmem [shape: f32[16,8], index: 5, kind: input, shape index: {}]
  %s6 = inlined_call_operand.vmem [shape: f32[1,8], index: 6, kind: input, shape index: {}]
  %s7 = inlined_call_operand.vmem [shape: f32[8,16], index: 7, kind: input, shape index: {}]
  %s8 = inlined_call_operand.vmem [shape: f32[1,16], index: 8, kind: input, shape index: {}]
  %s9 = inlined_call_operand.vmem [shape: f32[8,16], index: 9, kind: input, shape index: {}]
  %s10 = inlined_call_operand.vmem [shape: f32[1,16], index: 10, kind: input, shape index: {}]
  %s11 = inlined_call_operand.vmem [shape: f32[16,8], index: 11, kind: input, shape index: {}]
  %s12 = inlined_call_operand.vmem [shape: f32[1,8], index: 12, kind: input, shape index: {}]
  %s13 = inlined_call_operand.vmem [shape: f32[2,16,16,8], index: 13, kind: output, shape index: {}]
  %s14 = sld [smem:[#allocation0]]
  $region85: #{inverted_residual_forward.1} parent=0
    _
  %s16 = ssub.s32 1, %s14
  %s17 = scalar_select 0, %s16, %s14
  loop: start=0, step=1, limit=4
  $region2: #{inverted_residual_forward.1} parent=0 // loop_pre_header
    _
  $region3: #{inverted_residual_forward.1} parent=0 // loop_header
    %s19 = sphi 0, %s23
    %p20 = scmp.ge.s32.totalorder %s19, 4
    %s29 = sphi 0, %s31
    %s32 = sphi 0, %s29
    %s33 = sphi 0, %s32
    %s49 = sphi 0, %s33
    %s53 = sphi 0, %s53
    %s55 = sphi 0, %s53
    %s56 = sphi 0, %s55
    %s70 = sphi 0, %s56
    %s74 = sphi 0, %s74
    %s76 = sphi 0, %s74
    %s77 = sphi 0, %s76
    %s91 = sphi 0, %s77
    %s95 = sphi 0, %s95
    %s97 = sphi 0, %s95
    %s98 = sphi 0, %s97
    %s112 = sphi 0, %s98
    %s116 = sphi 0, %s116
    %s118 = sphi 0, %s116
    %s119 = sphi 0, %s118
    %s133 = sphi 0, %s119
    %s137 = sphi 0, %s137
    %s139 = sphi 0, %s137
    %s140 = sphi 0, %s139
    %s154 = sphi 0, %s140
    %s158 = sphi 0, %s158
    %s160 = sphi 0, %s158
    %s161 = sphi 0, %s160
    %s175 = sphi 0, %s161
    %s179 = sphi 0, %s179
    %s181 = sphi 0, %s179
    %s182 = sphi 0, %s181
    %s196 = sphi 0, %s182
    %s200 = sphi 0, %s200
    %s202 = sphi 0, %s200
    %s203 = sphi 0, %s202
    %s217 = sphi 0, %s203
    %s221 = sphi 0, %s221
    %s223 = sphi 0, %s221
    %s224 = sphi 0, %s223
    %s238 = sphi 0, %s224
    %s242 = sphi 0, %s242
    %s244 = sphi 0, %s242
    %s245 = sphi 0, %s244
    %s259 = sphi 0, %s245
    %s263 = sphi 0, %s263
    %s265 = sphi 0, %s263
    %s266 = sphi 0, %s265
    %s280 = sphi 0, %s266
    %s284 = sphi 0, %s284
    %s286 = sphi 0, %s284
    %s287 = sphi 0, %s286
    %s301 = sphi 0, %s287
    %s307 = sphi 0, %s309
    %s310 = sphi 0, %s307
    %s311 = sphi 0, %s310
    %s327 = sphi 0, %s311
  $region4: #{inverted_residual_forward.1} parent=0 // loop_header_branch
    %22 = sbr.rel (%p20) target = $region8
  $region5: #{inverted_residual_forward.1} parent=0 // loop_body
    %s24 = ssub.s32 %s19, 1
    %s25 = ssub.s32 %s19, 2
    %s26 = sadd.s32 %s19, 1
    %s27 = ssub.s32 %s19, %s26
    %p28 = scmp.eq.s32.totalorder %s27, 0
    %s30 = sadd.s32 %s29, 1
    %s31 = scalar_select %p28, %s29, %s30
    %p34 = pneg %p28
    %p35 = scmp.eq.s32.totalorder %s19, 1
    %p36 = por %p34, %p35
    %p37 = scmp.ne.s32.totalorder %s29, %s32
    %p38 = scmp.eq.s32.totalorder %s19, 0
    %p39 = por %p37, %p38
    %p40 = scmp.ne.s32.totalorder %s29, %s32
    %p41 = scmp.eq.s32.totalorder %s24, 1
    %p42 = por %p40, %p41
    %p43 = scmp.ne.s32.totalorder %s32, %s33
    %p44 = scmp.eq.s32.totalorder %s24, 0
    %p45 = por %p43, %p44
    %p46 = scmp.ne.s32.totalorder %s32, %s33
    %p47 = scmp.eq.s32.totalorder %s25, 1
    %p48 = por %p46, %p47
    %p50 = scmp.ne.s32.totalorder %s33, %s49
    %p51 = scmp.eq.s32.totalorder %s25, 0
    %p52 = por %p50, %p51
    %s54 = sadd.s32 %s53, 1
    %p57 = scmp.eq.s32.totalorder %s19, 1
    %p58 = scmp.ne.s32.totalorder %s53, %s55
    %p59 = scmp.eq.s32.totalorder %s19, 0
    %p60 = por %p58, %p59
    %p61 = scmp.ne.s32.totalorder %s53, %s55
    %p62 = scmp.eq.s32.totalorder %s24, 1
    %p63 = por %p61, %p62
    %p64 = scmp.ne.s32.totalorder %s55, %s56
    %p65 = scmp.eq.s32.totalorder %s24, 0
    %p66 = por %p64, %p65
    %p67 = scmp.ne.s32.totalorder %s55, %s56
    %p68 = scmp.eq.s32.totalorder %s25, 1
    %p69 = por %p67, %p68
    %p71 = scmp.ne.s32.totalorder %s56, %s70
    %p72 = scmp.eq.s32.totalorder %s25, 0
    %p73 = por %p71, %p72
    %s75 = sadd.s32 %s74, 1
    %p78 = scmp.eq.s32.totalorder %s19, 1
    %p79 = scmp.ne.s32.totalorder %s74, %s76
    %p80 = scmp.eq.s32.totalorder %s19, 0
    %p81 = por %p79, %p80
    %p82 = scmp.ne.s32.totalorder %s74, %s76
    %p83 = scmp.eq.s32.totalorder %s24, 1
    %p84 = por %p82, %p83
    %p85 = scmp.ne.s32.totalorder %s76, %s77
    %p86 = scmp.eq.s32.totalorder %s24, 0
    %p87 = por %p85, %p86
    %p88 = scmp.ne.s32.totalorder %s76, %s77
    %p89 = scmp.eq.s32.totalorder %s25, 1
    %p90 = por %p88, %p89
    %p92 = scmp.ne.s32.totalorder %s77, %s91
    %p93 = scmp.eq.s32.totalorder %s25, 0
    %p94 = por %p92, %p93
    %s96 = sadd.s32 %s95, 1
    %p99 = scmp.eq.s32.totalorder %s19, 1
    %p100 = scmp.ne.s32.totalorder %s95, %s97
    %p101 = scmp.eq.s32.totalorder %s19, 0
    %p102 = por %p100, %p101
    %p103 = scmp.ne.s32.totalorder %s95, %s97
    %p104 = scmp.eq.s32.totalorder %s24, 1
    %p105 = por %p103, %p104
    %p106 = scmp.ne.s32.totalorder %s97, %s98
    %p107 = scmp.eq.s32.totalorder %s24, 0
    %p108 = por %p106, %p107
    %p109 = scmp.ne.s32.totalorder %s97, %s98
    %p110 = scmp.eq.s32.totalorder %s25, 1
    %p111 = por %p109, %p110
    %p113 = scmp.ne.s32.totalorder %s98, %s112
    %p114 = scmp.eq.s32.totalorder %s25, 0
    %p115 = por %p113, %p114
    %s117 = sadd.s32 %s116, 1
    %p120 = scmp.eq.s32.totalorder %s19, 1
    %p121 = scmp.ne.s32.totalorder %s116, %s118
    %p122 = scmp.eq.s32.totalorder %s19, 0
    %p123 = por %p121, %p122
    %p124 = scmp.ne.s32.totalorder %s116, %s118
    %p125 = scmp.eq.s32.totalorder %s24, 1
    %p126 = por %p124, %p125
    %p127 = scmp.ne.s32.totalorder %s118, %s119
    %p128 = scmp.eq.s32.totalorder %s24, 0
    %p129 = por %p127, %p128
    %p130 = scmp.ne.s32.totalorder %s118, %s119
    %p131 = scmp.eq.s32.totalorder %s25, 1
    %p132 = por %p130, %p131
    %p134 = scmp.ne.s32.totalorder %s119, %s133
    %p135 = scmp.eq.s32.totalorder %s25, 0
    %p136 = por %p134, %p135
    %s138 = sadd.s32 %s137, 1
    %p141 = scmp.eq.s32.totalorder %s19, 1
    %p142 = scmp.ne.s32.totalorder %s137, %s139
    %p143 = scmp.eq.s32.totalorder %s19, 0
    %p144 = por %p142, %p143
    %p145 = scmp.ne.s32.totalorder %s137, %s139
    %p146 = scmp.eq.s32.totalorder %s24, 1
    %p147 = por %p145, %p146
    %p148 = scmp.ne.s32.totalorder %s139, %s140
    %p149 = scmp.eq.s32.totalorder %s24, 0
    %p150 = por %p148, %p149
    %p151 = scmp.ne.s32.totalorder %s139, %s140
    %p152 = scmp.eq.s32.totalorder %s25, 1
    %p153 = por %p151, %p152
    %p155 = scmp.ne.s32.totalorder %s140, %s154
    %p156 = scmp.eq.s32.totalorder %s25, 0
    %p157 = por %p155, %p156
    %s159 = sadd.s32 %s158, 1
    %p162 = scmp.eq.s32.totalorder %s19, 1
    %p163 = scmp.ne.s32.totalorder %s158, %s160
    %p164 = scmp.eq.s32.totalorder %s19, 0
    %p165 = por %p163, %p164
    %p166 = scmp.ne.s32.totalorder %s158, %s160
    %p167 = scmp.eq.s32.totalorder %s24, 1
    %p168 = por %p166, %p167
    %p169 = scmp.ne.s32.totalorder %s160, %s161
    %p170 = scmp.eq.s32.totalorder %s24, 0
    %p171 = por %p169, %p170
    %p172 = scmp.ne.s32.totalorder %s160, %s161
    %p173 = scmp.eq.s32.totalorder %s25, 1
    %p174 = por %p172, %p173
    %p176 = scmp.ne.s32.totalorder %s161, %s175
    %p177 = scmp.eq.s32.totalorder %s25, 0
    %p178 = por %p176, %p177
    %s180 = sadd.s32 %s179, 1
    %p183 = scmp.eq.s32.totalorder %s19, 1
    %p184 = scmp.ne.s32.totalorder %s179, %s181
    %p185 = scmp.eq.s32.totalorder %s19, 0
    %p186 = por %p184, %p185
    %p187 = scmp.ne.s32.totalorder %s179, %s181
    %p188 = scmp.eq.s32.totalorder %s24, 1
    %p189 = por %p187, %p188
    %p190 = scmp.ne.s32.totalorder %s181, %s182
    %p191 = scmp.eq.s32.totalorder %s24, 0
    %p192 = por %p190, %p191
    %p193 = scmp.ne.s32.totalorder %s181, %s182
    %p194 = scmp.eq.s32.totalorder %s25, 1
    %p195 = por %p193, %p194
    %p197 = scmp.ne.s32.totalorder %s182, %s196
    %p198 = scmp.eq.s32.totalorder %s25, 0
    %p199 = por %p197, %p198
    %s201 = sadd.s32 %s200, 1
    %p204 = scmp.eq.s32.totalorder %s19, 1
    %p205 = scmp.ne.s32.totalorder %s200, %s202
    %p206 = scmp.eq.s32.totalorder %s19, 0
    %p207 = por %p205, %p206
    %p208 = scmp.ne.s32.totalorder %s200, %s202
    %p209 = scmp.eq.s32.totalorder %s24, 1
    %p210 = por %p208, %p209
    %p211 = scmp.ne.s32.totalorder %s202, %s203
    %p212 = scmp.eq.s32.totalorder %s24, 0
    %p213 = por %p211, %p212
    %p214 = scmp.ne.s32.totalorder %s202, %s203
    %p215 = scmp.eq.s32.totalorder %s25, 1
    %p216 = por %p214, %p215
    %p218 = scmp.ne.s32.totalorder %s203, %s217
    %p219 = scmp.eq.s32.totalorder %s25, 0
    %p220 = por %p218, %p219
    %s222 = sadd.s32 %s221, 1
    %p225 = scmp.eq.s32.totalorder %s19, 1
    %p226 = scmp.ne.s32.totalorder %s221, %s223
    %p227 = scmp.eq.s32.totalorder %s19, 0
    %p228 = por %p226, %p227
    %p229 = scmp.ne.s32.totalorder %s221, %s223
    %p230 = scmp.eq.s32.totalorder %s24, 1
    %p231 = por %p229, %p230
    %p232 = scmp.ne.s32.totalorder %s223, %s224
    %p233 = scmp.eq.s32.totalorder %s24, 0
    %p234 = por %p232, %p233
    %p235 = scmp.ne.s32.totalorder %s223, %s224
    %p236 = scmp.eq.s32.totalorder %s25, 1
    %p237 = por %p235, %p236
    %p239 = scmp.ne.s32.totalorder %s224, %s238
    %p240 = scmp.eq.s32.totalorder %s25, 0
    %p241 = por %p239, %p240
    %s243 = sadd.s32 %s242, 1
    %p246 = scmp.eq.s32.totalorder %s19, 1
    %p247 = scmp.ne.s32.totalorder %s242, %s244
    %p248 = scmp.eq.s32.totalorder %s19, 0
    %p249 = por %p247, %p248
    %p250 = scmp.ne.s32.totalorder %s242, %s244
    %p251 = scmp.eq.s32.totalorder %s24, 1
    %p252 = por %p250, %p251
    %p253 = scmp.ne.s32.totalorder %s244, %s245
    %p254 = scmp.eq.s32.totalorder %s24, 0
    %p255 = por %p253, %p254
    %p256 = scmp.ne.s32.totalorder %s244, %s245
    %p257 = scmp.eq.s32.totalorder %s25, 1
    %p258 = por %p256, %p257
    %p260 = scmp.ne.s32.totalorder %s245, %s259
    %p261 = scmp.eq.s32.totalorder %s25, 0
    %p262 = por %p260, %p261
    %s264 = sadd.s32 %s263, 1
    %p267 = scmp.eq.s32.totalorder %s19, 1
    %p268 = scmp.ne.s32.totalorder %s263, %s265
    %p269 = scmp.eq.s32.totalorder %s19, 0
    %p270 = por %p268, %p269
    %p271 = scmp.ne.s32.totalorder %s263, %s265
    %p272 = scmp.eq.s32.totalorder %s24, 1
    %p273 = por %p271, %p272
    %p274 = scmp.ne.s32.totalorder %s265, %s266
    %p275 = scmp.eq.s32.totalorder %s24, 0
    %p276 = por %p274, %p275
    %p277 = scmp.ne.s32.totalorder %s265, %s266
    %p278 = scmp.eq.s32.totalorder %s25, 1
    %p279 = por %p277, %p278
    %p281 = scmp.ne.s32.totalorder %s266, %s280
    %p282 = scmp.eq.s32.totalorder %s25, 0
    %p283 = por %p281, %p282
    %s285 = sadd.s32 %s284, 1
    %p288 = scmp.eq.s32.totalorder %s19, 1
    %p289 = scmp.ne.s32.totalorder %s284, %s286
    %p290 = scmp.eq.s32.totalorder %s19, 0
    %p291 = por %p289, %p290
    %p292 = scmp.ne.s32.totalorder %s284, %s286
    %p293 = scmp.eq.s32.totalorder %s24, 1
    %p294 = por %p292, %p293
    %p295 = scmp.ne.s32.totalorder %s286, %s287
    %p296 = scmp.eq.s32.totalorder %s24, 0
    %p297 = por %p295, %p296
    %p298 = scmp.ne.s32.totalorder %s286, %s287
    %p299 = scmp.eq.s32.totalorder %s25, 1
    %p300 = por %p298, %p299
    %p302 = scmp.ne.s32.totalorder %s287, %s301
    %p303 = scmp.eq.s32.totalorder %s25, 0
    %p304 = por %p302, %p303
    %s305 = ssub.s32 %s19, %s26
    %p306 = scmp.eq.s32.totalorder %s305, 0
    %s308 = sadd.s32 %s307, 1
    %s309 = scalar_select %p306, %s307, %s308
    %p312 = pneg %p306
    %p313 = scmp.eq.s32.totalorder %s19, 1
    %p314 = por %p312, %p313
    %p315 = scmp.ne.s32.totalorder %s307, %s310
    %p316 = scmp.eq.s32.totalorder %s19, 0
    %p317 = por %p315, %p316
    %p318 = scmp.ne.s32.totalorder %s307, %s310
    %p319 = scmp.eq.s32.totalorder %s24, 1
    %p320 = por %p318, %p319
    %p321 = scmp.ne.s32.totalorder %s310, %s311
    %p322 = scmp.eq.s32.totalorder %s24, 0
    %p323 = por %p321, %p322
    %p324 = scmp.ne.s32.totalorder %s310, %s311
    %p325 = scmp.eq.s32.totalorder %s25, 1
    %p326 = por %p324, %p325
    %p328 = scmp.ne.s32.totalorder %s311, %s327
    %p329 = scmp.eq.s32.totalorder %s25, 0
    %p330 = por %p328, %p329
    %p331 = scmp.le.s32.totalorder 1, %s19
    %p332 = scmp.lt.s32.totalorder %s19, 3
    %p333 = pnand %p331, %p332
    %p334 = pneg %p333
    // Predicated region
    $region9: #{inverted_residual_forward.1} parent=5 // pred_check
      _
    $region10: #{inverted_residual_forward.1} parent=5 // pred_check_branch
      %336 = sbr.rel (%p333) target = $region12
    $region11: #{inverted_residual_forward.1} parent=5 // pred_region
      %s337 = ssub.s32 %s19, 1
      // Predicated region
      $region13: #{inverted_residual_forward.1} parent=11 // pred_check
        %p338 = pneg %p66
      $region14: #{inverted_residual_forward.1} parent=11 // pred_check_branch
        %340 = sbr.rel (%p338) target = $region16
      $region15: #{inverted_residual_forward.1} parent=11 // pred_region
        _
      $region16: #{inverted_residual_forward.1} parent=11 // pred_fallthru
        _
      // Predicated region
      $region17: #{inverted_residual_forward.1} parent=11 // pred_check
        %p341 = pneg %p87
      $region18: #{inverted_residual_forward.1} parent=11 // pred_check_branch
        %343 = sbr.rel (%p341) target = $region20
      $region19: #{inverted_residual_forward.1} parent=11 // pred_region
        _
      $region20: #{inverted_residual_forward.1} parent=11 // pred_fallthru
        _
      // Predicated region
      $region21: #{inverted_residual_forward.1} parent=11 // pred_check
        %p344 = pneg %p108
      $region22: #{inverted_residual_forward.1} parent=11 // pred_check_branch
        %346 = sbr.rel (%p344) target = $region24
      $region23: #{inverted_residual_forward.1} parent=11 // pred_region
        _
      $region24: #{inverted_residual_forward.1} parent=11 // pred_fallthru
        _
      // Predicated region
      $region25: #{inverted_residual_forward.1} parent=11 // pred_check
        %p347 = pneg %p129
      $region26: #{inverted_residual_forward.1} parent=11 // pred_check_branch
        %349 = sbr.rel (%p347) target = $region28
      $region27: #{inverted_residual_forward.1} parent=11 // pred_region
        _
      $region28: #{inverted_residual_forward.1} parent=11 // pred_fallthru
        _
      // Predicated region
      $region29: #{inverted_residual_forward.1} parent=11 // pred_check
        %p350 = pneg %p150
      $region30: #{inverted_residual_forward.1} parent=11 // pred_check_branch
        %352 = sbr.rel (%p350) target = $region32
      $region31: #{inverted_residual_forward.1} parent=11 // pred_region
        _
      $region32: #{inverted_residual_forward.1} parent=11 // pred_fallthru
        _
      // Predicated region
      $region33: #{inverted_residual_forward.1} parent=11 // pred_check
        %p353 = pneg %p171
      $region34: #{inverted_residual_forward.1} parent=11 // pred_check_branch
        %355 = sbr.rel (%p353) target = $region36
      $region35: #{inverted_residual_forward.1} parent=11 // pred_region
        _
      $region36: #{inverted_residual_forward.1} parent=11 // pred_fallthru
        _
      // Predicated region
      $region37: #{inverted_residual_forward.1} parent=11 // pred_check
        %p356 = pneg %p192
      $region38: #{inverted_residual_forward.1} parent=11 // pred_check_branch
        %358 = sbr.rel (%p356) target = $region40
      $region39: #{inverted_residual_forward.1} parent=11 // pred_region
        _
      $region40: #{inverted_residual_forward.1} parent=11 // pred_fallthru
        _
      // Predicated region
      $region41: #{inverted_residual_forward.1} parent=11 // pred_check
        %p359 = pneg %p213
      $region42: #{inverted_residual_forward.1} parent=11 // pred_check_branch
        %361 = sbr.rel (%p359) target = $region44
      $region43: #{inverted_residual_forward.1} parent=11 // pred_region
        _
      $region44: #{inverted_residual_forward.1} parent=11 // pred_fallthru
        _
      // Predicated region
      $region45: #{inverted_residual_forward.1} parent=11 // pred_check
        %p362 = pneg %p234
      $region46: #{inverted_residual_forward.1} parent=11 // pred_check_branch
        %364 = sbr.rel (%p362) target = $region48
      $region47: #{inverted_residual_forward.1} parent=11 // pred_region
        _
      $region48: #{inverted_residual_forward.1} parent=11 // pred_fallthru
        _
      // Predicated region
      $region49: #{inverted_residual_forward.1} parent=11 // pred_check
        %p365 = pneg %p255
      $region50: #{inverted_residual_forward.1} parent=11 // pred_check_branch
        %367 = sbr.rel (%p365) target = $region52
      $region51: #{inverted_residual_forward.1} parent=11 // pred_region
        _
      $region52: #{inverted_residual_forward.1} parent=11 // pred_fallthru
        _
      // Predicated region
      $region53: #{inverted_residual_forward.1} parent=11 // pred_check
        %p368 = pneg %p276
      $region54: #{inverted_residual_forward.1} parent=11 // pred_check_branch
        %370 = sbr.rel (%p368) target = $region56
      $region55: #{inverted_residual_forward.1} parent=11 // pred_region
        _
      $region56: #{inverted_residual_forward.1} parent=11 // pred_fallthru
        _
      // Predicated region
      $region57: #{inverted_residual_forward.1} parent=11 // pred_check
        %p371 = pneg %p297
      $region58: #{inverted_residual_forward.1} parent=11 // pred_check_branch
        %373 = sbr.rel (%p371) target = $region60
      $region59: #{inverted_residual_forward.1} parent=11 // pred_region
        _
      $region60: #{inverted_residual_forward.1} parent=11 // pred_fallthru
        _
    $region12: #{inverted_residual_forward.1} parent=5 // pred_fallthru
      _
    %p374 = scmp.lt.s32.totalorder %s19, 2
    // Predicated region
    $region61: #{inverted_residual_forward.1} parent=5 // pred_check
      %p375 = pneg %p374
    $region62: #{inverted_residual_forward.1} parent=5 // pred_check_branch
      %377 = sbr.rel (%p375) target = $region64
    $region63: #{inverted_residual_forward.1} parent=5 // pred_region
      // Predicated region
      $region65: #{inverted_residual_forward.1} parent=63 // pred_check
        %p378 = pneg %p39
      $region66: #{inverted_residual_forward.1} parent=63 // pred_check_branch
        %380 = sbr.rel (%p378) target = $region68
      $region67: #{inverted_residual_forward.1} parent=63 // pred_region
        %p381 = scmp.lt.s32.totalorder %s19, 1
        %s382 = scalar_select %p381, %s19, 1
        %s383 = smul.addr %s382, 32
        %s384 = smul.addr %s383, 8
        %s385 = scalar_lea.vmem %s0, %s384
      $region68: #{inverted_residual_forward.1} parent=63 // pred_fallthru
        _
    $region64: #{inverted_residual_forward.1} parent=5 // pred_fallthru
      _
    %p386 = scmp.le.s32.totalorder 1, %s19
    %p387 = scmp.lt.s32.totalorder %s19, 3
    %p388 = pnand %p386, %p387
    %p389 = pneg %p388
    // Predicated region
    $region69: #{inverted_residual_forward.1} parent=5 // pred_check
      _
    $region70: #{inverted_residual_forward.1} parent=5 // pred_check_branch
      %391 = sbr.rel (%p388) target = $region72
    $region71: #{inverted_residual_forward.1} parent=5 // pred_region
      %s392 = ssub.s32 %s19, 1
      %p393 = scmp.lt.s32.totalorder %s24, 1
      %s394 = scalar_select %p393, %s24, 1
      %s395 = smul.addr %s394, 32
      %s396 = smul.addr %s395, 8
      %s397 = scalar_lea.vmem %s0, %s396
      %p398 = pneg %p45
      %p399 = pneg %p42
      %p400 = pneg %p66
      %p401 = pneg %p63
      %p402 = pneg %p87
      %p403 = pneg %p84
      %p404 = pneg %p108
      %p405 = pneg %p105
      %p406 = pneg %p129
      %p407 = pneg %p126
      %p408 = pneg %p150
      %p409 = pneg %p147
      %p410 = pneg %p171
      %p411 = pneg %p168
      %p412 = pneg %p192
      %p413 = pneg %p189
      %p414 = pneg %p213
      %p415 = pneg %p210
      %p416 = pneg %p234
      %p417 = pneg %p231
      %p418 = pneg %p255
      %p419 = pneg %p252
      %p420 = pneg %p276
      %p421 = pneg %p273
      %p422 = pneg %p297
      %p423 = pneg %p294
      %p424 = pneg %p323
      %p425 = pneg %p320
      %p426 = scmp.lt.s32.totalorder %s24, 1
      %s427 = scalar_select %p426, %s24, 1
      %s428 = smul.addr %s427, 32
      %s429 = smul.addr %s428, 8
      %s430 = scalar_lea.vmem %s13, %s429
      %p431 = scmp.lt.s32.totalorder %s24, 1
      %s432 = scalar_select %p431, %s24, 1
      %s433 = smul.addr %s432, 32
      %s434 = smul.addr %s433, 8
      %s435 = scalar_lea.vmem %s0, %s434
      %p436 = scmp.lt.s32.totalorder %s24, 1
      %s437 = scalar_select %p436, %s24, 1
      %s438 = smul.addr %s437, 32
      %s439 = smul.addr %s438, 8
      %s440 = scalar_lea.vmem %s13, %s439
      %v441 = vld [vmem:[%s435] sm:$0xff]
      %v442 = vld [vmem:[%s435 + $0x8] sm:$0xff]
      %v443 = vld [vmem:[%s435 + $0x10] sm:$0xff]
      %v444 = vld [vmem:[%s435 + $0x18] sm:$0xff]
      %v445 = vld [vmem:[%s435 + $0x20] sm:$0xff]
      %v446 = vld [vmem:[%s435 + $0x28] sm:$0xff]
      %v447 = vld [vmem:[%s435 + $0x30] sm:$0xff]
      %v448 = vld [vmem:[%s435 + $0x38] sm:$0xff]
      %v449 = vld [vmem:[%s435 + $0x40] sm:$0xff]
      %v450 = vld [vmem:[%s435 + $0x48] sm:$0xff]
      %v451 = vld [vmem:[%s435 + $0x50] sm:$0xff]
      %v452 = vld [vmem:[%s435 + $0x58] sm:$0xff]
      %v453 = vld [vmem:[%s435 + $0x60] sm:$0xff]
      %v454 = vld [vmem:[%s435 + $0x68] sm:$0xff]
      %v455 = vld [vmem:[%s435 + $0x70] sm:$0xff]
      %v456 = vld [vmem:[%s435 + $0x78] sm:$0xff]
      %v457 = vld [vmem:[%s435 + $0x80] sm:$0xff]
      %v458 = vld [vmem:[%s435 + $0x88] sm:$0xff]
      %v459 = vld [vmem:[%s435 + $0x90] sm:$0xff]
      %v460 = vld [vmem:[%s435 + $0x98] sm:$0xff]
      %v461 = vld [vmem:[%s435 + $0xa0] sm:$0xff]
      %v462 = vld [vmem:[%s435 + $0xa8] sm:$0xff]
      %v463 = vld [vmem:[%s435 + $0xb0] sm:$0xff]
      %v464 = vld [vmem:[%s435 + $0xb8] sm:$0xff]
      %v465 = vld [vmem:[%s435 + $0xc0] sm:$0xff]
      %v466 = vld [vmem:[%s435 + $0xc8] sm:$0xff]
      %v467 = vld [vmem:[%s435 + $0xd0] sm:$0xff]
      %v468 = vld [vmem:[%s435 + $0xd8] sm:$0xff]
      %v469 = vld [vmem:[%s435 + $0xe0] sm:$0xff]
      %v470 = vld [vmem:[%s435 + $0xe8] sm:$0xff]
      %v471 = vld [vmem:[%s435 + $0xf0] sm:$0xff]
      %v472 = vld [vmem:[%s435 + $0xf8] sm:$0xff]
      %v473 = vld [vmem:[%s1] sm:$0xff]
      %v474 = vld [vmem:[%s2] sm:$0x1]
      %v476 = vperm.slane %v474, 0
      %vm478 = vcmask 64512
      %v480 = vsel %vm478, %v441, 0
      %v483 = vsel %vm478, %v442, 0
      %v486 = vsel %vm478, %v443, 0
      %v489 = vsel %vm478, %v444, 0
      %v492 = vsel %vm478, %v445, 0
      %v495 = vsel %vm478, %v446, 0
      %v498 = vsel %vm478, %v447, 0
      %v501 = vsel %vm478, %v448, 0
      %v504 = vsel %vm478, %v449, 0
      %v507 = vsel %vm478, %v450, 0
      %v510 = vsel %vm478, %v451, 0
      %v513 = vsel %vm478, %v452, 0
      %v516 = vsel %vm478, %v453, 0
      %v519 = vsel %vm478, %v454, 0
      %v522 = vsel %vm478, %v455, 0
      %v525 = vsel %vm478, %v456, 0
      %v528 = vsel %vm478, %v457, 0
      %v531 = vsel %vm478, %v458, 0
      %v534 = vsel %vm478, %v459, 0
      %v537 = vsel %vm478, %v460, 0
      %v540 = vsel %vm478, %v461, 0
      %v543 = vsel %vm478, %v462, 0
      %v546 = vsel %vm478, %v463, 0
      %v549 = vsel %vm478, %v464, 0
      %v552 = vsel %vm478, %v465, 0
      %v555 = vsel %vm478, %v466, 0
      %v558 = vsel %vm478, %v467, 0
      %v561 = vsel %vm478, %v468, 0
      %v564 = vsel %vm478, %v469, 0
      %v567 = vsel %vm478, %v470, 0
      %v570 = vsel %vm478, %v471, 0
      %v573 = vsel %vm478, %v472, 0
      %575 = vmatpush.msra.mxu0 0.0
      %576 = vmatpush.msra.mxu0 0.0
      %577 = vmatpush.msra.mxu0 0.0
      %578 = vmatpush.msra.mxu0 0.0
      %579 = vmatpush.msra.mxu0 0.0
      %580 = vmatpush.msra.mxu0 0.0
      %581 = vmatpush.msra.mxu0 0.0
      %582 = vmatpush.msra.mxu0 0.0
      %583 = vmatpush.msra.mxu0 0.0
      %584 = vmatpush.msra.mxu0 0.0
      %585 = vmatpush.msra.mxu0 0.0
      %586 = vmatpush.msra.mxu0 0.0
      %587 = vmatpush.msra.mxu0 0.0
      %588 = vmatpush.msra.mxu0 0.0
      %589 = vmatpush.msra.mxu0 0.0
      %590 = vmatpush.msra.mxu0 %v473
      %591 = vmatmul.f32.gmra.mxu0 %v480
      %v592 = vpop.f32.mrf.mxu0
      %v593 = vadd.f32 %v476, %v592
      %594 = vmatmul.f32.gmra.mxu0 %v483
      %v595 = vpop.f32.mrf.mxu0
      %v596 = vadd.f32 %v476, %v595
      %597 = vmatmul.f32.gmra.mxu0 %v486
      %v598 = vpop.f32.mrf.mxu0
      %v599 = vadd.f32 %v476, %v598
      %600 = vmatmul.f32.gmra.mxu0 %v489
      %v601 = vpop.f32.mrf.mxu0
      %v602 = vadd.f32 %v476, %v601
      %603 = vmatmul.f32.gmra.mxu0 %v492
      %v604 = vpop.f32.mrf.mxu0
      %v605 = vadd.f32 %v476, %v604
      %606 = vmatmul.f32.gmra.mxu0 %v495
      %v607 = vpop.f32.mrf.mxu0
      %v608 = vadd.f32 %v476, %v607
      %609 = vmatmul.f32.gmra.mxu0 %v498
      %v610 = vpop.f32.mrf.mxu0
      %v611 = vadd.f32 %v476, %v610
      %612 = vmatmul.f32.gmra.mxu0 %v501
      %v613 = vpop.f32.mrf.mxu0
      %v614 = vadd.f32 %v476, %v613
      %615 = vmatmul.f32.gmra.mxu0 %v504
      %v616 = vpop.f32.mrf.mxu0
      %v617 = vadd.f32 %v476, %v616
      %618 = vmatmul.f32.gmra.mxu0 %v507
      %v619 = vpop.f32.mrf.mxu0
      %v620 = vadd.f32 %v476, %v619
      %621 = vmatmul.f32.gmra.mxu0 %v510
      %v622 = vpop.f32.mrf.mxu0
      %v623 = vadd.f32 %v476, %v622
      %624 = vmatmul.f32.gmra.mxu0 %v513
      %v625 = vpop.f32.mrf.mxu0
      %v626 = vadd.f32 %v476, %v625
      %627 = vmatmul.f32.gmra.mxu0 %v516
      %v628 = vpop.f32.mrf.mxu0
      %v629 = vadd.f32 %v476, %v628
      %630 = vmatmul.f32.gmra.mxu0 %v519
      %v631 = vpop.f32.mrf.mxu0
      %v632 = vadd.f32 %v476, %v631
      %633 = vmatmul.f32.gmra.mxu0 %v522
      %v634 = vpop.f32.mrf.mxu0
      %v635 = vadd.f32 %v476, %v634
      %636 = vmatmul.f32.gmra.mxu0 %v525
      %v637 = vpop.f32.mrf.mxu0
      %v638 = vadd.f32 %v476, %v637
      %639 = vmatmul.f32.gmra.mxu0 %v528
      %v640 = vpop.f32.mrf.mxu0
      %v641 = vadd.f32 %v476, %v640
      %642 = vmatmul.f32.gmra.mxu0 %v531
      %v643 = vpop.f32.mrf.mxu0
      %v644 = vadd.f32 %v476, %v643
      %645 = vmatmul.f32.gmra.mxu0 %v534
      %v646 = vpop.f32.mrf.mxu0
      %v647 = vadd.f32 %v476, %v646
      %648 = vmatmul.f32.gmra.mxu0 %v537
      %v649 = vpop.f32.mrf.mxu0
      %v650 = vadd.f32 %v476, %v649
      %651 = vmatmul.f32.gmra.mxu0 %v540
      %v652 = vpop.f32.mrf.mxu0
      %v653 = vadd.f32 %v476, %v652
      %654 = vmatmul.f32.gmra.mxu0 %v543
      %v655 = vpop.f32.mrf.mxu0
      %v656 = vadd.f32 %v476, %v655
      %657 = vmatmul.f32.gmra.mxu0 %v546
      %v658 = vpop.f32.mrf.mxu0
      %v659 = vadd.f32 %v476, %v658
      %660 = vmatmul.f32.gmra.mxu0 %v549
      %v661 = vpop.f32.mrf.mxu0
      %v662 = vadd.f32 %v476, %v661
      %663 = vmatmul.f32.gmra.mxu0 %v552
      %v664 = vpop.f32.mrf.mxu0
      %v665 = vadd.f32 %v476, %v664
      %666 = vmatmul.f32.gmra.mxu0 %v555
      %v667 = vpop.f32.mrf.mxu0
      %v668 = vadd.f32 %v476, %v667
      %669 = vmatmul.f32.gmra.mxu0 %v558
      %v670 = vpop.f32.mrf.mxu0
      %v671 = vadd.f32 %v476, %v670
      %672 = vmatmul.f32.gmra.mxu0 %v561
      %v673 = vpop.f32.mrf.mxu0
      %v674 = vadd.f32 %v476, %v673
      %675 = vmatmul.f32.gmra.mxu0 %v564
      %v676 = vpop.f32.mrf.mxu0
      %v677 = vadd.f32 %v476, %v676
      %678 = vmatmul.f32.gmra.mxu0 %v567
      %v679 = vpop.f32.mrf.mxu0
      %v680 = vadd.f32 %v476, %v679
      %681 = vmatmul.f32.gmra.mxu0 %v570
      %v682 = vpop.f32.mrf.mxu0
      %v683 = vadd.f32 %v476, %v682
      %684 = vmatmul.f32.gmra.mxu0 %v573
      %v685 = vpop.f32.mrf.mxu0
      %v686 = vadd.f32 %v476, %v685
      %687 = vdwg.mxu0
      %v688 = vmax.f32 %v593, 0.0
      %v689 = vmax.f32 %v596, 0.0
      %v690 = vmax.f32 %v599, 0.0
      %v691 = vmax.f32 %v602, 0.0
      %v692 = vmax.f32 %v605, 0.0
      %v693 = vmax.f32 %v608, 0.0
      %v694 = vmax.f32 %v611, 0.0
      %v695 = vmax.f32 %v614, 0.0
      %v696 = vmax.f32 %v617, 0.0
      %v697 = vmax.f32 %v620, 0.0
      %v698 = vmax.f32 %v623, 0.0
      %v699 = vmax.f32 %v626, 0.0
      %v700 = vmax.f32 %v629, 0.0
      %v701 = vmax.f32 %v632, 0.0
      %v702 = vmax.f32 %v635, 0.0
      %v703 = vmax.f32 %v638, 0.0
      %v704 = vmax.f32 %v641, 0.0
      %v705 = vmax.f32 %v644, 0.0
      %v706 = vmax.f32 %v647, 0.0
      %v707 = vmax.f32 %v650, 0.0
      %v708 = vmax.f32 %v653, 0.0
      %v709 = vmax.f32 %v656, 0.0
      %v710 = vmax.f32 %v659, 0.0
      %v711 = vmax.f32 %v662, 0.0
      %v712 = vmax.f32 %v665, 0.0
      %v713 = vmax.f32 %v668, 0.0
      %v714 = vmax.f32 %v671, 0.0
      %v715 = vmax.f32 %v674, 0.0
      %v716 = vmax.f32 %v677, 0.0
      %v717 = vmax.f32 %v680, 0.0
      %v718 = vmax.f32 %v683, 0.0
      %v719 = vmax.f32 %v686, 0.0
      %v720 = vmin.f32 %v688, 6.0
      %v721 = vmin.f32 %v689, 6.0
      %v722 = vmin.f32 %v690, 6.0
      %v723 = vmin.f32 %v691, 6.0
      %v724 = vmin.f32 %v692, 6.0
      %v725 = vmin.f32 %v693, 6.0
      %v726 = vmin.f32 %v694, 6.0
      %v727 = vmin.f32 %v695, 6.0
      %v728 = vmin.f32 %v696, 6.0
      %v729 = vmin.f32 %v697, 6.0
      %v730 = vmin.f32 %v698, 6.0
      %v731 = vmin.f32 %v699, 6.0
      %v732 = vmin.f32 %v700, 6.0
      %v733 = vmin.f32 %v701, 6.0
      %v734 = vmin.f32 %v702, 6.0
      %v735 = vmin.f32 %v703, 6.0
      %v736 = vmin.f32 %v704, 6.0
      %v737 = vmin.f32 %v705, 6.0
      %v738 = vmin.f32 %v706, 6.0
      %v739 = vmin.f32 %v707, 6.0
      %v740 = vmin.f32 %v708, 6.0
      %v741 = vmin.f32 %v709, 6.0
      %v742 = vmin.f32 %v710, 6.0
      %v743 = vmin.f32 %v711, 6.0
      %v744 = vmin.f32 %v712, 6.0
      %v745 = vmin.f32 %v713, 6.0
      %v746 = vmin.f32 %v714, 6.0
      %v747 = vmin.f32 %v715, 6.0
      %v748 = vmin.f32 %v716, 6.0
      %v749 = vmin.f32 %v717, 6.0
      %v750 = vmin.f32 %v718, 6.0
      %v751 = vmin.f32 %v719, 6.0
      %vm752 = vcmask 130048
      %753 = vst.msk [vmem:[#allocation2] sm:$0xff] %vm752, 0.0
      %754 = vst.msk [vmem:[#allocation2 + $0x8] sm:$0xff] %vm752, 0.0
      %755 = vst.msk [vmem:[#allocation2 + $0x10] sm:$0xff] %vm752, 0.0
      %756 = vst.msk [vmem:[#allocation2 + $0x18] sm:$0xff] %vm752, 0.0
      %s757 = scalar_lea.vmem [#allocation2], 544
      %758 = vst.msk [vmem:[%s757] sm:$0xff] %vm752, 0.0
      %759 = vst.msk [vmem:[%s757 + $0x8] sm:$0xff] %vm752, 0.0
      %760 = vst.msk [vmem:[%s757 + $0x10] sm:$0xff] %vm752, 0.0
      %761 = vst.msk [vmem:[%s757 + $0x18] sm:$0xff] %vm752, 0.0
      %s762 = scalar_lea.vmem [#allocation2], 32
      %vm763 = vcmask 122880
      %764 = vst.msk [vmem:[%s762 + $0x7] sm:$0x1] %vm763, 0.0
      %765 = vst.msk [vmem:[%s762 + $0x27] sm:$0x1] %vm763, 0.0
      %766 = vst.msk [vmem:[%s762 + $0x47] sm:$0x1] %vm763, 0.0
      %767 = vst.msk [vmem:[%s762 + $0x67] sm:$0x1] %vm763, 0.0
      %768 = vst.msk [vmem:[%s762 + $0x87] sm:$0x1] %vm763, 0.0
      %769 = vst.msk [vmem:[%s762 + $0xa7] sm:$0x1] %vm763, 0.0
      %770 = vst.msk [vmem:[%s762 + $0xc7] sm:$0x1] %vm763, 0.0
      %771 = vst.msk [vmem:[%s762 + $0xe7] sm:$0x1] %vm763, 0.0
      %772 = vst.msk [vmem:[%s762 + $0x107] sm:$0x1] %vm763, 0.0
      %773 = vst.msk [vmem:[%s762 + $0x127] sm:$0x1] %vm763, 0.0
      %774 = vst.msk [vmem:[%s762 + $0x147] sm:$0x1] %vm763, 0.0
      %775 = vst.msk [vmem:[%s762 + $0x167] sm:$0x1] %vm763, 0.0
      %776 = vst.msk [vmem:[%s762 + $0x187] sm:$0x1] %vm763, 0.0
      %777 = vst.msk [vmem:[%s762 + $0x1a7] sm:$0x1] %vm763, 0.0
      %778 = vst.msk [vmem:[%s762 + $0x1c7] sm:$0x1] %vm763, 0.0
      %779 = vst.msk [vmem:[%s762 + $0x1e7] sm:$0x1] %vm763, 0.0
      %780 = vst.msk [vmem:[%s762 + $0x18] sm:$0x1] %vm763, 0.0
      %781 = vst.msk [vmem:[%s762 + $0x38] sm:$0x1] %vm763, 0.0
      %782 = vst.msk [vmem:[%s762 + $0x58] sm:$0x1] %vm763, 0.0
      %783 = vst.msk [vmem:[%s762 + $0x78] sm:$0x1] %vm763, 0.0
      %784 = vst.msk [vmem:[%s762 + $0x98] sm:$0x1] %vm763, 0.0
      %785 = vst.msk [vmem:[%s762 + $0xb8] sm:$0x1] %vm763, 0.0
      %786 = vst.msk [vmem:[%s762 + $0xd8] sm:$0x1] %vm763, 0.0
      %787 = vst.msk [vmem:[%s762 + $0xf8] sm:$0x1] %vm763, 0.0
      %788 = vst.msk [vmem:[%s762 + $0x118] sm:$0x1] %vm763, 0.0
      %789 = vst.msk [vmem:[%s762 + $0x138] sm:$0x1] %vm763, 0.0
      %790 = vst.msk [vmem:[%s762 + $0x158] sm:$0x1] %vm763, 0.0
      %791 = vst.msk [vmem:[%s762 + $0x178] sm:$0x1] %vm763, 0.0
      %792 = vst.msk [vmem:[%s762 + $0x198] sm:$0x1] %vm763, 0.0
      %793 = vst.msk [vmem:[%s762 + $0x1b8] sm:$0x1] %vm763, 0.0
      %794 = vst.msk [vmem:[%s762 + $0x1d8] sm:$0x1] %vm763, 0.0
      %795 = vst.msk [vmem:[%s762 + $0x1f8] sm:$0x1] %vm763, 0.0
      %796 = vst.msk [vmem:[%s762 + $0x8] sm:$0xff] %vm752, %v720
      %797 = vst.msk [vmem:[%s762 + $0x10] sm:$0xff] %vm752, %v721
      %798 = vst.msk [vmem:[%s762 + $0x28] sm:$0xff] %vm752, %v722
      %799 = vst.msk [vmem:[%s762 + $0x30] sm:$0xff] %vm752, %v723
      %800 = vst.msk [vmem:[%s762 + $0x48] sm:$0xff] %vm752, %v724
      %801 = vst.msk [vmem:[%s762 + $0x50] sm:$0xff] %vm752, %v725
      %802 = vst.msk [vmem:[%s762 + $0x68] sm:$0xff] %vm752, %v726
      %803 = vst.msk [vmem:[%s762 + $0x70] sm:$0xff] %vm752, %v727
      %804 = vst.msk [vmem:[%s762 + $0x88] sm:$0xff] %vm752, %v728
      %805 = vst.msk [vmem:[%s762 + $0x90] sm:$0xff] %vm752, %v729
      %806 = vst.msk [vmem:[%s762 + $0xa8] sm:$0xff] %vm752, %v730
      %807 = vst.msk [vmem:[%s762 + $0xb0] sm:$0xff] %vm752, %v731
      %808 = vst.msk [vmem:[%s762 + $0xc8] sm:$0xff] %vm752, %v732
      %809 = vst.msk [vmem:[%s762 + $0xd0] sm:$0xff] %vm752, %v733
      %810 = vst.msk [vmem:[%s762 + $0xe8] sm:$0xff] %vm752, %v734
      %811 = vst.msk [vmem:[%s762 + $0xf0] sm:$0xff] %vm752, %v735
      %812 = vst.msk [vmem:[%s762 + $0x108] sm:$0xff] %vm752, %v736
      %813 = vst.msk [vmem:[%s762 + $0x110] sm:$0xff] %vm752, %v737
      %814 = vst.msk [vmem:[%s762 + $0x128] sm:$0xff] %vm752, %v738
      %815 = vst.msk [vmem:[%s762 + $0x130] sm:$0xff] %vm752, %v739
      %816 = vst.msk [vmem:[%s762 + $0x148] sm:$0xff] %vm752, %v740
      %817 = vst.msk [vmem:[%s762 + $0x150] sm:$0xff] %vm752, %v741
      %818 = vst.msk [vmem:[%s762 + $0x168] sm:$0xff] %vm752, %v742
      %819 = vst.msk [vmem:[%s762 + $0x170] sm:$0xff] %vm752, %v743
      %820 = vst.msk [vmem:[%s762 + $0x188] sm:$0xff] %vm752, %v744
      %821 = vst.msk [vmem:[%s762 + $0x190] sm:$0xff] %vm752, %v745
      %822 = vst.msk [vmem:[%s762 + $0x1a8] sm:$0xff] %vm752, %v746
      %823 = vst.msk [vmem:[%s762 + $0x1b0] sm:$0xff] %vm752, %v747
      %824 = vst.msk [vmem:[%s762 + $0x1c8] sm:$0xff] %vm752, %v748
      %825 = vst.msk [vmem:[%s762 + $0x1d0] sm:$0xff] %vm752, %v749
      %826 = vst.msk [vmem:[%s762 + $0x1e8] sm:$0xff] %vm752, %v750
      %827 = vst.msk [vmem:[%s762 + $0x1f0] sm:$0xff] %vm752, %v751
      %v828 = vld [vmem:[#allocation2 + $0x7] sm:$0xff]
      %v829 = vld [vmem:[#allocation2 + $0xf] sm:$0xff]
      %v830 = vld [vmem:[#allocation2 + $0x27] sm:$0xff]
      %v831 = vld [vmem:[#allocation2 + $0x2f] sm:$0xff]
      %v832 = vld [vmem:[#allocation2 + $0x47] sm:$0xff]
      %v833 = vld [vmem:[#allocation2 + $0x4f] sm:$0xff]
      %v834 = vld [vmem:[#allocation2 + $0x67] sm:$0xff]
      %v835 = vld [vmem:[#allocation2 + $0x6f] sm:$0xff]
      %v836 = vld [vmem:[#allocation2 + $0x87] sm:$0xff]
      %v837 = vld [vmem:[#allocation2 + $0x8f] sm:$0xff]
      %v838 = vld [vmem:[#allocation2 + $0xa7] sm:$0xff]
      %v839 = vld [vmem:[#allocation2 + $0xaf] sm:$0xff]
      %v840 = vld [vmem:[#allocation2 + $0xc7] sm:$0xff]
      %v841 = vld [vmem:[#allocation2 + $0xcf] sm:$0xff]
      %v842 = vld [vmem:[#allocation2 + $0xe7] sm:$0xff]
      %v843 = vld [vmem:[#allocation2 + $0xef] sm:$0xff]
      %v844 = vld [vmem:[#allocation2 + $0x107] sm:$0xff]
      %v845 = vld [vmem:[#allocation2 + $0x10f] sm:$0xff]
      %v846 = vld [vmem:[#allocation2 + $0x127] sm:$0xff]
      %v847 = vld [vmem:[#allocation2 + $0x12f] sm:$0xff]
      %v848 = vld [vmem:[#allocation2 + $0x147] sm:$0xff]
      %v849 = vld [vmem:[#allocation2 + $0x14f] sm:$0xff]
      %v850 = vld [vmem:[#allocation2 + $0x167] sm:$0xff]
      %v851 = vld [vmem:[#allocation2 + $0x16f] sm:$0xff]
      %v852 = vld [vmem:[#allocation2 + $0x187] sm:$0xff]
      %v853 = vld [vmem:[#allocation2 + $0x18f] sm:$0xff]
      %v854 = vld [vmem:[#allocation2 + $0x1a7] sm:$0xff]
      %v855 = vld [vmem:[#allocation2 + $0x1af] sm:$0xff]
      %v856 = vld [vmem:[#allocation2 + $0x1c7] sm:$0xff]
      %v857 = vld [vmem:[#allocation2 + $0x1cf] sm:$0xff]
      %v858 = vld [vmem:[#allocation2 + $0x1e7] sm:$0xff]
      %v859 = vld [vmem:[#allocation2 + $0x1ef] sm:$0xff]
      %v860 = vld [vmem:[%s3] sm:$0x1]
      %v861 = vperm.slane %v860, 0
      %v862 = vmul.f32 %v828, %v861
      %v863 = vmul.f32 %v829, %v861
      %v864 = vmul.f32 %v830, %v861
      %v865 = vmul.f32 %v831, %v861
      %v866 = vmul.f32 %v832, %v861
      %v867 = vmul.f32 %v833, %v861
      %v868 = vmul.f32 %v834, %v861
      %v869 = vmul.f32 %v835, %v861
      %v870 = vmul.f32 %v836, %v861
      %v871 = vmul.f32 %v837, %v861
      %v872 = vmul.f32 %v838, %v861
      %v873 = vmul.f32 %v839, %v861
      %v874 = vmul.f32 %v840, %v861
      %v875 = vmul.f32 %v841, %v861
      %v876 = vmul.f32 %v842, %v861
      %v877 = vmul.f32 %v843, %v861
      %v878 = vmul.f32 %v844, %v861
      %v879 = vmul.f32 %v845, %v861
      %v880 = vmul.f32 %v846, %v861
      %v881 = vmul.f32 %v847, %v861
      %v882 = vmul.f32 %v848, %v861
      %v883 = vmul.f32 %v849, %v861
      %v884 = vmul.f32 %v850, %v861
      %v885 = vmul.f32 %v851, %v861
      %v886 = vmul.f32 %v852, %v861
      %v887 = vmul.f32 %v853, %v861
      %v888 = vmul.f32 %v854, %v861
      %v889 = vmul.f32 %v855, %v861
      %v890 = vmul.f32 %v856, %v861
      %v891 = vmul.f32 %v857, %v861
      %v892 = vmul.f32 %v858, %v861
      %v893 = vmul.f32 %v859, %v861
      %v894 = vadd.f32 %v862, 0.0
      %v895 = vadd.f32 %v863, 0.0
      %v896 = vadd.f32 %v864, 0.0
      %v897 = vadd.f32 %v865, 0.0
      %v898 = vadd.f32 %v866, 0.0
      %v899 = vadd.f32 %v867, 0.0
      %v900 = vadd.f32 %v868, 0.0
      %v901 = vadd.f32 %v869, 0.0
      %v902 = vadd.f32 %v870, 0.0
      %v903 = vadd.f32 %v871, 0.0
      %v904 = vadd.f32 %v872, 0.0
      %v905 = vadd.f32 %v873, 0.0
      %v906 = vadd.f32 %v874, 0.0
      %v907 = vadd.f32 %v875, 0.0
      %v908 = vadd.f32 %v876, 0.0
      %v909 = vadd.f32 %v877, 0.0
      %v910 = vadd.f32 %v878, 0.0
      %v911 = vadd.f32 %v879, 0.0
      %v912 = vadd.f32 %v880, 0.0
      %v913 = vadd.f32 %v881, 0.0
      %v914 = vadd.f32 %v882, 0.0
      %v915 = vadd.f32 %v883, 0.0
      %v916 = vadd.f32 %v884, 0.0
      %v917 = vadd.f32 %v885, 0.0
      %v918 = vadd.f32 %v886, 0.0
      %v919 = vadd.f32 %v887, 0.0
      %v920 = vadd.f32 %v888, 0.0
      %v921 = vadd.f32 %v889, 0.0
      %v922 = vadd.f32 %v890, 0.0
      %v923 = vadd.f32 %v891, 0.0
      %v924 = vadd.f32 %v892, 0.0
      %v925 = vadd.f32 %v893, 0.0
      %v926 = vld [vmem:[#allocation2 + $0x8] sm:$0xff]
      %v927 = vld [vmem:[#allocation2 + $0x10] sm:$0xff]
      %v928 = vld [vmem:[#allocation2 + $0x28] sm:$0xff]
      %v929 = vld [vmem:[#allocation2 + $0x30] sm:$0xff]
      %v930 = vld [vmem:[#allocation2 + $0x48] sm:$0xff]
      %v931 = vld [vmem:[#allocation2 + $0x50] sm:$0xff]
      %v932 = vld [vmem:[#allocation2 + $0x68] sm:$0xff]
      %v933 = vld [vmem:[#allocation2 + $0x70] sm:$0xff]
      %v934 = vld [vmem:[#allocation2 + $0x88] sm:$0xff]
      %v935 = vld [vmem:[#allocation2 + $0x90] sm:$0xff]
      %v936 = vld [vmem:[#allocation2 + $0xa8] sm:$0xff]
      %v937 = vld [vmem:[#allocation2 + $0xb0] sm:$0xff]
      %v938 = vld [vmem:[#allocation2 + $0xc8] sm:$0xff]
      %v939 = vld [vmem:[#allocation2 + $0xd0] sm:$0xff]
      %v940 = vld [vmem:[#allocation2 + $0xe8] sm:$0xff]
      %v941 = vld [vmem:[#allocation2 + $0xf0] sm:$0xff]
      %v942 = vld [vmem:[#allocation2 + $0x108] sm:$0xff]
      %v943 = vld [vmem:[#allocation2 + $0x110] sm:$0xff]
      %v944 = vld [vmem:[#allocation2 + $0x128] sm:$0xff]
      %v945 = vld [vmem:[#allocation2 + $0x130] sm:$0xff]
      %v946 = vld [vmem:[#allocation2 + $0x148] sm:$0xff]
      %v947 = vld [vmem:[#allocation2 + $0x150] sm:$0xff]
      %v948 = vld [vmem:[#allocation2 + $0x168] sm:$0xff]
      %v949 = vld [vmem:[#allocation2 + $0x170] sm:$0xff]
      %v950 = vld [vmem:[#allocation2 + $0x188] sm:$0xff]
      %v951 = vld [vmem:[#allocation2 + $0x190] sm:$0xff]
      %v952 = vld [vmem:[#allocation2 + $0x1a8] sm:$0xff]
      %v953 = vld [vmem:[#allocation2 + $0x1b0] sm:$0xff]
      %v954 = vld [vmem:[#allocation2 + $0x1c8] sm:$0xff]
      %v955 = vld [vmem:[#allocation2 + $0x1d0] sm:$0xff]
      %v956 = vld [vmem:[#allocation2 + $0x1e8] sm:$0xff]
      %v957 = vld [vmem:[#allocation2 + $0x1f0] sm:$0xff]
      %v958 = vld [vmem:[%s3 + $0x1] sm:$0x1]
      %v959 = vperm.slane %v958, 0
      %v960 = vmul.f32 %v926, %v959
      %v961 = vmul.f32 %v927, %v959
      %v962 = vmul.f32 %v928, %v959
      %v963 = vmul.f32 %v929, %v959
      %v964 = vmul.f32 %v930, %v959
      %v965 = vmul.f32 %v931, %v959
      %v966 = vmul.f32 %v932, %v959
      %v967 = vmul.f32 %v933, %v959
      %v968 = vmul.f32 %v934, %v959
      %v969 = vmul.f32 %v935, %v959
      %v970 = vmul.f32 %v936, %v959
      %v971 = vmul.f32 %v937, %v959
      %v972 = vmul.f32 %v938, %v959
      %v973 = vmul.f32 %v939, %v959
      %v974 = vmul.f32 %v940, %v959
      %v975 = vmul.f32 %v941, %v959
      %v976 = vmul.f32 %v942, %v959
      %v977 = vmul.f32 %v943, %v959
      %v978 = vmul.f32 %v944, %v959
      %v979 = vmul.f32 %v945, %v959
      %v980 = vmul.f32 %v946, %v959
      %v981 = vmul.f32 %v947, %v959
      %v982 = vmul.f32 %v948, %v959
      %v983 = vmul.f32 %v949, %v959
      %v984 = vmul.f32 %v950, %v959
      %v985 = vmul.f32 %v951, %v959
      %v986 = vmul.f32 %v952, %v959
      %v987 = vmul.f32 %v953, %v959
      %v988 = vmul.f32 %v954, %v959
      %v989 = vmul.f32 %v955, %v959
      %v990 = vmul.f32 %v956, %v959
      %v991 = vmul.f32 %v957, %v959
      %v992 = vadd.f32 %v894, %v960
      %v993 = vadd.f32 %v895, %v961
      %v994 = vadd.f32 %v896, %v962
      %v995 = vadd.f32 %v897, %v963
      %v996 = vadd.f32 %v898, %v964
      %v997 = vadd.f32 %v899, %v965
      %v998 = vadd.f32 %v900, %v966
      %v999 = vadd.f32 %v901, %v967
      %v1000 = vadd.f32 %v902, %v968
      %v1001 = vadd.f32 %v903, %v969
      %v1002 = vadd.f32 %v904, %v970
      %v1003 = vadd.f32 %v905, %v971
      %v1004 = vadd.f32 %v906, %v972
      %v1005 = vadd.f32 %v907, %v973
      %v1006 = vadd.f32 %v908, %v974
      %v1007 = vadd.f32 %v909, %v975
      %v1008 = vadd.f32 %v910, %v976
      %v1009 = vadd.f32 %v911, %v977
      %v1010 = vadd.f32 %v912, %v978
      %v1011 = vadd.f32 %v913, %v979
      %v1012 = vadd.f32 %v914, %v980
      %v1013 = vadd.f32 %v915, %v981
      %v1014 = vadd.f32 %v916, %v982
      %v1015 = vadd.f32 %v917, %v983
      %v1016 = vadd.f32 %v918, %v984
      %v1017 = vadd.f32 %v919, %v985
      %v1018 = vadd.f32 %v920, %v986
      %v1019 = vadd.f32 %v921, %v987
      %v1020 = vadd.f32 %v922, %v988
      %v1021 = vadd.f32 %v923, %v989
      %v1022 = vadd.f32 %v924, %v990
      %v1023 = vadd.f32 %v925, %v991
      %v1024 = vld [vmem:[#allocation2 + $0x9] sm:$0xff]
      %v1025 = vld [vmem:[#allocation2 + $0x11] sm:$0xff]
      %v1026 = vld [vmem:[#allocation2 + $0x29] sm:$0xff]
      %v1027 = vld [vmem:[#allocation2 + $0x31] sm:$0xff]
      %v1028 = vld [vmem:[#allocation2 + $0x49] sm:$0xff]
      %v1029 = vld [vmem:[#allocation2 + $0x51] sm:$0xff]
      %v1030 = vld [vmem:[#allocation2 + $0x69] sm:$0xff]
      %v1031 = vld [vmem:[#allocation2 + $0x71] sm:$0xff]
      %v1032 = vld [vmem:[#allocation2 + $0x89] sm:$0xff]
      %v1033 = vld [vmem:[#allocation2 + $0x91] sm:$0xff]
      %v1034 = vld [vmem:[#allocation2 + $0xa9] sm:$0xff]
      %v1035 = vld [vmem:[#allocation2 + $0xb1] sm:$0xff]
      %v1036 = vld [vmem:[#allocation2 + $0xc9] sm:$0xff]
      %v1037 = vld [vmem:[#allocation2 + $0xd1] sm:$0xff]
      %v1038 = vld [vmem:[#allocation2 + $0xe9] sm:$0xff]
      %v1039 = vld [vmem:[#allocation2 + $0xf1] sm:$0xff]
      %v1040 = vld [vmem:[#allocation2 + $0x109] sm:$0xff]
      %v1041 = vld [vmem:[#allocation2 + $0x111] sm:$0xff]
      %v1042 = vld [vmem:[#allocation2 + $0x129] sm:$0xff]
      %v1043 = vld [vmem:[#allocation2 + $0x131] sm:$0xff]
      %v1044 = vld [vmem:[#allocation2 + $0x149] sm:$0xff]
      %v1045 = vld [vmem:[#allocation2 + $0x151] sm:$0xff]
      %v1046 = vld [vmem:[#allocation2 + $0x169] sm:$0xff]
      %v1047 = vld [vmem:[#allocation2 + $0x171] sm:$0xff]
      %v1048 = vld [vmem:[#allocation2 + $0x189] sm:$0xff]
      %v1049 = vld [vmem:[#allocation2 + $0x191] sm:$0xff]
      %v1050 = vld [vmem:[#allocation2 + $0x1a9] sm:$0xff]
      %v1051 = vld [vmem:[#allocation2 + $0x1b1] sm:$0xff]
      %v1052 = vld [vmem:[#allocation2 + $0x1c9] sm:$0xff]
      %v1053 = vld [vmem:[#allocation2 + $0x1d1] sm:$0xff]
      %v1054 = vld [vmem:[#allocation2 + $0x1e9] sm:$0xff]
      %v1055 = vld [vmem:[#allocation2 + $0x1f1] sm:$0xff]
      %v1056 = vld [vmem:[%s3 + $0x2] sm:$0x1]
      %v1057 = vperm.slane %v1056, 0
      %v1058 = vmul.f32 %v1024, %v1057
      %v1059 = vmul.f32 %v1025, %v1057
      %v1060 = vmul.f32 %v1026, %v1057
      %v1061 = vmul.f32 %v1027, %v1057
      %v1062 = vmul.f32 %v1028, %v1057
      %v1063 = vmul.f32 %v1029, %v1057
      %v1064 = vmul.f32 %v1030, %v1057
      %v1065 = vmul.f32 %v1031, %v1057
      %v1066 = vmul.f32 %v1032, %v1057
      %v1067 = vmul.f32 %v1033, %v1057
      %v1068 = vmul.f32 %v1034, %v1057
      %v1069 = vmul.f32 %v1035, %v1057
      %v1070 = vmul.f32 %v1036, %v1057
      %v1071 = vmul.f32 %v1037, %v1057
      %v1072 = vmul.f32 %v1038, %v1057
      %v1073 = vmul.f32 %v1039, %v1057
      %v1074 = vmul.f32 %v1040, %v1057
      %v1075 = vmul.f32 %v1041, %v1057
      %v1076 = vmul.f32 %v1042, %v1057
      %v1077 = vmul.f32 %v1043, %v1057
      %v1078 = vmul.f32 %v1044, %v1057
      %v1079 = vmul.f32 %v1045, %v1057
      %v1080 = vmul.f32 %v1046, %v1057
      %v1081 = vmul.f32 %v1047, %v1057
      %v1082 = vmul.f32 %v1048, %v1057
      %v1083 = vmul.f32 %v1049, %v1057
      %v1084 = vmul.f32 %v1050, %v1057
      %v1085 = vmul.f32 %v1051, %v1057
      %v1086 = vmul.f32 %v1052, %v1057
      %v1087 = vmul.f32 %v1053, %v1057
      %v1088 = vmul.f32 %v1054, %v1057
      %v1089 = vmul.f32 %v1055, %v1057
      %v1090 = vadd.f32 %v992, %v1058
      %v1091 = vadd.f32 %v993, %v1059
      %v1092 = vadd.f32 %v994, %v1060
      %v1093 = vadd.f32 %v995, %v1061
      %v1094 = vadd.f32 %v996, %v1062
      %v1095 = vadd.f32 %v997, %v1063
      %v1096 = vadd.f32 %v998, %v1064
      %v1097 = vadd.f32 %v999, %v1065
      %v1098 = vadd.f32 %v1000, %v1066
      %v1099 = vadd.f32 %v1001, %v1067
      %v1100 = vadd.f32 %v1002, %v1068
      %v1101 = vadd.f32 %v1003, %v1069
      %v1102 = vadd.f32 %v1004, %v1070
      %v1103 = vadd.f32 %v1005, %v1071
      %v1104 = vadd.f32 %v1006, %v1072
      %v1105 = vadd.f32 %v1007, %v1073
      %v1106 = vadd.f32 %v1008, %v1074
      %v1107 = vadd.f32 %v1009, %v1075
      %v1108 = vadd.f32 %v1010, %v1076
      %v1109 = vadd.f32 %v1011, %v1077
      %v1110 = vadd.f32 %v1012, %v1078
      %v1111 = vadd.f32 %v1013, %v1079
      %v1112 = vadd.f32 %v1014, %v1080
      %v1113 = vadd.f32 %v1015, %v1081
      %v1114 = vadd.f32 %v1016, %v1082
      %v1115 = vadd.f32 %v1017, %v1083
      %v1116 = vadd.f32 %v1018, %v1084
      %v1117 = vadd.f32 %v1019, %v1085
      %v1118 = vadd.f32 %v1020, %v1086
      %v1119 = vadd.f32 %v1021, %v1087
      %v1120 = vadd.f32 %v1022, %v1088
      %v1121 = vadd.f32 %v1023, %v1089
      %v1122 = vld [vmem:[%s762 + $0x7] sm:$0xff]
      %v1123 = vld [vmem:[%s762 + $0xf] sm:$0xff]
      %v1124 = vld [vmem:[%s762 + $0x27] sm:$0xff]
      %v1125 = vld [vmem:[%s762 + $0x2f] sm:$0xff]
      %v1126 = vld [vmem:[%s762 + $0x47] sm:$0xff]
      %v1127 = vld [vmem:[%s762 + $0x4f] sm:$0xff]
      %v1128 = vld [vmem:[%s762 + $0x67] sm:$0xff]
      %v1129 = vld [vmem:[%s762 + $0x6f] sm:$0xff]
      %v1130 = vld [vmem:[%s762 + $0x87] sm:$0xff]
      %v1131 = vld [vmem:[%s762 + $0x8f] sm:$0xff]
      %v1132 = vld [vmem:[%s762 + $0xa7] sm:$0xff]
      %v1133 = vld [vmem:[%s762 + $0xaf] sm:$0xff]
      %v1134 = vld [vmem:[%s762 + $0xc7] sm:$0xff]
      %v1135 = vld [vmem:[%s762 + $0xcf] sm:$0xff]
      %v1136 = vld [vmem:[%s762 + $0xe7] sm:$0xff]
      %v1137 = vld [vmem:[%s762 + $0xef] sm:$0xff]
      %v1138 = vld [vmem:[%s762 + $0x107] sm:$0xff]
      %v1139 = vld [vmem:[%s762 + $0x10f] sm:$0xff]
      %v1140 = vld [vmem:[%s762 + $0x127] sm:$0xff]
      %v1141 = vld [vmem:[%s762 + $0x12f] sm:$0xff]
      %v1142 = vld [vmem:[%s762 + $0x147] sm:$0xff]
      %v1143 = vld [vmem:[%s762 + $0x14f] sm:$0xff]
      %v1144 = vld [vmem:[%s762 + $0x167] sm:$0xff]
      %v1145 = vld [vmem:[%s762 + $0x16f] sm:$0xff]
      %v1146 = vld [vmem:[%s762 + $0x187] sm:$0xff]
      %v1147 = vld [vmem:[%s762 + $0x18f] sm:$0xff]
      %v1148 = vld [vmem:[%s762 + $0x1a7] sm:$0xff]
      %v1149 = vld [vmem:[%s762 + $0x1af] sm:$0xff]
      %v1150 = vld [vmem:[%s762 + $0x1c7] sm:$0xff]
      %v1151 = vld [vmem:[%s762 + $0x1cf] sm:$0xff]
      %v1152 = vld [vmem:[%s762 + $0x1e7] sm:$0xff]
      %v1153 = vld [vmem:[%s762 + $0x1ef] sm:$0xff]
      %v1154 = vld [vmem:[%s3 + $0x3] sm:$0x1]
      %v1155 = vperm.slane %v1154, 0
      %v1156 = vmul.f32 %v1122, %v1155
      %v1157 = vmul.f32 %v1123, %v1155
      %v1158 = vmul.f32 %v1124, %v1155
      %v1159 = vmul.f32 %v1125, %v1155
      %v1160 = vmul.f32 %v1126, %v1155
      %v1161 = vmul.f32 %v1127, %v1155
      %v1162 = vmul.f32 %v1128, %v1155
      %v1163 = vmul.f32 %v1129, %v1155
      %v1164 = vmul.f32 %v1130, %v1155
      %v1165 = vmul.f32 %v1131, %v1155
      %v1166 = vmul.f32 %v1132, %v1155
      %v1167 = vmul.f32 %v1133, %v1155
      %v1168 = vmul.f32 %v1134, %v1155
      %v1169 = vmul.f32 %v1135, %v1155
      %v1170 = vmul.f32 %v1136, %v1155
      %v1171 = vmul.f32 %v1137, %v1155
      %v1172 = vmul.f32 %v1138, %v1155
      %v1173 = vmul.f32 %v1139, %v1155
      %v1174 = vmul.f32 %v1140, %v1155
      %v1175 = vmul.f32 %v1141, %v1155
      %v1176 = vmul.f32 %v1142, %v1155
      %v1177 = vmul.f32 %v1143, %v1155
      %v1178 = vmul.f32 %v1144, %v1155
      %v1179 = vmul.f32 %v1145, %v1155
      %v1180 = vmul.f32 %v1146, %v1155
      %v1181 = vmul.f32 %v1147, %v1155
      %v1182 = vmul.f32 %v1148, %v1155
      %v1183 = vmul.f32 %v1149, %v1155
      %v1184 = vmul.f32 %v1150, %v1155
      %v1185 = vmul.f32 %v1151, %v1155
      %v1186 = vmul.f32 %v1152, %v1155
      %v1187 = vmul.f32 %v1153, %v1155
      %v1188 = vadd.f32 %v1090, %v1156
      %v1189 = vadd.f32 %v1091, %v1157
      %v1190 = vadd.f32 %v1092, %v1158
      %v1191 = vadd.f32 %v1093, %v1159
      %v1192 = vadd.f32 %v1094, %v1160
      %v1193 = vadd.f32 %v1095, %v1161
      %v1194 = vadd.f32 %v1096, %v1162
      %v1195 = vadd.f32 %v1097, %v1163
      %v1196 = vadd.f32 %v1098, %v1164
      %v1197 = vadd.f32 %v1099, %v1165
      %v1198 = vadd.f32 %v1100, %v1166
      %v1199 = vadd.f32 %v1101, %v1167
      %v1200 = vadd.f32 %v1102, %v1168
      %v1201 = vadd.f32 %v1103, %v1169
      %v1202 = vadd.f32 %v1104, %v1170
      %v1203 = vadd.f32 %v1105, %v1171
      %v1204 = vadd.f32 %v1106, %v1172
      %v1205 = vadd.f32 %v1107, %v1173
      %v1206 = vadd.f32 %v1108, %v1174
      %v1207 = vadd.f32 %v1109, %v1175
      %v1208 = vadd.f32 %v1110, %v1176
      %v1209 = vadd.f32 %v1111, %v1177
      %v1210 = vadd.f32 %v1112, %v1178
      %v1211 = vadd.f32 %v1113, %v1179
      %v1212 = vadd.f32 %v1114, %v1180
      %v1213 = vadd.f32 %v1115, %v1181
      %v1214 = vadd.f32 %v1116, %v1182
      %v1215 = vadd.f32 %v1117, %v1183
      %v1216 = vadd.f32 %v1118, %v1184
      %v1217 = vadd.f32 %v1119, %v1185
      %v1218 = vadd.f32 %v1120, %v1186
      %v1219 = vadd.f32 %v1121, %v1187
      %v1220 = vld [vmem:[%s762 + $0x8] sm:$0xff]
      %v1221 = vld [vmem:[%s762 + $0x10] sm:$0xff]
      %v1222 = vld [vmem:[%s762 + $0x28] sm:$0xff]
      %v1223 = vld [vmem:[%s762 + $0x30] sm:$0xff]
      %v1224 = vld [vmem:[%s762 + $0x48] sm:$0xff]
      %v1225 = vld [vmem:[%s762 + $0x50] sm:$0xff]
      %v1226 = vld [vmem:[%s762 + $0x68] sm:$0xff]
      %v1227 = vld [vmem:[%s762 + $0x70] sm:$0xff]
      %v1228 = vld [vmem:[%s762 + $0x88] sm:$0xff]
      %v1229 = vld [vmem:[%s762 + $0x90] sm:$0xff]
      %v1230 = vld [vmem:[%s762 + $0xa8] sm:$0xff]
      %v1231 = vld [vmem:[%s762 + $0xb0] sm:$0xff]
      %v1232 = vld [vmem:[%s762 + $0xc8] sm:$0xff]
      %v1233 = vld [vmem:[%s762 + $0xd0] sm:$0xff]
      %v1234 = vld [vmem:[%s762 + $0xe8] sm:$0xff]
      %v1235 = vld [vmem:[%s762 + $0xf0] sm:$0xff]
      %v1236 = vld [vmem:[%s762 + $0x108] sm:$0xff]
      %v1237 = vld [vmem:[%s762 + $0x110] sm:$0xff]
      %v1238 = vld [vmem:[%s762 + $0x128] sm:$0xff]
      %v1239 = vld [vmem:[%s762 + $0x130] sm:$0xff]
      %v1240 = vld [vmem:[%s762 + $0x148] sm:$0xff]
      %v1241 = vld [vmem:[%s762 + $0x150] sm:$0xff]
      %v1242 = vld [vmem:[%s762 + $0x168] sm:$0xff]
      %v1243 = vld [vmem:[%s762 + $0x170] sm:$0xff]
      %v1244 = vld [vmem:[%s762 + $0x188] sm:$0xff]
      %v1245 = vld [vmem:[%s762 + $0x190] sm:$0xff]
      %v1246 = vld [vmem:[%s762 + $0x1a8] sm:$0xff]
      %v1247 = vld [vmem:[%s762 + $0x1b0] sm:$0xff]
      %v1248 = vld [vmem:[%s762 + $0x1c8] sm:$0xff]
      %v1249 = vld [vmem:[%s762 + $0x1d0] sm:$0xff]
      %v1250 = vld [vmem:[%s762 + $0x1e8] sm:$0xff]
      %v1251 = vld [vmem:[%s762 + $0x1f0] sm:$0xff]
      %v1252 = vld [vmem:[%s3 + $0x4] sm:$0x1]
      %v1253 = vperm.slane %v1252, 0
      %v1254 = vmul.f32 %v1220, %v1253
      %v1255 = vmul.f32 %v1221, %v1253
      %v1256 = vmul.f32 %v1222, %v1253
      %v1257 = vmul.f32 %v1223, %v1253
      %v1258 = vmul.f32 %v1224, %v1253
      %v1259 = vmul.f32 %v1225, %v1253
      %v1260 = vmul.f32 %v1226, %v1253
      %v1261 = vmul.f32 %v1227, %v1253
      %v1262 = vmul.f32 %v1228, %v1253
      %v1263 = vmul.f32 %v1229, %v1253
      %v1264 = vmul.f32 %v1230, %v1253
      %v1265 = vmul.f32 %v1231, %v1253
      %v1266 = vmul.f32 %v1232, %v1253
      %v1267 = vmul.f32 %v1233, %v1253
      %v1268 = vmul.f32 %v1234, %v1253
      %v1269 = vmul.f32 %v1235, %v1253
      %v1270 = vmul.f32 %v1236, %v1253
      %v1271 = vmul.f32 %v1237, %v1253
      %v1272 = vmul.f32 %v1238, %v1253
      %v1273 = vmul.f32 %v1239, %v1253
      %v1274 = vmul.f32 %v1240, %v1253
      %v1275 = vmul.f32 %v1241, %v1253
      %v1276 = vmul.f32 %v1242, %v1253
      %v1277 = vmul.f32 %v1243, %v1253
      %v1278 = vmul.f32 %v1244, %v1253
      %v1279 = vmul.f32 %v1245, %v1253
      %v1280 = vmul.f32 %v1246, %v1253
      %v1281 = vmul.f32 %v1247, %v1253
      %v1282 = vmul.f32 %v1248, %v1253
      %v1283 = vmul.f32 %v1249, %v1253
      %v1284 = vmul.f32 %v1250, %v1253
      %v1285 = vmul.f32 %v1251, %v1253
      %v1286 = vadd.f32 %v1188, %v1254
      %v1287 = vadd.f32 %v1189, %v1255
      %v1288 = vadd.f32 %v1190, %v1256
      %v1289 = vadd.f32 %v1191, %v1257
      %v1290 = vadd.f32 %v1192, %v1258
      %v1291 = vadd.f32 %v1193, %v1259
      %v1292 = vadd.f32 %v1194, %v1260
      %v1293 = vadd.f32 %v1195, %v1261
      %v1294 = vadd.f32 %v1196, %v1262
      %v1295 = vadd.f32 %v1197, %v1263
      %v1296 = vadd.f32 %v1198, %v1264
      %v1297 = vadd.f32 %v1199, %v1265
      %v1298 = vadd.f32 %v1200, %v1266
      %v1299 = vadd.f32 %v1201, %v1267
      %v1300 = vadd.f32 %v1202, %v1268
      %v1301 = vadd.f32 %v1203, %v1269
      %v1302 = vadd.f32 %v1204, %v1270
      %v1303 = vadd.f32 %v1205, %v1271
      %v1304 = vadd.f32 %v1206, %v1272
      %v1305 = vadd.f32 %v1207, %v1273
      %v1306 = vadd.f32 %v1208, %v1274
      %v1307 = vadd.f32 %v1209, %v1275
      %v1308 = vadd.f32 %v1210, %v1276
      %v1309 = vadd.f32 %v1211, %v1277
      %v1310 = vadd.f32 %v1212, %v1278
      %v1311 = vadd.f32 %v1213, %v1279
      %v1312 = vadd.f32 %v1214, %v1280
      %v1313 = vadd.f32 %v1215, %v1281
      %v1314 = vadd.f32 %v1216, %v1282
      %v1315 = vadd.f32 %v1217, %v1283
      %v1316 = vadd.f32 %v1218, %v1284
      %v1317 = vadd.f32 %v1219, %v1285
      %v1318 = vld [vmem:[%s762 + $0x9] sm:$0xff]
      %v1319 = vld [vmem:[%s762 + $0x11] sm:$0xff]
      %v1320 = vld [vmem:[%s762 + $0x29] sm:$0xff]
      %v1321 = vld [vmem:[%s762 + $0x31] sm:$0xff]
      %v1322 = vld [vmem:[%s762 + $0x49] sm:$0xff]
      %v1323 = vld [vmem:[%s762 + $0x51] sm:$0xff]
      %v1324 = vld [vmem:[%s762 + $0x69] sm:$0xff]
      %v1325 = vld [vmem:[%s762 + $0x71] sm:$0xff]
      %v1326 = vld [vmem:[%s762 + $0x89] sm:$0xff]
      %v1327 = vld [vmem:[%s762 + $0x91] sm:$0xff]
      %v1328 = vld [vmem:[%s762 + $0xa9] sm:$0xff]
      %v1329 = vld [vmem:[%s762 + $0xb1] sm:$0xff]
      %v1330 = vld [vmem:[%s762 + $0xc9] sm:$0xff]
      %v1331 = vld [vmem:[%s762 + $0xd1] sm:$0xff]
      %v1332 = vld [vmem:[%s762 + $0xe9] sm:$0xff]
      %v1333 = vld [vmem:[%s762 + $0xf1] sm:$0xff]
      %v1334 = vld [vmem:[%s762 + $0x109] sm:$0xff]
      %v1335 = vld [vmem:[%s762 + $0x111] sm:$0xff]
      %v1336 = vld [vmem:[%s762 + $0x129] sm:$0xff]
      %v1337 = vld [vmem:[%s762 + $0x131] sm:$0xff]
      %v1338 = vld [vmem:[%s762 + $0x149] sm:$0xff]
      %v1339 = vld [vmem:[%s762 + $0x151] sm:$0xff]
      %v1340 = vld [vmem:[%s762 + $0x169] sm:$0xff]
      %v1341 = vld [vmem:[%s762 + $0x171] sm:$0xff]
      %v1342 = vld [vmem:[%s762 + $0x189] sm:$0xff]
      %v1343 = vld [vmem:[%s762 + $0x191] sm:$0xff]
      %v1344 = vld [vmem:[%s762 + $0x1a9] sm:$0xff]
      %v1345 = vld [vmem:[%s762 + $0x1b1] sm:$0xff]
      %v1346 = vld [vmem:[%s762 + $0x1c9] sm:$0xff]
      %v1347 = vld [vmem:[%s762 + $0x1d1] sm:$0xff]
      %v1348 = vld [vmem:[%s762 + $0x1e9] sm:$0xff]
      %v1349 = vld [vmem:[%s762 + $0x1f1] sm:$0xff]
      %v1350 = vld [vmem:[%s3 + $0x5] sm:$0x1]
      %v1351 = vperm.slane %v1350, 0
      %v1352 = vmul.f32 %v1318, %v1351
      %v1353 = vmul.f32 %v1319, %v1351
      %v1354 = vmul.f32 %v1320, %v1351
      %v1355 = vmul.f32 %v1321, %v1351
      %v1356 = vmul.f32 %v1322, %v1351
      %v1357 = vmul.f32 %v1323, %v1351
      %v1358 = vmul.f32 %v1324, %v1351
      %v1359 = vmul.f32 %v1325, %v1351
      %v1360 = vmul.f32 %v1326, %v1351
      %v1361 = vmul.f32 %v1327, %v1351
      %v1362 = vmul.f32 %v1328, %v1351
      %v1363 = vmul.f32 %v1329, %v1351
      %v1364 = vmul.f32 %v1330, %v1351
      %v1365 = vmul.f32 %v1331, %v1351
      %v1366 = vmul.f32 %v1332, %v1351
      %v1367 = vmul.f32 %v1333, %v1351
      %v1368 = vmul.f32 %v1334, %v1351
      %v1369 = vmul.f32 %v1335, %v1351
      %v1370 = vmul.f32 %v1336, %v1351
      %v1371 = vmul.f32 %v1337, %v1351
      %v1372 = vmul.f32 %v1338, %v1351
      %v1373 = vmul.f32 %v1339, %v1351
      %v1374 = vmul.f32 %v1340, %v1351
      %v1375 = vmul.f32 %v1341, %v1351
      %v1376 = vmul.f32 %v1342, %v1351
      %v1377 = vmul.f32 %v1343, %v1351
      %v1378 = vmul.f32 %v1344, %v1351
      %v1379 = vmul.f32 %v1345, %v1351
      %v1380 = vmul.f32 %v1346, %v1351
      %v1381 = vmul.f32 %v1347, %v1351
      %v1382 = vmul.f32 %v1348, %v1351
      %v1383 = vmul.f32 %v1349, %v1351
      %v1384 = vadd.f32 %v1286, %v1352
      %v1385 = vadd.f32 %v1287, %v1353
      %v1386 = vadd.f32 %v1288, %v1354
      %v1387 = vadd.f32 %v1289, %v1355
      %v1388 = vadd.f32 %v1290, %v1356
      %v1389 = vadd.f32 %v1291, %v1357
      %v1390 = vadd.f32 %v1292, %v1358
      %v1391 = vadd.f32 %v1293, %v1359
      %v1392 = vadd.f32 %v1294, %v1360
      %v1393 = vadd.f32 %v1295, %v1361
      %v1394 = vadd.f32 %v1296, %v1362
      %v1395 = vadd.f32 %v1297, %v1363
      %v1396 = vadd.f32 %v1298, %v1364
      %v1397 = vadd.f32 %v1299, %v1365
      %v1398 = vadd.f32 %v1300, %v1366
      %v1399 = vadd.f32 %v1301, %v1367
      %v1400 = vadd.f32 %v1302, %v1368
      %v1401 = vadd.f32 %v1303, %v1369
      %v1402 = vadd.f32 %v1304, %v1370
      %v1403 = vadd.f32 %v1305, %v1371
      %v1404 = vadd.f32 %v1306, %v1372
      %v1405 = vadd.f32 %v1307, %v1373
      %v1406 = vadd.f32 %v1308, %v1374
      %v1407 = vadd.f32 %v1309, %v1375
      %v1408 = vadd.f32 %v1310, %v1376
      %v1409 = vadd.f32 %v1311, %v1377
      %v1410 = vadd.f32 %v1312, %v1378
      %v1411 = vadd.f32 %v1313, %v1379
      %v1412 = vadd.f32 %v1314, %v1380
      %v1413 = vadd.f32 %v1315, %v1381
      %v1414 = vadd.f32 %v1316, %v1382
      %v1415 = vadd.f32 %v1317, %v1383
      %s1416 = scalar_lea.vmem [#allocation2], 64
      %v1417 = vld [vmem:[%s1416 + $0x7] sm:$0xff]
      %v1418 = vld [vmem:[%s1416 + $0xf] sm:$0xff]
      %v1419 = vld [vmem:[%s1416 + $0x27] sm:$0xff]
      %v1420 = vld [vmem:[%s1416 + $0x2f] sm:$0xff]
      %v1421 = vld [vmem:[%s1416 + $0x47] sm:$0xff]
      %v1422 = vld [vmem:[%s1416 + $0x4f] sm:$0xff]
      %v1423 = vld [vmem:[%s1416 + $0x67] sm:$0xff]
      %v1424 = vld [vmem:[%s1416 + $0x6f] sm:$0xff]
      %v1425 = vld [vmem:[%s1416 + $0x87] sm:$0xff]
      %v1426 = vld [vmem:[%s1416 + $0x8f] sm:$0xff]
      %v1427 = vld [vmem:[%s1416 + $0xa7] sm:$0xff]
      %v1428 = vld [vmem:[%s1416 + $0xaf] sm:$0xff]
      %v1429 = vld [vmem:[%s1416 + $0xc7] sm:$0xff]
      %v1430 = vld [vmem:[%s1416 + $0xcf] sm:$0xff]
      %v1431 = vld [vmem:[%s1416 + $0xe7] sm:$0xff]
      %v1432 = vld [vmem:[%s1416 + $0xef] sm:$0xff]
      %v1433 = vld [vmem:[%s1416 + $0x107] sm:$0xff]
      %v1434 = vld [vmem:[%s1416 + $0x10f] sm:$0xff]
      %v1435 = vld [vmem:[%s1416 + $0x127] sm:$0xff]
      %v1436 = vld [vmem:[%s1416 + $0x12f] sm:$0xff]
      %v1437 = vld [vmem:[%s1416 + $0x147] sm:$0xff]
      %v1438 = vld [vmem:[%s1416 + $0x14f] sm:$0xff]
      %v1439 = vld [vmem:[%s1416 + $0x167] sm:$0xff]
      %v1440 = vld [vmem:[%s1416 + $0x16f] sm:$0xff]
      %v1441 = vld [vmem:[%s1416 + $0x187] sm:$0xff]
      %v1442 = vld [vmem:[%s1416 + $0x18f] sm:$0xff]
      %v1443 = vld [vmem:[%s1416 + $0x1a7] sm:$0xff]
      %v1444 = vld [vmem:[%s1416 + $0x1af] sm:$0xff]
      %v1445 = vld [vmem:[%s1416 + $0x1c7] sm:$0xff]
      %v1446 = vld [vmem:[%s1416 + $0x1cf] sm:$0xff]
      %v1447 = vld [vmem:[%s1416 + $0x1e7] sm:$0xff]
      %v1448 = vld [vmem:[%s1416 + $0x1ef] sm:$0xff]
      %v1449 = vld [vmem:[%s3 + $0x6] sm:$0x1]
      %v1450 = vperm.slane %v1449, 0
      %v1451 = vmul.f32 %v1417, %v1450
      %v1452 = vmul.f32 %v1418, %v1450
      %v1453 = vmul.f32 %v1419, %v1450
      %v1454 = vmul.f32 %v1420, %v1450
      %v1455 = vmul.f32 %v1421, %v1450
      %v1456 = vmul.f32 %v1422, %v1450
      %v1457 = vmul.f32 %v1423, %v1450
      %v1458 = vmul.f32 %v1424, %v1450
      %v1459 = vmul.f32 %v1425, %v1450
      %v1460 = vmul.f32 %v1426, %v1450
      %v1461 = vmul.f32 %v1427, %v1450
      %v1462 = vmul.f32 %v1428, %v1450
      %v1463 = vmul.f32 %v1429, %v1450
      %v1464 = vmul.f32 %v1430, %v1450
      %v1465 = vmul.f32 %v1431, %v1450
      %v1466 = vmul.f32 %v1432, %v1450
      %v1467 = vmul.f32 %v1433, %v1450
      %v1468 = vmul.f32 %v1434, %v1450
      %v1469 = vmul.f32 %v1435, %v1450
      %v1470 = vmul.f32 %v1436, %v1450
      %v1471 = vmul.f32 %v1437, %v1450
      %v1472 = vmul.f32 %v1438, %v1450
      %v1473 = vmul.f32 %v1439, %v1450
      %v1474 = vmul.f32 %v1440, %v1450
      %v1475 = vmul.f32 %v1441, %v1450
      %v1476 = vmul.f32 %v1442, %v1450
      %v1477 = vmul.f32 %v1443, %v1450
      %v1478 = vmul.f32 %v1444, %v1450
      %v1479 = vmul.f32 %v1445, %v1450
      %v1480 = vmul.f32 %v1446, %v1450
      %v1481 = vmul.f32 %v1447, %v1450
      %v1482 = vmul.f32 %v1448, %v1450
      %v1483 = vadd.f32 %v1384, %v1451
      %v1484 = vadd.f32 %v1385, %v1452
      %v1485 = vadd.f32 %v1386, %v1453
      %v1486 = vadd.f32 %v1387, %v1454
      %v1487 = vadd.f32 %v1388, %v1455
      %v1488 = vadd.f32 %v1389, %v1456
      %v1489 = vadd.f32 %v1390, %v1457
      %v1490 = vadd.f32 %v1391, %v1458
      %v1491 = vadd.f32 %v1392, %v1459
      %v1492 = vadd.f32 %v1393, %v1460
      %v1493 = vadd.f32 %v1394, %v1461
      %v1494 = vadd.f32 %v1395, %v1462
      %v1495 = vadd.f32 %v1396, %v1463
      %v1496 = vadd.f32 %v1397, %v1464
      %v1497 = vadd.f32 %v1398, %v1465
      %v1498 = vadd.f32 %v1399, %v1466
      %v1499 = vadd.f32 %v1400, %v1467
      %v1500 = vadd.f32 %v1401, %v1468
      %v1501 = vadd.f32 %v1402, %v1469
      %v1502 = vadd.f32 %v1403, %v1470
      %v1503 = vadd.f32 %v1404, %v1471
      %v1504 = vadd.f32 %v1405, %v1472
      %v1505 = vadd.f32 %v1406, %v1473
      %v1506 = vadd.f32 %v1407, %v1474
      %v1507 = vadd.f32 %v1408, %v1475
      %v1508 = vadd.f32 %v1409, %v1476
      %v1509 = vadd.f32 %v1410, %v1477
      %v1510 = vadd.f32 %v1411, %v1478
      %v1511 = vadd.f32 %v1412, %v1479
      %v1512 = vadd.f32 %v1413, %v1480
      %v1513 = vadd.f32 %v1414, %v1481
      %v1514 = vadd.f32 %v1415, %v1482
      %v1515 = vld [vmem:[%s1416 + $0x8] sm:$0xff]
      %v1516 = vld [vmem:[%s1416 + $0x10] sm:$0xff]
      %v1517 = vld [vmem:[%s1416 + $0x28] sm:$0xff]
      %v1518 = vld [vmem:[%s1416 + $0x30] sm:$0xff]
      %v1519 = vld [vmem:[%s1416 + $0x48] sm:$0xff]
      %v1520 = vld [vmem:[%s1416 + $0x50] sm:$0xff]
      %v1521 = vld [vmem:[%s1416 + $0x68] sm:$0xff]
      %v1522 = vld [vmem:[%s1416 + $0x70] sm:$0xff]
      %v1523 = vld [vmem:[%s1416 + $0x88] sm:$0xff]
      %v1524 = vld [vmem:[%s1416 + $0x90] sm:$0xff]
      %v1525 = vld [vmem:[%s1416 + $0xa8] sm:$0xff]
      %v1526 = vld [vmem:[%s1416 + $0xb0] sm:$0xff]
      %v1527 = vld [vmem:[%s1416 + $0xc8] sm:$0xff]
      %v1528 = vld [vmem:[%s1416 + $0xd0] sm:$0xff]
      %v1529 = vld [vmem:[%s1416 + $0xe8] sm:$0xff]
      %v1530 = vld [vmem:[%s1416 + $0xf0] sm:$0xff]
      %v1531 = vld [vmem:[%s1416 + $0x108] sm:$0xff]
      %v1532 = vld [vmem:[%s1416 + $0x110] sm:$0xff]
      %v1533 = vld [vmem:[%s1416 + $0x128] sm:$0xff]
      %v1534 = vld [vmem:[%s1416 + $0x130] sm:$0xff]
      %v1535 = vld [vmem:[%s1416 + $0x148] sm:$0xff]
      %v1536 = vld [vmem:[%s1416 + $0x150] sm:$0xff]
      %v1537 = vld [vmem:[%s1416 + $0x168] sm:$0xff]
      %v1538 = vld [vmem:[%s1416 + $0x170] sm:$0xff]
      %v1539 = vld [vmem:[%s1416 + $0x188] sm:$0xff]
      %v1540 = vld [vmem:[%s1416 + $0x190] sm:$0xff]
      %v1541 = vld [vmem:[%s1416 + $0x1a8] sm:$0xff]
      %v1542 = vld [vmem:[%s1416 + $0x1b0] sm:$0xff]
      %v1543 = vld [vmem:[%s1416 + $0x1c8] sm:$0xff]
      %v1544 = vld [vmem:[%s1416 + $0x1d0] sm:$0xff]
      %v1545 = vld [vmem:[%s1416 + $0x1e8] sm:$0xff]
      %v1546 = vld [vmem:[%s1416 + $0x1f0] sm:$0xff]
      %v1547 = vld [vmem:[%s3 + $0x7] sm:$0x1]
      %v1548 = vperm.slane %v1547, 0
      %v1549 = vmul.f32 %v1515, %v1548
      %v1550 = vmul.f32 %v1516, %v1548
      %v1551 = vmul.f32 %v1517, %v1548
      %v1552 = vmul.f32 %v1518, %v1548
      %v1553 = vmul.f32 %v1519, %v1548
      %v1554 = vmul.f32 %v1520, %v1548
      %v1555 = vmul.f32 %v1521, %v1548
      %v1556 = vmul.f32 %v1522, %v1548
      %v1557 = vmul.f32 %v1523, %v1548
      %v1558 = vmul.f32 %v1524, %v1548
      %v1559 = vmul.f32 %v1525, %v1548
      %v1560 = vmul.f32 %v1526, %v1548
      %v1561 = vmul.f32 %v1527, %v1548
      %v1562 = vmul.f32 %v1528, %v1548
      %v1563 = vmul.f32 %v1529, %v1548
      %v1564 = vmul.f32 %v1530, %v1548
      %v1565 = vmul.f32 %v1531, %v1548
      %v1566 = vmul.f32 %v1532, %v1548
      %v1567 = vmul.f32 %v1533, %v1548
      %v1568 = vmul.f32 %v1534, %v1548
      %v1569 = vmul.f32 %v1535, %v1548
      %v1570 = vmul.f32 %v1536, %v1548
      %v1571 = vmul.f32 %v1537, %v1548
      %v1572 = vmul.f32 %v1538, %v1548
      %v1573 = vmul.f32 %v1539, %v1548
      %v1574 = vmul.f32 %v1540, %v1548
      %v1575 = vmul.f32 %v1541, %v1548
      %v1576 = vmul.f32 %v1542, %v1548
      %v1577 = vmul.f32 %v1543, %v1548
      %v1578 = vmul.f32 %v1544, %v1548
      %v1579 = vmul.f32 %v1545, %v1548
      %v1580 = vmul.f32 %v1546, %v1548
      %v1581 = vadd.f32 %v1483, %v1549
      %v1582 = vadd.f32 %v1484, %v1550
      %v1583 = vadd.f32 %v1485, %v1551
      %v1584 = vadd.f32 %v1486, %v1552
      %v1585 = vadd.f32 %v1487, %v1553
      %v1586 = vadd.f32 %v1488, %v1554
      %v1587 = vadd.f32 %v1489, %v1555
      %v1588 = vadd.f32 %v1490, %v1556
      %v1589 = vadd.f32 %v1491, %v1557
      %v1590 = vadd.f32 %v1492, %v1558
      %v1591 = vadd.f32 %v1493, %v1559
      %v1592 = vadd.f32 %v1494, %v1560
      %v1593 = vadd.f32 %v1495, %v1561
      %v1594 = vadd.f32 %v1496, %v1562
      %v1595 = vadd.f32 %v1497, %v1563
      %v1596 = vadd.f32 %v1498, %v1564
      %v1597 = vadd.f32 %v1499, %v1565
      %v1598 = vadd.f32 %v1500, %v1566
      %v1599 = vadd.f32 %v1501, %v1567
      %v1600 = vadd.f32 %v1502, %v1568
      %v1601 = vadd.f32 %v1503, %v1569
      %v1602 = vadd.f32 %v1504, %v1570
      %v1603 = vadd.f32 %v1505, %v1571
      %v1604 = vadd.f32 %v1506, %v1572
      %v1605 = vadd.f32 %v1507, %v1573
      %v1606 = vadd.f32 %v1508, %v1574
      %v1607 = vadd.f32 %v1509, %v1575
      %v1608 = vadd.f32 %v1510, %v1576
      %v1609 = vadd.f32 %v1511, %v1577
      %v1610 = vadd.f32 %v1512, %v1578
      %v1611 = vadd.f32 %v1513, %v1579
      %v1612 = vadd.f32 %v1514, %v1580
      %v1613 = vld [vmem:[%s1416 + $0x9] sm:$0xff]
      %v1614 = vld [vmem:[%s1416 + $0x11] sm:$0xff]
      %v1615 = vld [vmem:[%s1416 + $0x29] sm:$0xff]
      %v1616 = vld [vmem:[%s1416 + $0x31] sm:$0xff]
      %v1617 = vld [vmem:[%s1416 + $0x49] sm:$0xff]
      %v1618 = vld [vmem:[%s1416 + $0x51] sm:$0xff]
      %v1619 = vld [vmem:[%s1416 + $0x69] sm:$0xff]
      %v1620 = vld [vmem:[%s1416 + $0x71] sm:$0xff]
      %v1621 = vld [vmem:[%s1416 + $0x89] sm:$0xff]
      %v1622 = vld [vmem:[%s1416 + $0x91] sm:$0xff]
      %v1623 = vld [vmem:[%s1416 + $0xa9] sm:$0xff]
      %v1624 = vld [vmem:[%s1416 + $0xb1] sm:$0xff]
      %v1625 = vld [vmem:[%s1416 + $0xc9] sm:$0xff]
      %v1626 = vld [vmem:[%s1416 + $0xd1] sm:$0xff]
      %v1627 = vld [vmem:[%s1416 + $0xe9] sm:$0xff]
      %v1628 = vld [vmem:[%s1416 + $0xf1] sm:$0xff]
      %v1629 = vld [vmem:[%s1416 + $0x109] sm:$0xff]
      %v1630 = vld [vmem:[%s1416 + $0x111] sm:$0xff]
      %v1631 = vld [vmem:[%s1416 + $0x129] sm:$0xff]
      %v1632 = vld [vmem:[%s1416 + $0x131] sm:$0xff]
      %v1633 = vld [vmem:[%s1416 + $0x149] sm:$0xff]
      %v1634 = vld [vmem:[%s1416 + $0x151] sm:$0xff]
      %v1635 = vld [vmem:[%s1416 + $0x169] sm:$0xff]
      %v1636 = vld [vmem:[%s1416 + $0x171] sm:$0xff]
      %v1637 = vld [vmem:[%s1416 + $0x189] sm:$0xff]
      %v1638 = vld [vmem:[%s1416 + $0x191] sm:$0xff]
      %v1639 = vld [vmem:[%s1416 + $0x1a9] sm:$0xff]
      %v1640 = vld [vmem:[%s1416 + $0x1b1] sm:$0xff]
      %v1641 = vld [vmem:[%s1416 + $0x1c9] sm:$0xff]
      %v1642 = vld [vmem:[%s1416 + $0x1d1] sm:$0xff]
      %v1643 = vld [vmem:[%s1416 + $0x1e9] sm:$0xff]
      %v1644 = vld [vmem:[%s1416 + $0x1f1] sm:$0xff]
      %v1645 = vld [vmem:[%s3 + $0x8] sm:$0x1]
      %v1646 = vperm.slane %v1645, 0
      %v1647 = vmul.f32 %v1613, %v1646
      %v1648 = vmul.f32 %v1614, %v1646
      %v1649 = vmul.f32 %v1615, %v1646
      %v1650 = vmul.f32 %v1616, %v1646
      %v1651 = vmul.f32 %v1617, %v1646
      %v1652 = vmul.f32 %v1618, %v1646
      %v1653 = vmul.f32 %v1619, %v1646
      %v1654 = vmul.f32 %v1620, %v1646
      %v1655 = vmul.f32 %v1621, %v1646
      %v1656 = vmul.f32 %v1622, %v1646
      %v1657 = vmul.f32 %v1623, %v1646
      %v1658 = vmul.f32 %v1624, %v1646
      %v1659 = vmul.f32 %v1625, %v1646
      %v1660 = vmul.f32 %v1626, %v1646
      %v1661 = vmul.f32 %v1627, %v1646
      %v1662 = vmul.f32 %v1628, %v1646
      %v1663 = vmul.f32 %v1629, %v1646
      %v1664 = vmul.f32 %v1630, %v1646
      %v1665 = vmul.f32 %v1631, %v1646
      %v1666 = vmul.f32 %v1632, %v1646
      %v1667 = vmul.f32 %v1633, %v1646
      %v1668 = vmul.f32 %v1634, %v1646
      %v1669 = vmul.f32 %v1635, %v1646
      %v1670 = vmul.f32 %v1636, %v1646
      %v1671 = vmul.f32 %v1637, %v1646
      %v1672 = vmul.f32 %v1638, %v1646
      %v1673 = vmul.f32 %v1639, %v1646
      %v1674 = vmul.f32 %v1640, %v1646
      %v1675 = vmul.f32 %v1641, %v1646
      %v1676 = vmul.f32 %v1642, %v1646
      %v1677 = vmul.f32 %v1643, %v1646
      %v1678 = vmul.f32 %v1644, %v1646
      %v1679 = vadd.f32 %v1581, %v1647
      %v1680 = vadd.f32 %v1582, %v1648
      %v1681 = vadd.f32 %v1583, %v1649
      %v1682 = vadd.f32 %v1584, %v1650
      %v1683 = vadd.f32 %v1585, %v1651
      %v1684 = vadd.f32 %v1586, %v1652
      %v1685 = vadd.f32 %v1587, %v1653
      %v1686 = vadd.f32 %v1588, %v1654
      %v1687 = vadd.f32 %v1589, %v1655
      %v1688 = vadd.f32 %v1590, %v1656
      %v1689 = vadd.f32 %v1591, %v1657
      %v1690 = vadd.f32 %v1592, %v1658
      %v1691 = vadd.f32 %v1593, %v1659
      %v1692 = vadd.f32 %v1594, %v1660
      %v1693 = vadd.f32 %v1595, %v1661
      %v1694 = vadd.f32 %v1596, %v1662
      %v1695 = vadd.f32 %v1597, %v1663
      %v1696 = vadd.f32 %v1598, %v1664
      %v1697 = vadd.f32 %v1599, %v1665
      %v1698 = vadd.f32 %v1600, %v1666
      %v1699 = vadd.f32 %v1601, %v1667
      %v1700 = vadd.f32 %v1602, %v1668
      %v1701 = vadd.f32 %v1603, %v1669
      %v1702 = vadd.f32 %v1604, %v1670
      %v1703 = vadd.f32 %v1605, %v1671
      %v1704 = vadd.f32 %v1606, %v1672
      %v1705 = vadd.f32 %v1607, %v1673
      %v1706 = vadd.f32 %v1608, %v1674
      %v1707 = vadd.f32 %v1609, %v1675
      %v1708 = vadd.f32 %v1610, %v1676
      %v1709 = vadd.f32 %v1611, %v1677
      %v1710 = vadd.f32 %v1612, %v1678
      %v1711 = vld [vmem:[%s4] sm:$0x1]
      %v1713 = vperm.slane %v1711, 0
      %v1715 = vadd.f32 %v1679, %v1713
      %v1716 = vadd.f32 %v1680, %v1713
      %v1717 = vadd.f32 %v1681, %v1713
      %v1718 = vadd.f32 %v1682, %v1713
      %v1719 = vadd.f32 %v1683, %v1713
      %v1720 = vadd.f32 %v1684, %v1713
      %v1721 = vadd.f32 %v1685, %v1713
      %v1722 = vadd.f32 %v1686, %v1713
      %v1723 = vadd.f32 %v1687, %v1713
      %v1724 = vadd.f32 %v1688, %v1713
      %v1725 = vadd.f32 %v1689, %v1713
      %v1726 = vadd.f32 %v1690, %v1713
      %v1727 = vadd.f32 %v1691, %v1713
      %v1728 = vadd.f32 %v1692, %v1713
      %v1729 = vadd.f32 %v1693, %v1713
      %v1730 = vadd.f32 %v1694, %v1713
      %v1731 = vadd.f32 %v1695, %v1713
      %v1732 = vadd.f32 %v1696, %v1713
      %v1733 = vadd.f32 %v1697, %v1713
      %v1734 = vadd.f32 %v1698, %v1713
      %v1735 = vadd.f32 %v1699, %v1713
      %v1736 = vadd.f32 %v1700, %v1713
      %v1737 = vadd.f32 %v1701, %v1713
      %v1738 = vadd.f32 %v1702, %v1713
      %v1739 = vadd.f32 %v1703, %v1713
      %v1740 = vadd.f32 %v1704, %v1713
      %v1741 = vadd.f32 %v1705, %v1713
      %v1742 = vadd.f32 %v1706, %v1713
      %v1743 = vadd.f32 %v1707, %v1713
      %v1744 = vadd.f32 %v1708, %v1713
      %v1745 = vadd.f32 %v1709, %v1713
      %v1746 = vadd.f32 %v1710, %v1713
      %v1747 = vmax.f32 %v1715, 0.0
      %v1748 = vmax.f32 %v1716, 0.0
      %v1749 = vmax.f32 %v1717, 0.0
      %v1750 = vmax.f32 %v1718, 0.0
      %v1751 = vmax.f32 %v1719, 0.0
      %v1752 = vmax.f32 %v1720, 0.0
      %v1753 = vmax.f32 %v1721, 0.0
      %v1754 = vmax.f32 %v1722, 0.0
      %v1755 = vmax.f32 %v1723, 0.0
      %v1756 = vmax.f32 %v1724, 0.0
      %v1757 = vmax.f32 %v1725, 0.0
      %v1758 = vmax.f32 %v1726, 0.0
      %v1759 = vmax.f32 %v1727, 0.0
      %v1760 = vmax.f32 %v1728, 0.0
      %v1761 = vmax.f32 %v1729, 0.0
      %v1762 = vmax.f32 %v1730, 0.0
      %v1763 = vmax.f32 %v1731, 0.0
      %v1764 = vmax.f32 %v1732, 0.0
      %v1765 = vmax.f32 %v1733, 0.0
      %v1766 = vmax.f32 %v1734, 0.0
      %v1767 = vmax.f32 %v1735, 0.0
      %v1768 = vmax.f32 %v1736, 0.0
      %v1769 = vmax.f32 %v1737, 0.0
      %v1770 = vmax.f32 %v1738, 0.0
      %v1771 = vmax.f32 %v1739, 0.0
      %v1772 = vmax.f32 %v1740, 0.0
      %v1773 = vmax.f32 %v1741, 0.0
      %v1774 = vmax.f32 %v1742, 0.0
      %v1775 = vmax.f32 %v1743, 0.0
      %v1776 = vmax.f32 %v1744, 0.0
      %v1777 = vmax.f32 %v1745, 0.0
      %v1778 = vmax.f32 %v1746, 0.0
      %v1779 = vmin.f32 %v1747, 6.0
      %v1780 = vmin.f32 %v1748, 6.0
      %v1781 = vmin.f32 %v1749, 6.0
      %v1782 = vmin.f32 %v1750, 6.0
      %v1783 = vmin.f32 %v1751, 6.0
      %v1784 = vmin.f32 %v1752, 6.0
      %v1785 = vmin.f32 %v1753, 6.0
      %v1786 = vmin.f32 %v1754, 6.0
      %v1787 = vmin.f32 %v1755, 6.0
      %v1788 = vmin.f32 %v1756, 6.0
      %v1789 = vmin.f32 %v1757, 6.0
      %v1790 = vmin.f32 %v1758, 6.0
      %v1791 = vmin.f32 %v1759, 6.0
      %v1792 = vmin.f32 %v1760, 6.0
      %v1793 = vmin.f32 %v1761, 6.0
      %v1794 = vmin.f32 %v1762, 6.0
      %v1795 = vmin.f32 %v1763, 6.0
      %v1796 = vmin.f32 %v1764, 6.0
      %v1797 = vmin.f32 %v1765, 6.0
      %v1798 = vmin.f32 %v1766, 6.0
      %v1799 = vmin.f32 %v1767, 6.0
      %v1800 = vmin.f32 %v1768, 6.0
      %v1801 = vmin.f32 %v1769, 6.0
      %v1802 = vmin.f32 %v1770, 6.0
      %v1803 = vmin.f32 %v1771, 6.0
      %v1804 = vmin.f32 %v1772, 6.0
      %v1805 = vmin.f32 %v1773, 6.0
      %v1806 = vmin.f32 %v1774, 6.0
      %v1807 = vmin.f32 %v1775, 6.0
      %v1808 = vmin.f32 %v1776, 6.0
      %v1809 = vmin.f32 %v1777, 6.0
      %v1810 = vmin.f32 %v1778, 6.0
      %v1811 = vsel %vm752, %v1779, 0.0
      %v1812 = vsel %vm752, %v1780, 0.0
      %v1813 = vadd.f32 %v1811, %v1812
      %v1814 = vrot.slane %v1813, 4
      %v1815 = vadd.f32 %v1813, %v1814
      %v1816 = vrot.slane %v1815, 2
      %v1817 = vadd.f32 %v1815, %v1816
      %v1818 = vrot.slane %v1817, 1
      %v1819 = vadd.f32 %v1817, %v1818
      %v1820 = vsel %vm752, %v1781, 0.0
      %v1821 = vsel %vm752, %v1782, 0.0
      %v1822 = vadd.f32 %v1820, %v1821
      %v1823 = vrot.slane %v1822, 4
      %v1824 = vadd.f32 %v1822, %v1823
      %v1825 = vrot.slane %v1824, 2
      %v1826 = vadd.f32 %v1824, %v1825
      %v1827 = vrot.slane %v1826, 1
      %v1828 = vadd.f32 %v1826, %v1827
      %v1829 = vsel %vm752, %v1783, 0.0
      %v1830 = vsel %vm752, %v1784, 0.0
      %v1831 = vadd.f32 %v1829, %v1830
      %v1832 = vrot.slane %v1831, 4
      %v1833 = vadd.f32 %v1831, %v1832
      %v1834 = vrot.slane %v1833, 2
      %v1835 = vadd.f32 %v1833, %v1834
      %v1836 = vrot.slane %v1835, 1
      %v1837 = vadd.f32 %v1835, %v1836
      %v1838 = vsel %vm752, %v1785, 0.0
      %v1839 = vsel %vm752, %v1786, 0.0
      %v1840 = vadd.f32 %v1838, %v1839
      %v1841 = vrot.slane %v1840, 4
      %v1842 = vadd.f32 %v1840, %v1841
      %v1843 = vrot.slane %v1842, 2
      %v1844 = vadd.f32 %v1842, %v1843
      %v1845 = vrot.slane %v1844, 1
      %v1846 = vadd.f32 %v1844, %v1845
      %v1847 = vsel %vm752, %v1787, 0.0
      %v1848 = vsel %vm752, %v1788, 0.0
      %v1849 = vadd.f32 %v1847, %v1848
      %v1850 = vrot.slane %v1849, 4
      %v1851 = vadd.f32 %v1849, %v1850
      %v1852 = vrot.slane %v1851, 2
      %v1853 = vadd.f32 %v1851, %v1852
      %v1854 = vrot.slane %v1853, 1
      %v1855 = vadd.f32 %v1853, %v1854
      %v1856 = vsel %vm752, %v1789, 0.0
      %v1857 = vsel %vm752, %v1790, 0.0
      %v1858 = vadd.f32 %v1856, %v1857
      %v1859 = vrot.slane %v1858, 4
      %v1860 = vadd.f32 %v1858, %v1859
      %v1861 = vrot.slane %v1860, 2
      %v1862 = vadd.f32 %v1860, %v1861
      %v1863 = vrot.slane %v1862, 1
      %v1864 = vadd.f32 %v1862, %v1863
      %v1865 = vsel %vm752, %v1791, 0.0
      %v1866 = vsel %vm752, %v1792, 0.0
      %v1867 = vadd.f32 %v1865, %v1866
      %v1868 = vrot.slane %v1867, 4
      %v1869 = vadd.f32 %v1867, %v1868
      %v1870 = vrot.slane %v1869, 2
      %v1871 = vadd.f32 %v1869, %v1870
      %v1872 = vrot.slane %v1871, 1
      %v1873 = vadd.f32 %v1871, %v1872
      %v1874 = vsel %vm752, %v1793, 0.0
      %v1875 = vsel %vm752, %v1794, 0.0
      %v1876 = vadd.f32 %v1874, %v1875
      %v1877 = vrot.slane %v1876, 4
      %v1878 = vadd.f32 %v1876, %v1877
      %v1879 = vrot.slane %v1878, 2
      %v1880 = vadd.f32 %v1878, %v1879
      %v1881 = vrot.slane %v1880, 1
      %v1882 = vadd.f32 %v1880, %v1881
      %v1883 = vsel %vm752, %v1795, 0.0
      %v1884 = vsel %vm752, %v1796, 0.0
      %v1885 = vadd.f32 %v1883, %v1884
      %v1886 = vrot.slane %v1885, 4
      %v1887 = vadd.f32 %v1885, %v1886
      %v1888 = vrot.slane %v1887, 2
      %v1889 = vadd.f32 %v1887, %v1888
      %v1890 = vrot.slane %v1889, 1
      %v1891 = vadd.f32 %v1889, %v1890
      %v1892 = vsel %vm752, %v1797, 0.0
      %v1893 = vsel %vm752, %v1798, 0.0
      %v1894 = vadd.f32 %v1892, %v1893
      %v1895 = vrot.slane %v1894, 4
      %v1896 = vadd.f32 %v1894, %v1895
      %v1897 = vrot.slane %v1896, 2
      %v1898 = vadd.f32 %v1896, %v1897
      %v1899 = vrot.slane %v1898, 1
      %v1900 = vadd.f32 %v1898, %v1899
      %v1901 = vsel %vm752, %v1799, 0.0
      %v1902 = vsel %vm752, %v1800, 0.0
      %v1903 = vadd.f32 %v1901, %v1902
      %v1904 = vrot.slane %v1903, 4
      %v1905 = vadd.f32 %v1903, %v1904
      %v1906 = vrot.slane %v1905, 2
      %v1907 = vadd.f32 %v1905, %v1906
      %v1908 = vrot.slane %v1907, 1
      %v1909 = vadd.f32 %v1907, %v1908
      %v1910 = vsel %vm752, %v1801, 0.0
      %v1911 = vsel %vm752, %v1802, 0.0
      %v1912 = vadd.f32 %v1910, %v1911
      %v1913 = vrot.slane %v1912, 4
      %v1914 = vadd.f32 %v1912, %v1913
      %v1915 = vrot.slane %v1914, 2
      %v1916 = vadd.f32 %v1914, %v1915
      %v1917 = vrot.slane %v1916, 1
      %v1918 = vadd.f32 %v1916, %v1917
      %v1919 = vsel %vm752, %v1803, 0.0
      %v1920 = vsel %vm752, %v1804, 0.0
      %v1921 = vadd.f32 %v1919, %v1920
      %v1922 = vrot.slane %v1921, 4
      %v1923 = vadd.f32 %v1921, %v1922
      %v1924 = vrot.slane %v1923, 2
      %v1925 = vadd.f32 %v1923, %v1924
      %v1926 = vrot.slane %v1925, 1
      %v1927 = vadd.f32 %v1925, %v1926
      %v1928 = vsel %vm752, %v1805, 0.0
      %v1929 = vsel %vm752, %v1806, 0.0
      %v1930 = vadd.f32 %v1928, %v1929
      %v1931 = vrot.slane %v1930, 4
      %v1932 = vadd.f32 %v1930, %v1931
      %v1933 = vrot.slane %v1932, 2
      %v1934 = vadd.f32 %v1932, %v1933
      %v1935 = vrot.slane %v1934, 1
      %v1936 = vadd.f32 %v1934, %v1935
      %v1937 = vsel %vm752, %v1807, 0.0
      %v1938 = vsel %vm752, %v1808, 0.0
      %v1939 = vadd.f32 %v1937, %v1938
      %v1940 = vrot.slane %v1939, 4
      %v1941 = vadd.f32 %v1939, %v1940
      %v1942 = vrot.slane %v1941, 2
      %v1943 = vadd.f32 %v1941, %v1942
      %v1944 = vrot.slane %v1943, 1
      %v1945 = vadd.f32 %v1943, %v1944
      %v1946 = vsel %vm752, %v1809, 0.0
      %v1947 = vsel %vm752, %v1810, 0.0
      %v1948 = vadd.f32 %v1946, %v1947
      %v1949 = vrot.slane %v1948, 4
      %v1950 = vadd.f32 %v1948, %v1949
      %v1951 = vrot.slane %v1950, 2
      %v1952 = vadd.f32 %v1950, %v1951
      %v1953 = vrot.slane %v1952, 1
      %v1954 = vadd.f32 %v1952, %v1953
      %v1955 = vrcp.pop 16.0
      %v1956 = vmul.f32 16.0, %v1955
      %v1957 = vsub.f32 1.0, %v1956
      %v1958 = vmul.f32 %v1955, %v1957
      %v1959 = vadd.f32 %v1955, %v1958
      %vm1960 = vweird.f32 %v1955
      %v1961 = vsel %vm1960, %v1955, %v1959
      %v1962 = vmul.f32 %v1819, %v1961
      %v1963 = vmul.f32 %v1828, %v1961
      %v1964 = vmul.f32 %v1837, %v1961
      %v1965 = vmul.f32 %v1846, %v1961
      %v1966 = vmul.f32 %v1855, %v1961
      %v1967 = vmul.f32 %v1864, %v1961
      %v1968 = vmul.f32 %v1873, %v1961
      %v1969 = vmul.f32 %v1882, %v1961
      %v1970 = vmul.f32 %v1891, %v1961
      %v1971 = vmul.f32 %v1900, %v1961
      %v1972 = vmul.f32 %v1909, %v1961
      %v1973 = vmul.f32 %v1918, %v1961
      %v1974 = vmul.f32 %v1927, %v1961
      %v1975 = vmul.f32 %v1936, %v1961
      %v1976 = vmul.f32 %v1945, %v1961
      %v1977 = vmul.f32 %v1954, %v1961
      %v1978 = vadd.f32 %v1811, %v1820
      %v1979 = vadd.f32 %v1978, %v1829
      %v1980 = vadd.f32 %v1979, %v1838
      %v1981 = vadd.f32 %v1980, %v1847
      %v1982 = vadd.f32 %v1981, %v1856
      %v1983 = vadd.f32 %v1982, %v1865
      %v1984 = vadd.f32 %v1983, %v1874
      %v1985 = vadd.f32 %v1984, %v1883
      %v1986 = vadd.f32 %v1985, %v1892
      %v1987 = vadd.f32 %v1986, %v1901
      %v1988 = vadd.f32 %v1987, %v1910
      %v1989 = vadd.f32 %v1988, %v1919
      %v1990 = vadd.f32 %v1989, %v1928
      %v1991 = vadd.f32 %v1990, %v1937
      %v1992 = vadd.f32 %v1991, %v1946
      %v1993 = vadd.f32 %v1812, %v1821
      %v1994 = vadd.f32 %v1993, %v1830
      %v1995 = vadd.f32 %v1994, %v1839
      %v1996 = vadd.f32 %v1995, %v1848
      %v1997 = vadd.f32 %v1996, %v1857
      %v1998 = vadd.f32 %v1997, %v1866
      %v1999 = vadd.f32 %v1998, %v1875
      %v2000 = vadd.f32 %v1999, %v1884
      %v2001 = vadd.f32 %v2000, %v1893
      %v2002 = vadd.f32 %v2001, %v1902
      %v2003 = vadd.f32 %v2002, %v1911
      %v2004 = vadd.f32 %v2003, %v1920
      %v2005 = vadd.f32 %v2004, %v1929
      %v2006 = vadd.f32 %v2005, %v1938
      %v2007 = vadd.f32 %v2006, %v1947
      %v2008 = vmul.f32 %v1992, %v1961
      %v2009 = vmul.f32 %v2007, %v1961
      %v2010 = vld [vmem:[%s5] sm:$0xff]
      %v2011 = vld [vmem:[%s5 + $0x8] sm:$0xff]
      %v2012 = vld [vmem:[%s6] sm:$0x1]
      %v2013 = vld [vmem:[%s7] sm:$0xff]
      %v2014 = vld [vmem:[%s8] sm:$0x1]
      %v2015 = vld [vmem:[%s9] sm:$0xff]
      %v2016 = vld [vmem:[%s10] sm:$0x1]
      %v2018 = vperm.slane %v2012, 0
      %vm2036 = vcmask 1041409
      %v2037 = vsel %vm2036, %v1963, %v1962
      %vm2038 = vcmask 1042434
      %v2039 = vsel %vm2038, %v1964, %v2037
      %vm2040 = vcmask 1043459
      %v2041 = vsel %vm2040, %v1965, %v2039
      %vm2042 = vcmask 1044484
      %v2043 = vsel %vm2042, %v1966, %v2041
      %vm2044 = vcmask 1045509
      %v2045 = vsel %vm2044, %v1967, %v2043
      %vm2046 = vcmask 1046534
      %v2047 = vsel %vm2046, %v1968, %v2045
      %vm2048 = vcmask 1047559
      %v2049 = vsel %vm2048, %v1969, %v2047
      %v2050 = vsel %vm2036, %v1971, %v1970
      %v2051 = vsel %vm2038, %v1972, %v2050
      %v2052 = vsel %vm2040, %v1973, %v2051
      %v2053 = vsel %vm2042, %v1974, %v2052
      %v2054 = vsel %vm2044, %v1975, %v2053
      %v2055 = vsel %vm2046, %v1976, %v2054
      %v2056 = vsel %vm2048, %v1977, %v2055
      %v2057 = vsel %vm752, %v2049, 0
      %v2059 = vsel %vm752, %v2056, 0
      %2061 = vmatpush.msra.mxu0 0.0
      %2062 = vmatpush.msra.mxu0 0.0
      %2063 = vmatpush.msra.mxu0 0.0
      %2064 = vmatpush.msra.mxu0 0.0
      %2065 = vmatpush.msra.mxu0 0.0
      %2066 = vmatpush.msra.mxu0 0.0
      %2067 = vmatpush.msra.mxu0 0.0
      %2068 = vmatpush.msra.mxu0 0.0
      %2069 = vmatpush.msra.mxu0 0.0
      %2070 = vmatpush.msra.mxu0 0.0
      %2071 = vmatpush.msra.mxu0 0.0
      %2072 = vmatpush.msra.mxu0 0.0
      %2073 = vmatpush.msra.mxu0 0.0
      %2074 = vmatpush.msra.mxu0 0.0
      %2075 = vmatpush.msra.mxu0 %v2011
      %2076 = vmatpush.msra.mxu0 %v2010
      %2077 = vmatmul.f32.gmra.mxu0 %v2057
      %v2078 = vpop.f32.mrf.mxu0
      %v2079 = vadd.f32 %v2018, %v2078
      %2080 = vmatmul.f32.gmra.mxu0 %v2059
      %v2081 = vpop.f32.mrf.mxu0
      %v2082 = vadd.f32 %v2018, %v2081
      %2083 = vdwg.mxu0
      %v2084 = vadd.f32 %v2079, 3.0
      %v2085 = vadd.f32 %v2082, 3.0
      %v2086 = vmax.f32 %v2084, 0.0
      %v2087 = vmax.f32 %v2085, 0.0
      %v2088 = vmin.f32 %v2086, 6.0
      %v2089 = vmin.f32 %v2087, 6.0
      %v2090 = vmul.f32 %v2088, 0.16666667
      %v2091 = vmul.f32 %v2089, 0.16666667
      %v2092 = vmul.f32 %v2079, %v2090
      %v2093 = vmul.f32 %v2082, %v2091
      %v2095 = vperm.slane %v2014, 0
      %v2098 = vsel %vm478, %v2092, 0
      %v2101 = vsel %vm478, %v2093, 0
      %2103 = vmatpush.msra.mxu0 0.0
      %2104 = vmatpush.msra.mxu0 0.0
      %2105 = vmatpush.msra.mxu0 0.0
      %2106 = vmatpush.msra.mxu0 0.0
      %2107 = vmatpush.msra.mxu0 0.0
      %2108 = vmatpush.msra.mxu0 0.0
      %2109 = vmatpush.msra.mxu0 0.0
      %2110 = vmatpush.msra.mxu0 0.0
      %2111 = vmatpush.msra.mxu0 0.0
      %2112 = vmatpush.msra.mxu0 0.0
      %2113 = vmatpush.msra.mxu0 0.0
      %2114 = vmatpush.msra.mxu0 0.0
      %2115 = vmatpush.msra.mxu0 0.0
      %2116 = vmatpush.msra.mxu0 0.0
      %2117 = vmatpush.msra.mxu0 0.0
      %2118 = vmatpush.msra.mxu0 %v2013
      %2119 = vmatmul.f32.gmra.mxu0 %v2098
      %v2120 = vpop.f32.mrf.mxu0
      %v2121 = vadd.f32 %v2095, %v2120
      %2122 = vmatmul.f32.gmra.mxu0 %v2101
      %v2123 = vpop.f32.mrf.mxu0
      %v2124 = vadd.f32 %v2095, %v2123
      %2125 = vdwg.mxu0
      %v2126 = vxor.u32 %v2121, 2147483648
      %v2127 = vxor.u32 %v2124, 2147483648
      %v2128 = vmul.f32 %v2126, 1.442695
      %v2129 = vpow.pop %v2128
      %v2130 = vmul.f32 %v2127, 1.442695
      %v2131 = vpow.pop %v2130
      %v2132 = vadd.f32 %v2129, 1.0
      %v2133 = vadd.f32 %v2131, 1.0
      %v2134 = vrcp.pop %v2132
      %v2135 = vmul.f32 %v2132, %v2134
      %v2136 = vsub.f32 1.0, %v2135
      %v2137 = vmul.f32 %v2134, %v2136
      %v2138 = vadd.f32 %v2134, %v2137
      %vm2139 = vweird.f32 %v2132
      %vm2140 = vweird.f32 %v2134
      %vm2141 = vmor %vm2139, %vm2140
      %v2142 = vsel %vm2141, %v2134, %v2138
      %v2143 = vand.u32 2147483647, %v2132
      %vm2144 = vcmp.eq.f32.partialorder %v2143, 8.507059e+37
      %v2145 = vand.u32 %v2132, 2147483648
      %v2146 = vor.u32 1.1754944e-38, %v2145
      %v2147 = vsel %vm2144, %v2146, %v2142
      %v2148 = vmul.f32 1.0, %v2147
      %v2149 = vrcp.pop %v2133
      %v2150 = vmul.f32 %v2133, %v2149
      %v2151 = vsub.f32 1.0, %v2150
      %v2152 = vmul.f32 %v2149, %v2151
      %v2153 = vadd.f32 %v2149, %v2152
      %vm2154 = vweird.f32 %v2133
      %vm2155 = vweird.f32 %v2149
      %vm2156 = vmor %vm2154, %vm2155
      %v2157 = vsel %vm2156, %v2149, %v2153
      %v2158 = vand.u32 2147483647, %v2133
      %vm2159 = vcmp.eq.f32.partialorder %v2158, 8.507059e+37
      %v2160 = vand.u32 %v2133, 2147483648
      %v2161 = vor.u32 1.1754944e-38, %v2160
      %v2162 = vsel %vm2159, %v2161, %v2157
      %v2163 = vmul.f32 1.0, %v2162
      %v2165 = vsel %vm752, %v2008, 0
      %v2168 = vsel %vm752, %v2009, 0
      %2170 = vmatpush.msra.mxu0 0.0
      %2171 = vmatpush.msra.mxu0 0.0
      %2172 = vmatpush.msra.mxu0 0.0
      %2173 = vmatpush.msra.mxu0 0.0
      %2174 = vmatpush.msra.mxu0 0.0
      %2175 = vmatpush.msra.mxu0 0.0
      %2176 = vmatpush.msra.mxu0 0.0
      %2177 = vmatpush.msra.mxu0 0.0
      %2178 = vmatpush.msra.mxu0 0.0
      %2179 = vmatpush.msra.mxu0 0.0
      %2180 = vmatpush.msra.mxu0 0.0
      %2181 = vmatpush.msra.mxu0 0.0
      %2182 = vmatpush.msra.mxu0 0.0
      %2183 = vmatpush.msra.mxu0 0.0
      %2184 = vmatpush.msra.mxu0 %v2011
      %2185 = vmatpush.msra.mxu0 %v2010
      %2186 = vmatmul.f32.gmra.mxu0 %v2165
      %v2187 = vpop.f32.mrf.mxu0
      %v2188 = vadd.f32 %v2018, %v2187
      %2189 = vmatmul.f32.gmra.mxu0 %v2168
      %v2190 = vpop.f32.mrf.mxu0
      %v2191 = vadd.f32 %v2018, %v2190
      %2192 = vdwg.mxu0
      %v2193 = vadd.f32 %v2188, 3.0
      %v2194 = vadd.f32 %v2191, 3.0
      %v2195 = vmax.f32 %v2193, 0.0
      %v2196 = vmax.f32 %v2194, 0.0
      %v2197 = vmin.f32 %v2195, 6.0
      %v2198 = vmin.f32 %v2196, 6.0
      %v2199 = vmul.f32 %v2197, 0.16666667
      %v2200 = vmul.f32 %v2198, 0.16666667
      %v2201 = vmul.f32 %v2188, %v2199
      %v2202 = vmul.f32 %v2191, %v2200
      %v2204 = vperm.slane %v2016, 0
      %v2207 = vsel %vm478, %v2201, 0
      %v2210 = vsel %vm478, %v2202, 0
      %2212 = vmatpush.msra.mxu0 0.0
      %2213 = vmatpush.msra.mxu0 0.0
      %2214 = vmatpush.msra.mxu0 0.0
      %2215 = vmatpush.msra.mxu0 0.0
      %2216 = vmatpush.msra.mxu0 0.0
      %2217 = vmatpush.msra.mxu0 0.0
      %2218 = vmatpush.msra.mxu0 0.0
      %2219 = vmatpush.msra.mxu0 0.0
      %2220 = vmatpush.msra.mxu0 0.0
      %2221 = vmatpush.msra.mxu0 0.0
      %2222 = vmatpush.msra.mxu0 0.0
      %2223 = vmatpush.msra.mxu0 0.0
      %2224 = vmatpush.msra.mxu0 0.0
      %2225 = vmatpush.msra.mxu0 0.0
      %2226 = vmatpush.msra.mxu0 0.0
      %2227 = vmatpush.msra.mxu0 %v2015
      %2228 = vmatmul.f32.gmra.mxu0 %v2207
      %v2229 = vpop.f32.mrf.mxu0
      %v2230 = vadd.f32 %v2204, %v2229
      %2231 = vmatmul.f32.gmra.mxu0 %v2210
      %v2232 = vpop.f32.mrf.mxu0
      %v2233 = vadd.f32 %v2204, %v2232
      %2234 = vdwg.mxu0
      %v2235 = vxor.u32 %v2230, 2147483648
      %v2236 = vxor.u32 %v2233, 2147483648
      %v2237 = vmul.f32 %v2235, 1.442695
      %v2238 = vpow.pop %v2237
      %v2239 = vmul.f32 %v2236, 1.442695
      %v2240 = vpow.pop %v2239
      %v2241 = vadd.f32 %v2238, 1.0
      %v2242 = vadd.f32 %v2240, 1.0
      %v2243 = vrcp.pop %v2241
      %v2244 = vmul.f32 %v2241, %v2243
      %v2245 = vsub.f32 1.0, %v2244
      %v2246 = vmul.f32 %v2243, %v2245
      %v2247 = vadd.f32 %v2243, %v2246
      %vm2248 = vweird.f32 %v2241
      %vm2249 = vweird.f32 %v2243
      %vm2250 = vmor %vm2248, %vm2249
      %v2251 = vsel %vm2250, %v2243, %v2247
      %v2252 = vand.u32 2147483647, %v2241
      %vm2253 = vcmp.eq.f32.partialorder %v2252, 8.507059e+37
      %v2254 = vand.u32 %v2241, 2147483648
      %v2255 = vor.u32 1.1754944e-38, %v2254
      %v2256 = vsel %vm2253, %v2255, %v2251
      %v2257 = vmul.f32 1.0, %v2256
      %v2258 = vrcp.pop %v2242
      %v2259 = vmul.f32 %v2242, %v2258
      %v2260 = vsub.f32 1.0, %v2259
      %v2261 = vmul.f32 %v2258, %v2260
      %v2262 = vadd.f32 %v2258, %v2261
      %vm2263 = vweird.f32 %v2242
      %vm2264 = vweird.f32 %v2258
      %vm2265 = vmor %vm2263, %vm2264
      %v2266 = vsel %vm2265, %v2258, %v2262
      %v2267 = vand.u32 2147483647, %v2242
      %vm2268 = vcmp.eq.f32.partialorder %v2267, 8.507059e+37
      %v2269 = vand.u32 %v2242, 2147483648
      %v2270 = vor.u32 1.1754944e-38, %v2269
      %v2271 = vsel %vm2268, %v2270, %v2266
      %v2272 = vmul.f32 1.0, %v2271
      %v2273 = vmul.f32 %v1779, %v2257
      %v2274 = vmul.f32 %v1780, %v2272
      %v2275 = vmul.f32 %v1781, %v2257
      %v2276 = vmul.f32 %v1782, %v2272
      %v2277 = vmul.f32 %v1783, %v2257
      %v2278 = vmul.f32 %v1784, %v2272
      %v2279 = vmul.f32 %v1785, %v2257
      %v2280 = vmul.f32 %v1786, %v2272
      %v2281 = vmul.f32 %v1787, %v2257
      %v2282 = vmul.f32 %v1788, %v2272
      %v2283 = vmul.f32 %v1789, %v2257
      %v2284 = vmul.f32 %v1790, %v2272
      %v2285 = vmul.f32 %v1791, %v2257
      %v2286 = vmul.f32 %v1792, %v2272
      %v2287 = vmul.f32 %v1793, %v2257
      %v2288 = vmul.f32 %v1794, %v2272
      %v2289 = vmul.f32 %v1795, %v2257
      %v2290 = vmul.f32 %v1796, %v2272
      %v2291 = vmul.f32 %v1797, %v2257
      %v2292 = vmul.f32 %v1798, %v2272
      %v2293 = vmul.f32 %v1799, %v2257
      %v2294 = vmul.f32 %v1800, %v2272
      %v2295 = vmul.f32 %v1801, %v2257
      %v2296 = vmul.f32 %v1802, %v2272
      %v2297 = vmul.f32 %v1803, %v2257
      %v2298 = vmul.f32 %v1804, %v2272
      %v2299 = vmul.f32 %v1805, %v2257
      %v2300 = vmul.f32 %v1806, %v2272
      %v2301 = vmul.f32 %v1807, %v2257
      %v2302 = vmul.f32 %v1808, %v2272
      %v2303 = vmul.f32 %v1809, %v2257
      %v2304 = vmul.f32 %v1810, %v2272
      %v2307 = vrot.slane %v2148, 1
      %v2308 = vrot.slane %v2148, 2
      %v2309 = vrot.slane %v2148, 3
      %v2310 = vrot.slane %v2148, 4
      %v2311 = vrot.slane %v2148, 5
      %v2312 = vrot.slane %v2148, 6
      %v2313 = vrot.slane %v2148, 7
      %v2314 = vrot.slane %v2163, 1
      %v2315 = vrot.slane %v2163, 2
      %v2316 = vrot.slane %v2163, 3
      %v2317 = vrot.slane %v2163, 4
      %v2318 = vrot.slane %v2163, 5
      %v2319 = vrot.slane %v2163, 6
      %v2320 = vrot.slane %v2163, 7
      %v2321 = vperm.slane %v2148, 0
      %v2322 = vperm.slane %v2307, 0
      %v2323 = vperm.slane %v2308, 0
      %v2324 = vperm.slane %v2309, 0
      %v2325 = vperm.slane %v2310, 0
      %v2326 = vperm.slane %v2311, 0
      %v2327 = vperm.slane %v2312, 0
      %v2328 = vperm.slane %v2313, 0
      %v2329 = vperm.slane %v2163, 0
      %v2330 = vperm.slane %v2314, 0
      %v2331 = vperm.slane %v2315, 0
      %v2332 = vperm.slane %v2316, 0
      %v2333 = vperm.slane %v2317, 0
      %v2334 = vperm.slane %v2318, 0
      %v2335 = vperm.slane %v2319, 0
      %v2336 = vperm.slane %v2320, 0
      %v2353 = vmul.f32 %v2273, %v2321
      %v2354 = vmul.f32 %v2274, %v2321
      %v2355 = vmul.f32 %v2275, %v2322
      %v2356 = vmul.f32 %v2276, %v2322
      %v2357 = vmul.f32 %v2277, %v2323
      %v2358 = vmul.f32 %v2278, %v2323
      %v2359 = vmul.f32 %v2279, %v2324
      %v2360 = vmul.f32 %v2280, %v2324
      %v2361 = vmul.f32 %v2281, %v2325
      %v2362 = vmul.f32 %v2282, %v2325
      %v2363 = vmul.f32 %v2283, %v2326
      %v2364 = vmul.f32 %v2284, %v2326
      %v2365 = vmul.f32 %v2285, %v2327
      %v2366 = vmul.f32 %v2286, %v2327
      %v2367 = vmul.f32 %v2287, %v2328
      %v2368 = vmul.f32 %v2288, %v2328
      %v2369 = vmul.f32 %v2289, %v2329
      %v2370 = vmul.f32 %v2290, %v2329
      %v2371 = vmul.f32 %v2291, %v2330
      %v2372 = vmul.f32 %v2292, %v2330
      %v2373 = vmul.f32 %v2293, %v2331
      %v2374 = vmul.f32 %v2294, %v2331
      %v2375 = vmul.f32 %v2295, %v2332
      %v2376 = vmul.f32 %v2296, %v2332
      %v2377 = vmul.f32 %v2297, %v2333
      %v2378 = vmul.f32 %v2298, %v2333
      %v2379 = vmul.f32 %v2299, %v2334
      %v2380 = vmul.f32 %v2300, %v2334
      %v2381 = vmul.f32 %v2301, %v2335
      %v2382 = vmul.f32 %v2302, %v2335
      %v2383 = vmul.f32 %v2303, %v2336
      %v2384 = vmul.f32 %v2304, %v2336
      %v2385 = vld [vmem:[%s11] sm:$0xff]
      %v2386 = vld [vmem:[%s11 + $0x8] sm:$0xff]
      %v2387 = vld [vmem:[%s12] sm:$0x1]
      %v2389 = vperm.slane %v2387, 0
      %v2392 = vsel %vm752, %v2353, 0
      %v2395 = vsel %vm752, %v2354, 0
      %v2398 = vsel %vm752, %v2355, 0
      %v2401 = vsel %vm752, %v2356, 0
      %v2404 = vsel %vm752, %v2357, 0
      %v2407 = vsel %vm752, %v2358, 0
      %v2410 = vsel %vm752, %v2359, 0
      %v2413 = vsel %vm752, %v2360, 0
      %v2416 = vsel %vm752, %v2361, 0
      %v2419 = vsel %vm752, %v2362, 0
      %v2422 = vsel %vm752, %v2363, 0
      %v2425 = vsel %vm752, %v2364, 0
      %v2428 = vsel %vm752, %v2365, 0
      %v2431 = vsel %vm752, %v2366, 0
      %v2434 = vsel %vm752, %v2367, 0
      %v2437 = vsel %vm752, %v2368, 0
      %v2440 = vsel %vm752, %v2369, 0
      %v2443 = vsel %vm752, %v2370, 0
      %v2446 = vsel %vm752, %v2371, 0
      %v2449 = vsel %vm752, %v2372, 0
      %v2452 = vsel %vm752, %v2373, 0
      %v2455 = vsel %vm752, %v2374, 0
      %v2458 = vsel %vm752, %v2375, 0
      %v2461 = vsel %vm752, %v2376, 0
      %v2464 = vsel %vm752, %v2377, 0
      %v2467 = vsel %vm752, %v2378, 0
      %v2470 = vsel %vm752, %v2379, 0
      %v2473 = vsel %vm752, %v2380, 0
      %v2476 = vsel %vm752, %v2381, 0
      %v2479 = vsel %vm752, %v2382, 0
      %v2482 = vsel %vm752, %v2383, 0
      %v2485 = vsel %vm752, %v2384, 0
      %2487 = vmatpush.msra.mxu0 0.0
      %2488 = vmatpush.msra.mxu0 0.0
      %2489 = vmatpush.msra.mxu0 0.0
      %2490 = vmatpush.msra.mxu0 0.0
      %2491 = vmatpush.msra.mxu0 0.0
      %2492 = vmatpush.msra.mxu0 0.0
      %2493 = vmatpush.msra.mxu0 0.0
      %2494 = vmatpush.msra.mxu0 0.0
      %2495 = vmatpush.msra.mxu0 0.0
      %2496 = vmatpush.msra.mxu0 0.0
      %2497 = vmatpush.msra.mxu0 0.0
      %2498 = vmatpush.msra.mxu0 0.0
      %2499 = vmatpush.msra.mxu0 0.0
      %2500 = vmatpush.msra.mxu0 0.0
      %2501 = vmatpush.msra.mxu0 %v2386
      %2502 = vmatpush.msra.mxu0 %v2385
      %2503 = vmatmul.f32.gmra.mxu0 %v2392
      %v2504 = vpop.f32.mrf.mxu0
      %v2505 = vadd.f32 %v2389, %v2504
      %2506 = vmatmul.f32.gmra.mxu0 %v2395
      %v2507 = vpop.f32.mrf.mxu0
      %v2508 = vadd.f32 %v2389, %v2507
      %2509 = vmatmul.f32.gmra.mxu0 %v2398
      %v2510 = vpop.f32.mrf.mxu0
      %v2511 = vadd.f32 %v2389, %v2510
      %2512 = vmatmul.f32.gmra.mxu0 %v2401
      %v2513 = vpop.f32.mrf.mxu0
      %v2514 = vadd.f32 %v2389, %v2513
      %2515 = vmatmul.f32.gmra.mxu0 %v2404
      %v2516 = vpop.f32.mrf.mxu0
      %v2517 = vadd.f32 %v2389, %v2516
      %2518 = vmatmul.f32.gmra.mxu0 %v2407
      %v2519 = vpop.f32.mrf.mxu0
      %v2520 = vadd.f32 %v2389, %v2519
      %2521 = vmatmul.f32.gmra.mxu0 %v2410
      %v2522 = vpop.f32.mrf.mxu0
      %v2523 = vadd.f32 %v2389, %v2522
      %2524 = vmatmul.f32.gmra.mxu0 %v2413
      %v2525 = vpop.f32.mrf.mxu0
      %v2526 = vadd.f32 %v2389, %v2525
      %2527 = vmatmul.f32.gmra.mxu0 %v2416
      %v2528 = vpop.f32.mrf.mxu0
      %v2529 = vadd.f32 %v2389, %v2528
      %2530 = vmatmul.f32.gmra.mxu0 %v2419
      %v2531 = vpop.f32.mrf.mxu0
      %v2532 = vadd.f32 %v2389, %v2531
      %2533 = vmatmul.f32.gmra.mxu0 %v2422
      %v2534 = vpop.f32.mrf.mxu0
      %v2535 = vadd.f32 %v2389, %v2534
      %2536 = vmatmul.f32.gmra.mxu0 %v2425
      %v2537 = vpop.f32.mrf.mxu0
      %v2538 = vadd.f32 %v2389, %v2537
      %2539 = vmatmul.f32.gmra.mxu0 %v2428
      %v2540 = vpop.f32.mrf.mxu0
      %v2541 = vadd.f32 %v2389, %v2540
      %2542 = vmatmul.f32.gmra.mxu0 %v2431
      %v2543 = vpop.f32.mrf.mxu0
      %v2544 = vadd.f32 %v2389, %v2543
      %2545 = vmatmul.f32.gmra.mxu0 %v2434
      %v2546 = vpop.f32.mrf.mxu0
      %v2547 = vadd.f32 %v2389, %v2546
      %2548 = vmatmul.f32.gmra.mxu0 %v2437
      %v2549 = vpop.f32.mrf.mxu0
      %v2550 = vadd.f32 %v2389, %v2549
      %2551 = vmatmul.f32.gmra.mxu0 %v2440
      %v2552 = vpop.f32.mrf.mxu0
      %v2553 = vadd.f32 %v2389, %v2552
      %2554 = vmatmul.f32.gmra.mxu0 %v2443
      %v2555 = vpop.f32.mrf.mxu0
      %v2556 = vadd.f32 %v2389, %v2555
      %2557 = vmatmul.f32.gmra.mxu0 %v2446
      %v2558 = vpop.f32.mrf.mxu0
      %v2559 = vadd.f32 %v2389, %v2558
      %2560 = vmatmul.f32.gmra.mxu0 %v2449
      %v2561 = vpop.f32.mrf.mxu0
      %v2562 = vadd.f32 %v2389, %v2561
      %2563 = vmatmul.f32.gmra.mxu0 %v2452
      %v2564 = vpop.f32.mrf.mxu0
      %v2565 = vadd.f32 %v2389, %v2564
      %2566 = vmatmul.f32.gmra.mxu0 %v2455
      %v2567 = vpop.f32.mrf.mxu0
      %v2568 = vadd.f32 %v2389, %v2567
      %2569 = vmatmul.f32.gmra.mxu0 %v2458
      %v2570 = vpop.f32.mrf.mxu0
      %v2571 = vadd.f32 %v2389, %v2570
      %2572 = vmatmul.f32.gmra.mxu0 %v2461
      %v2573 = vpop.f32.mrf.mxu0
      %v2574 = vadd.f32 %v2389, %v2573
      %2575 = vmatmul.f32.gmra.mxu0 %v2464
      %v2576 = vpop.f32.mrf.mxu0
      %v2577 = vadd.f32 %v2389, %v2576
      %2578 = vmatmul.f32.gmra.mxu0 %v2467
      %v2579 = vpop.f32.mrf.mxu0
      %v2580 = vadd.f32 %v2389, %v2579
      %2581 = vmatmul.f32.gmra.mxu0 %v2470
      %v2582 = vpop.f32.mrf.mxu0
      %v2583 = vadd.f32 %v2389, %v2582
      %2584 = vmatmul.f32.gmra.mxu0 %v2473
      %v2585 = vpop.f32.mrf.mxu0
      %v2586 = vadd.f32 %v2389, %v2585
      %2587 = vmatmul.f32.gmra.mxu0 %v2476
      %v2588 = vpop.f32.mrf.mxu0
      %v2589 = vadd.f32 %v2389, %v2588
      %2590 = vmatmul.f32.gmra.mxu0 %v2479
      %v2591 = vpop.f32.mrf.mxu0
      %v2592 = vadd.f32 %v2389, %v2591
      %2593 = vmatmul.f32.gmra.mxu0 %v2482
      %v2594 = vpop.f32.mrf.mxu0
      %v2595 = vadd.f32 %v2389, %v2594
      %2596 = vmatmul.f32.gmra.mxu0 %v2485
      %v2597 = vpop.f32.mrf.mxu0
      %v2598 = vadd.f32 %v2389, %v2597
      %2599 = vdwg.mxu0
      %v2600 = vadd.f32 %v2505, %v441
      %v2601 = vadd.f32 %v2508, %v442
      %v2602 = vadd.f32 %v2511, %v443
      %v2603 = vadd.f32 %v2514, %v444
      %v2604 = vadd.f32 %v2517, %v445
      %v2605 = vadd.f32 %v2520, %v446
      %v2606 = vadd.f32 %v2523, %v447
      %v2607 = vadd.f32 %v2526, %v448
      %v2608 = vadd.f32 %v2529, %v449
      %v2609 = vadd.f32 %v2532, %v450
      %v2610 = vadd.f32 %v2535, %v451
      %v2611 = vadd.f32 %v2538, %v452
      %v2612 = vadd.f32 %v2541, %v453
      %v2613 = vadd.f32 %v2544, %v454
      %v2614 = vadd.f32 %v2547, %v455
      %v2615 = vadd.f32 %v2550, %v456
      %v2616 = vadd.f32 %v2553, %v457
      %v2617 = vadd.f32 %v2556, %v458
      %v2618 = vadd.f32 %v2559, %v459
      %v2619 = vadd.f32 %v2562, %v460
      %v2620 = vadd.f32 %v2565, %v461
      %v2621 = vadd.f32 %v2568, %v462
      %v2622 = vadd.f32 %v2571, %v463
      %v2623 = vadd.f32 %v2574, %v464
      %v2624 = vadd.f32 %v2577, %v465
      %v2625 = vadd.f32 %v2580, %v466
      %v2626 = vadd.f32 %v2583, %v467
      %v2627 = vadd.f32 %v2586, %v468
      %v2628 = vadd.f32 %v2589, %v469
      %v2629 = vadd.f32 %v2592, %v470
      %v2630 = vadd.f32 %v2595, %v471
      %v2631 = vadd.f32 %v2598, %v472
      %2632 = vst.msk [vmem:[%s440] sm:$0xff] %vm478, %v2600
      %2633 = vst.msk [vmem:[%s440 + $0x8] sm:$0xff] %vm478, %v2601
      %2634 = vst.msk [vmem:[%s440 + $0x10] sm:$0xff] %vm478, %v2602
      %2635 = vst.msk [vmem:[%s440 + $0x18] sm:$0xff] %vm478, %v2603
      %2636 = vst.msk [vmem:[%s440 + $0x20] sm:$0xff] %vm478, %v2604
      %2637 = vst.msk [vmem:[%s440 + $0x28] sm:$0xff] %vm478, %v2605
      %2638 = vst.msk [vmem:[%s440 + $0x30] sm:$0xff] %vm478, %v2606
      %2639 = vst.msk [vmem:[%s440 + $0x38] sm:$0xff] %vm478, %v2607
      %2640 = vst.msk [vmem:[%s440 + $0x40] sm:$0xff] %vm478, %v2608
      %2641 = vst.msk [vmem:[%s440 + $0x48] sm:$0xff] %vm478, %v2609
      %2642 = vst.msk [vmem:[%s440 + $0x50] sm:$0xff] %vm478, %v2610
      %2643 = vst.msk [vmem:[%s440 + $0x58] sm:$0xff] %vm478, %v2611
      %2644 = vst.msk [vmem:[%s440 + $0x60] sm:$0xff] %vm478, %v2612
      %2645 = vst.msk [vmem:[%s440 + $0x68] sm:$0xff] %vm478, %v2613
      %2646 = vst.msk [vmem:[%s440 + $0x70] sm:$0xff] %vm478, %v2614
      %2647 = vst.msk [vmem:[%s440 + $0x78] sm:$0xff] %vm478, %v2615
      %2648 = vst.msk [vmem:[%s440 + $0x80] sm:$0xff] %vm478, %v2616
      %2649 = vst.msk [vmem:[%s440 + $0x88] sm:$0xff] %vm478, %v2617
      %2650 = vst.msk [vmem:[%s440 + $0x90] sm:$0xff] %vm478, %v2618
      %2651 = vst.msk [vmem:[%s440 + $0x98] sm:$0xff] %vm478, %v2619
      %2652 = vst.msk [vmem:[%s440 + $0xa0] sm:$0xff] %vm478, %v2620
      %2653 = vst.msk [vmem:[%s440 + $0xa8] sm:$0xff] %vm478, %v2621
      %2654 = vst.msk [vmem:[%s440 + $0xb0] sm:$0xff] %vm478, %v2622
      %2655 = vst.msk [vmem:[%s440 + $0xb8] sm:$0xff] %vm478, %v2623
      %2656 = vst.msk [vmem:[%s440 + $0xc0] sm:$0xff] %vm478, %v2624
      %2657 = vst.msk [vmem:[%s440 + $0xc8] sm:$0xff] %vm478, %v2625
      %2658 = vst.msk [vmem:[%s440 + $0xd0] sm:$0xff] %vm478, %v2626
      %2659 = vst.msk [vmem:[%s440 + $0xd8] sm:$0xff] %vm478, %v2627
      %2660 = vst.msk [vmem:[%s440 + $0xe0] sm:$0xff] %vm478, %v2628
      %2661 = vst.msk [vmem:[%s440 + $0xe8] sm:$0xff] %vm478, %v2629
      %2662 = vst.msk [vmem:[%s440 + $0xf0] sm:$0xff] %vm478, %v2630
      %2663 = vst.msk [vmem:[%s440 + $0xf8] sm:$0xff] %vm478, %v2631
      %p2664 = scmp.lt.s32.totalorder %s24, 1
      %s2665 = scalar_select %p2664, %s24, 1
      %s2666 = smul.addr %s2665, 32
      %s2667 = smul.addr %s2666, 8
      %s2668 = scalar_lea.vmem %s13, %s2667
      // Predicated region
      $region73: #{inverted_residual_forward.1} parent=71 // pred_check
        %p2669 = pneg %p320
      $region74: #{inverted_residual_forward.1} parent=71 // pred_check_branch
        %2671 = sbr.rel (%p2669) target = $region76
      $region75: #{inverted_residual_forward.1} parent=71 // pred_region
        _
      $region76: #{inverted_residual_forward.1} parent=71 // pred_fallthru
        _
    $region72: #{inverted_residual_forward.1} parent=5 // pred_fallthru
      _
    %p2672 = scmp.le.s32.totalorder 2, %s19
    // Predicated region
    $region77: #{inverted_residual_forward.1} parent=5 // pred_check
      %p2673 = pneg %p2672
    $region78: #{inverted_residual_forward.1} parent=5 // pred_check_branch
      %2675 = sbr.rel (%p2673) target = $region80
    $region79: #{inverted_residual_forward.1} parent=5 // pred_region
      %s2676 = ssub.s32 %s19, 2
      // Predicated region
      $region81: #{inverted_residual_forward.1} parent=79 // pred_check
        %p2677 = pneg %p326
      $region82: #{inverted_residual_forward.1} parent=79 // pred_check_branch
        %2679 = sbr.rel (%p2677) target = $region84
      $region83: #{inverted_residual_forward.1} parent=79 // pred_region
        %p2680 = scmp.lt.s32.totalorder %s25, 1
        %s2681 = scalar_select %p2680, %s25, 1
        %s2682 = smul.addr %s2681, 32
        %s2683 = smul.addr %s2682, 8
        %s2684 = scalar_lea.vmem %s13, %s2683
      $region84: #{inverted_residual_forward.1} parent=79 // pred_fallthru
        _
    $region80: #{inverted_residual_forward.1} parent=5 // pred_fallthru
      _
  $region6: #{inverted_residual_forward.1} parent=0 // loop_footer
    %s23 = sadd.s32 1, %s19
  $region7: #{inverted_residual_forward.1} parent=0 // loop_footer_branch
    %18 = sbr.rel target = $region3
  $region8: #{inverted_residual_forward.1} parent=0 // loop_exit
    _

</llo_original>
